<compile_context>
chip_gen: v7x
topology: tpu7x:2x2x1
jax: 0.10.0
libtpu: 0.0.40
codegen_flags: <defaults>
</compile_context>

<pallas_src>
import functools

import jax
import jax.numpy as jnp
from jax.experimental import pallas as pl
from jax.experimental.pallas import tpu as pltpu


# ----------------------------------------------------------------------------
# Tile selection helpers ((8, 128) rule: block dims must divide into (8,128) or
# equal the full array dims).
# ----------------------------------------------------------------------------

def _pick_row_tile(m, cap=256):
    if m <= cap:
        return m
    for t in (256, 128, 64, 32, 16, 8):
        if t <= cap and m % t == 0:
            return t
    return m


def _pick_lane_tile(n, cap=512):
    if n <= cap:
        return n
    for t in (512, 256, 128):
        if t <= cap and n % t == 0:
            return t
    return n


# ----------------------------------------------------------------------------
# Kernels
# ----------------------------------------------------------------------------

def _mm_bias_kernel(x_ref, w_ref, b_ref, o_ref):
    # bf16 x / w, f32 accumulate, fused bias.
    acc = jnp.dot(x_ref[...], w_ref[...], preferred_element_type=jnp.float32)
    o_ref[...] = (acc + b_ref[...]).astype(o_ref.dtype)


def mm_bias(x, w, b, *, out_dtype=jnp.float32, tm_cap=256, tn_cap=512):
    M, K = x.shape
    N = w.shape[1]
    tm = _pick_row_tile(M, tm_cap)
    tn = _pick_lane_tile(N, tn_cap)
    return pl.pallas_call(
        _mm_bias_kernel,
        grid=(M // tm, N // tn),
        in_specs=[
            pl.BlockSpec((tm, K), lambda i, j: (i, 0)),
            pl.BlockSpec((K, tn), lambda i, j: (0, j)),
            pl.BlockSpec((1, tn), lambda i, j: (0, j)),
        ],
        out_specs=pl.BlockSpec((tm, tn), lambda i, j: (i, j)),
        out_shape=jax.ShapeDtypeStruct((M, N), out_dtype),
        compiler_params=pltpu.CompilerParams(
            dimension_semantics=("parallel", "parallel")),
    )(x, w, b)


def _mm_ln_self_kernel(x_ref, w_ref, b_ref, g_ref, bb_ref, o_ref, *, eps):
    # out = LayerNorm(x @ w + b + x) * g + bb   (self-residual fused epilogue)
    x = x_ref[...]
    y = jnp.dot(x, w_ref[...], preferred_element_type=jnp.float32)
    y = y + b_ref[...] + x.astype(jnp.float32)
    mu = jnp.mean(y, axis=-1, keepdims=True)
    var = jnp.mean(jnp.square(y - mu), axis=-1, keepdims=True)
    o_ref[...] = ((y - mu) * jax.lax.rsqrt(var + eps) * g_ref[...]
                  + bb_ref[...]).astype(o_ref.dtype)


def mm_ln_self(x, w, b, g, bb, *, eps=1e-6, out_dtype=jnp.float32, tm_cap=256):
    M, C = x.shape
    tm = _pick_row_tile(M, tm_cap)
    vec = pl.BlockSpec((1, C), lambda i: (0, 0))
    return pl.pallas_call(
        functools.partial(_mm_ln_self_kernel, eps=eps),
        grid=(M // tm,),
        in_specs=[
            pl.BlockSpec((tm, C), lambda i: (i, 0)),
            pl.BlockSpec((C, C), lambda i: (0, 0)),
            vec, vec, vec,
        ],
        out_specs=pl.BlockSpec((tm, C), lambda i: (i, 0)),
        out_shape=jax.ShapeDtypeStruct((M, C), out_dtype),
        compiler_params=pltpu.CompilerParams(dimension_semantics=("parallel",)),
    )(x, w, b, g, bb)


def _attn_proj_ln_kernel(qkv_ref, kvd_ref, wo_ref, bo_ref, res_ref, g_ref, bb_ref,
                         o_ref, *, num_heads, scale, eps):
    # Per batch: multi-head cross-attention over the [rgb; depth] 2N-key sequence,
    # fused with the output projection, residual add and LayerNorm.  Output is a
    # single lane-dense (N, C) block.
    qkv = qkv_ref[0]                                # (N, 3C) bf16: [q | k | v] of rgb
    kvd = kvd_ref[0]                                # (N, 2C) bf16: [k | v] of depth
    N = qkv.shape[0]
    C = qkv.shape[1] // 3
    hd = C // num_heads
    dn = (((1,), (1,)), ((), ()))                   # contract head dim: A @ B^T

    head_outs = []
    for h in range(num_heads):
        q_h = qkv[:, h * hd:(h + 1) * hd]
        k_r = qkv[:, C + h * hd:C + (h + 1) * hd]
        v_r = qkv[:, 2 * C + h * hd:2 * C + (h + 1) * hd]
        k_d = kvd[:, h * hd:(h + 1) * hd]
        v_d = kvd[:, C + h * hd:C + (h + 1) * hd]
        s = jnp.concatenate(
            [jax.lax.dot_general(q_h, k_r, dn, preferred_element_type=jnp.float32),
             jax.lax.dot_general(q_h, k_d, dn, preferred_element_type=jnp.float32)],
            axis=-1) * scale                        # (N, 2N) f32 logits
        s = s - jnp.max(s, axis=-1, keepdims=True)
        p = jnp.exp(s)
        p = p * pl.reciprocal(jnp.sum(p, axis=-1, keepdims=True), approx=True)
        p = p.astype(qkv.dtype)                     # bf16 for the MXU
        head_outs.append(
            jnp.dot(p[:, :N], v_r, preferred_element_type=jnp.float32)
            + jnp.dot(p[:, N:], v_d, preferred_element_type=jnp.float32))
    attn_out = jnp.concatenate(head_outs, axis=-1)  # (N, C) f32

    # fused output projection + residual + LayerNorm (eps=1e-6 as in the module)
    y = jnp.dot(attn_out.astype(wo_ref.dtype), wo_ref[...],
                preferred_element_type=jnp.float32)
    y = y + bo_ref[...] + res_ref[0].astype(jnp.float32)
    mu = jnp.mean(y, axis=-1, keepdims=True)
    var = jnp.mean(jnp.square(y - mu), axis=-1, keepdims=True)
    o_ref[0] = ((y - mu) * jax.lax.rsqrt(var + eps) * g_ref[...]
                + bb_ref[...]).astype(o_ref.dtype)


def attn_proj_ln(qkv, kvd, wo, bo, resid, g, bb, *, num_heads, scale,
                 eps=1e-6, out_dtype=jnp.float32):
    # NOTE: one (N, *) block per batch; for very large N this would get a query-tile
    # grid axis (flash-style) -- not needed at these feature-map sizes.
    B, N, C3 = qkv.shape
    C = C3 // 3
    vec = pl.BlockSpec((1, C), lambda b: (0, 0))
    return pl.pallas_call(
        functools.partial(_attn_proj_ln_kernel, num_heads=num_heads,
                          scale=scale, eps=eps),
        grid=(B,),
        in_specs=[
            pl.BlockSpec((1, N, 3 * C), lambda b: (b, 0, 0)),
            pl.BlockSpec((1, N, 2 * C), lambda b: (b, 0, 0)),
            pl.BlockSpec((C, C), lambda b: (0, 0)),
            vec,
            pl.BlockSpec((1, N, C), lambda b: (b, 0, 0)),
            vec, vec,
        ],
        out_specs=pl.BlockSpec((1, N, C), lambda b: (b, 0, 0)),
        out_shape=jax.ShapeDtypeStruct((B, N, C), out_dtype),
        compiler_params=pltpu.CompilerParams(dimension_semantics=("parallel",)),
    )(qkv, kvd, wo, bo, resid, g, bb)


def _dwconv3x3_kernel(x_ref, w_ref, *rest, add_input, relu, has_bias):
    # x_ref: (1, H+2, W+2, C) zero-haloed NHWC block; w_ref: (9, C) flattened taps.
    if has_bias:
        b_ref, o_ref = rest
    else:
        (o_ref,) = rest
    H, W, C = o_ref.shape[1], o_ref.shape[2], o_ref.shape[3]
    xp = x_ref[0].astype(jnp.float32)               # (H+2, W+2, C)
    w = w_ref[...]                                  # hoisted once, indexed as a value
    acc = jnp.zeros((H, W, C), jnp.float32)
    if has_bias:
        acc = acc + b_ref[...]
    for i in range(3):
        for j in range(3):
            acc = acc + xp[i:i + H, j:j + W, :] * w[3 * i + j:3 * i + j + 1, :]
    if add_input:
        acc = acc + xp[1:1 + H, 1:1 + W, :]
    if relu:
        acc = jnp.maximum(acc, 0.0)
    o_ref[0] = acc.astype(o_ref.dtype)


def dwconv3x3(x_pad, w, b=None, *, add_input=False, relu=False,
              out_dtype=jnp.float32):
    B, Hp, Wp, C = x_pad.shape
    H, W = Hp - 2, Wp - 2
    has_bias = b is not None
    in_specs = [
        pl.BlockSpec((1, Hp, Wp, C), lambda b_: (b_, 0, 0, 0)),
        pl.BlockSpec((9, C), lambda b_: (0, 0)),
    ]
    args = [x_pad, w]
    if has_bias:
        in_specs.append(pl.BlockSpec((1, C), lambda b_: (0, 0)))
        args.append(b)
    return pl.pallas_call(
        functools.partial(_dwconv3x3_kernel, add_input=add_input, relu=relu,
                          has_bias=has_bias),
        grid=(B,),
        in_specs=in_specs,
        out_specs=pl.BlockSpec((1, H, W, C), lambda b_: (b_, 0, 0, 0)),
        out_shape=jax.ShapeDtypeStruct((B, H, W, C), out_dtype),
        compiler_params=pltpu.CompilerParams(dimension_semantics=("parallel",)),
    )(*args)


def _proj_res_kernel(x1_ref, x2_ref, w1_ref, w2_ref, p_ref, r_ref):
    # p = rgb @ Wp_rgb + depth @ Wp_depth ; r = rgb @ Wr_rgb + depth @ Wr_depth
    # computed as one wide (tm, 2C) accumulation and split on store.
    acc = (jnp.dot(x1_ref[...], w1_ref[...], preferred_element_type=jnp.float32)
           + jnp.dot(x2_ref[...], w2_ref[...], preferred_element_type=jnp.float32))
    C = p_ref.shape[1]
    p_ref[...] = acc[:, :C].astype(p_ref.dtype)
    r_ref[...] = acc[:, C:].astype(r_ref.dtype)


def proj_res(x1, x2, w1, w2, *, tm_cap=256):
    M, C = x1.shape
    tm = _pick_row_tile(M, tm_cap)
    row_in = pl.BlockSpec((tm, C), lambda i: (i, 0))
    w_spec = pl.BlockSpec((C, 2 * C), lambda i: (0, 0))
    return pl.pallas_call(
        _proj_res_kernel,
        grid=(M // tm,),
        in_specs=[row_in, row_in, w_spec, w_spec],
        out_specs=[pl.BlockSpec((tm, C), lambda i: (i, 0)),
                   pl.BlockSpec((tm, C), lambda i: (i, 0))],
        out_shape=(jax.ShapeDtypeStruct((M, C), jnp.float32),
                   jax.ShapeDtypeStruct((M, C), jnp.float32)),
        compiler_params=pltpu.CompilerParams(dimension_semantics=("parallel",)),
    )(x1, x2, w1, w2)


def _res_final_kernel(r_ref, w_ref, p_ref, s1_ref, t1_ref, s2_ref, t2_ref, o_ref):
    # out = bn_norm( proj + bn_res( r @ res_w3 ) ), both BNs folded to affines.
    acc = jnp.dot(r_ref[...], w_ref[...], preferred_element_type=jnp.float32)
    o_ref[...] = ((p_ref[...] + acc * s1_ref[...] + t1_ref[...]) * s2_ref[...]
                  + t2_ref[...]).astype(o_ref.dtype)


def res_final(r, w3, p, s1, t1, s2, t2, *, tm_cap=256):
    M, C = r.shape
    tm = _pick_row_tile(M, tm_cap)
    vec = pl.BlockSpec((1, C), lambda i: (0, 0))
    row = pl.BlockSpec((tm, C), lambda i: (i, 0))
    return pl.pallas_call(
        _res_final_kernel,
        grid=(M // tm,),
        in_specs=[row, pl.BlockSpec((C, C), lambda i: (0, 0)), row,
                  vec, vec, vec, vec],
        out_specs=row,
        out_shape=jax.ShapeDtypeStruct((M, C), jnp.float32),
        compiler_params=pltpu.CompilerParams(dimension_semantics=("parallel",)),
    )(r, w3, p, s1, t1, s2, t2)


# ----------------------------------------------------------------------------
# Parameter initialization (deterministic, mirrors the module's _init_weights).
# Torch-layout weights are re-parameterized per rgb/depth stream; this is an exact
# channel permutation of the original layout (relevant only when loading a checkpoint).
# ----------------------------------------------------------------------------

def init_params(key, C, num_heads):
    del num_heads
    ks = jax.random.split(key, 12)
    tnrm = lambda k, shape, std: std * jax.random.truncated_normal(
        k, -2.0, 2.0, shape, jnp.float32)
    nrm = lambda k, shape, std: std * jax.random.normal(k, shape, jnp.float32)
    p = {}
    # pos_encode: depthwise 3x3 over 2C channels (groups=2C) -> fan_out=9; rgb/depth halves.
    p["pos_w_rgb"] = nrm(ks[0], (9, C), (2.0 / 9.0) ** 0.5)
    p["pos_w_depth"] = nrm(ks[1], (9, C), (2.0 / 9.0) ** 0.5)
    p["pos_b_rgb"] = jnp.zeros((C,), jnp.float32)
    p["pos_b_depth"] = jnp.zeros((C,), jnp.float32)
    p["rgb_class"] = jnp.zeros((C,), jnp.float32)
    p["depth_class"] = jnp.zeros((C,), jnp.float32)
    p["ln_g"] = jnp.ones((C,), jnp.float32)
    p["ln_b"] = jnp.zeros((C,), jnp.float32)
    # CrossAttention linears: trunc_normal std=0.02, zero bias (qkv_bias=True).
    p["wq"] = tnrm(ks[2], (C, C), 0.02)
    p["bq"] = jnp.zeros((C,), jnp.float32)
    p["wkv"] = tnrm(ks[3], (C, 2 * C), 0.02)
    p["bkv"] = jnp.zeros((2 * C,), jnp.float32)
    p["wo"] = tnrm(ks[4], (C, C), 0.02)
    p["bo"] = jnp.zeros((C,), jnp.float32)
    # 1x1 convs (2C->C, no bias), fan_out=C; per-stream halves of the in-channel axis.
    p["proj_w_rgb"] = nrm(ks[5], (C, C), (2.0 / C) ** 0.5)
    p["proj_w_depth"] = nrm(ks[6], (C, C), (2.0 / C) ** 0.5)
    p["res_w1_rgb"] = nrm(ks[7], (C, C), (2.0 / C) ** 0.5)
    p["res_w1_depth"] = nrm(ks[8], (C, C), (2.0 / C) ** 0.5)
    p["res_dw"] = nrm(ks[9], (9, C), (2.0 / 9.0) ** 0.5)    # depthwise 3x3, fan_out=9
    p["res_w3"] = nrm(ks[10], (C, C), (2.0 / C) ** 0.5)
    # BatchNorms in eval mode with default stats (mean=0, var=1, gamma=1, beta=0).
    eps = 1e-5
    p["res_bn_scale"] = jnp.ones((C,), jnp.float32) / jnp.sqrt(1.0 + eps)
    p["res_bn_shift"] = jnp.zeros((C,), jnp.float32)
    p["bn_scale"] = jnp.ones((C,), jnp.float32) / jnp.sqrt(1.0 + eps)
    p["bn_shift"] = jnp.zeros((C,), jnp.float32)
    return p


def prepare_params(p):
    """Kernel-layout params: bf16 MXU weights, (1, C) row vectors, fused weight concats."""
    bf16, f32 = jnp.bfloat16, jnp.float32
    row = lambda a: a.reshape(1, -1).astype(f32)
    d = {}
    d["pos_w_rgb"] = p["pos_w_rgb"].astype(f32)
    d["pos_w_depth"] = p["pos_w_depth"].astype(f32)
    # class tokens folded into the pos-encode bias (token = conv(x)+x+(bias+class)).
    d["pos_b_rgb"] = row(p["pos_b_rgb"] + p["rgb_class"])
    d["pos_b_depth"] = row(p["pos_b_depth"] + p["depth_class"])
    d["wqkv"] = jnp.concatenate([p["wq"], p["wkv"]], axis=1).astype(bf16)   # (C, 3C)
    d["bqkv"] = row(jnp.concatenate([p["bq"], p["bkv"]]))
    d["wkv"] = p["wkv"].astype(bf16)
    d["bkv"] = row(p["bkv"])
    d["wo"] = p["wo"].astype(bf16)
    d["bo"] = row(p["bo"])
    d["ln_g"] = row(p["ln_g"])
    d["ln_b"] = row(p["ln_b"])
    d["w_pr_rgb"] = jnp.concatenate(
        [p["proj_w_rgb"], p["res_w1_rgb"]], axis=1).astype(bf16)            # (C, 2C)
    d["w_pr_depth"] = jnp.concatenate(
        [p["proj_w_depth"], p["res_w1_depth"]], axis=1).astype(bf16)        # (C, 2C)
    d["res_dw"] = p["res_dw"].astype(f32)
    d["res_w3"] = p["res_w3"].astype(bf16)
    d["res_bn_scale"] = row(p["res_bn_scale"])
    d["res_bn_shift"] = row(p["res_bn_shift"])
    d["bn_scale"] = row(p["bn_scale"])
    d["bn_shift"] = row(p["bn_shift"])
    return d


# ----------------------------------------------------------------------------
# Forward pass
# ----------------------------------------------------------------------------

def ff_rgb_forward(dp, rgb, depth, *, num_heads):
    # rgb, depth: NCHW (B, C, H, W); returns NCHW (B, C, H, W).
    B, C, H, W = rgb.shape
    N = H * W
    hd = C // num_heads
    scale = float(hd) ** -0.5
    f32, bf16 = jnp.float32, jnp.bfloat16

    def to_nhwc_pad(t):  # NCHW -> NHWC + zero halo (XLA fuses transpose + pad: one pass)
        return jnp.pad(jnp.transpose(t, (0, 2, 3, 1)).astype(f32),
                       ((0, 0), (1, 1), (1, 1), (0, 0)))

    # pos_encode depthwise 3x3 + bias + input residual (+ class token folded into bias).
    rgb_tok = dwconv3x3(to_nhwc_pad(rgb), dp["pos_w_rgb"], dp["pos_b_rgb"],
                        add_input=True, out_dtype=bf16)             # (B, H, W, C)
    depth_tok = dwconv3x3(to_nhwc_pad(depth), dp["pos_w_depth"], dp["pos_b_depth"],
                          add_input=True, out_dtype=bf16)

    rgb_tok2 = rgb_tok.reshape(B * N, C)
    depth_tok2 = depth_tok.reshape(B * N, C)

    # fused q|k|v projection for rgb tokens, k|v projection for depth tokens.
    qkv_rgb = mm_bias(rgb_tok2, dp["wqkv"], dp["bqkv"], out_dtype=bf16)    # (B*N, 3C)
    kv_depth = mm_bias(depth_tok2, dp["wkv"], dp["bkv"], out_dtype=bf16)   # (B*N, 2C)

    # cross-attention over the [rgb; depth] sequence + output proj + residual + LayerNorm
    # for the rgb rows; the depth rows are proj + self-residual + LayerNorm.
    rgb_ln = attn_proj_ln(qkv_rgb.reshape(B, N, 3 * C),
                          kv_depth.reshape(B, N, 2 * C),
                          dp["wo"], dp["bo"],
                          rgb_tok.reshape(B, N, C),
                          dp["ln_g"], dp["ln_b"],
                          num_heads=num_heads, scale=scale,
                          out_dtype=bf16).reshape(B * N, C)
    depth_ln = mm_ln_self(depth_tok2, dp["wo"], dp["bo"], dp["ln_g"], dp["ln_b"],
                          out_dtype=bf16)

    # 1x1 proj (2C->C) and first residual 1x1 (2C->C) in one dual-stream matmul call
    # (the torch permute/reshape to (B, 2C, H, W) is folded into the weight layout).
    p_out, r1 = proj_res(rgb_ln, depth_ln, dp["w_pr_rgb"], dp["w_pr_depth"])

    # residual depthwise 3x3 + ReLU (no bias).
    r1_pad = jnp.pad(r1.reshape(B, H, W, C), ((0, 0), (1, 1), (1, 1), (0, 0)))
    r_dw = dwconv3x3(r1_pad, dp["res_dw"], None, relu=True,
                     out_dtype=bf16).reshape(B * N, C)

    # final residual 1x1 + folded BatchNorm affines + proj add, fused.
    out = res_final(r_dw, dp["res_w3"], p_out,
                    dp["res_bn_scale"], dp["res_bn_shift"],
                    dp["bn_scale"], dp["bn_shift"])                  # (B*N, C) f32
    return jnp.transpose(out.reshape(B, H, W, C), (0, 3, 1, 2))      # back to NCHW


# ----------------------------------------------------------------------------

if __name__ == "__main__":
    B, C, H, W = 2, 32, 8, 8
    num_heads = 2

    key = jax.random.PRNGKey(0)
    kp, kr, kd = jax.random.split(key, 3)
    params = init_params(kp, C, num_heads)
    dparams = prepare_params(params)
    rgb = jax.random.normal(kr, (B, C, H, W), jnp.float32)
    depth = jax.random.normal(kd, (B, C, H, W), jnp.float32)

    fwd = jax.jit(functools.partial(ff_rgb_forward, num_heads=num_heads))
    out = fwd(dparams, rgb, depth)
    out = jax.block_until_ready(out)
    assert out.shape == (B, C, H, W)
    assert bool(jnp.all(jnp.isfinite(out)))
    print("KERNEL_OK")
</pallas_src>

<mosaic_0001>
module attributes {stable_mosaic.version = 11 : i64} {
  func.func @_mm_bias_kernel(%arg0: i32, %arg1: i32, %arg2: memref<128x32xbf16, #tpu.memory_space<vmem>>, %arg3: memref<32x96xbf16, #tpu.memory_space<vmem>>, %arg4: memref<1x96xf32, #tpu.memory_space<vmem>>, %arg5: memref<128x96xbf16, #tpu.memory_space<vmem>>) attributes {dimension_semantics = [#tpu.dimension_semantics<parallel>, #tpu.dimension_semantics<parallel>], iteration_bounds = array<i64: 1, 1>, scalar_prefetch = 0 : i64, scratch_operands = 0 : i64, tpu.core_type = #tpu.core_type<tc>, window_params = [{transform_indices = @transform_0, window_bounds = array<i64: 128, 32>}, {transform_indices = @transform_1, window_bounds = array<i64: 32, 96>}, {transform_indices = @transform_2, window_bounds = array<i64: 1, 96>}, {transform_indices = @transform_3, window_bounds = array<i64: 128, 96>}]} {
    %c0 = arith.constant 0 : index
    %c0_0 = arith.constant 0 : index
    %0 = vector.load %arg2[%c0, %c0_0] : memref<128x32xbf16, #tpu.memory_space<vmem>>, vector<128x32xbf16>
    %c0_1 = arith.constant 0 : index
    %c0_2 = arith.constant 0 : index
    %1 = vector.load %arg3[%c0_1, %c0_2] : memref<32x96xbf16, #tpu.memory_space<vmem>>, vector<32x96xbf16>
    %cst = arith.constant dense<0.000000e+00> : vector<128x96xf32>
    %2 = tpu.matmul %0, %1, %cst {dimension_numbers = #tpu.dot_dimension_numbers<[1], [0], [0], [1], [0, 0, 1, 1], [], []>} : vector<128x32xbf16>, vector<32x96xbf16>, vector<128x96xf32> -> vector<128x96xf32>
    %c0_3 = arith.constant 0 : index
    %c0_4 = arith.constant 0 : index
    %3 = vector.load %arg4[%c0_3, %c0_4] : memref<1x96xf32, #tpu.memory_space<vmem>>, vector<1x96xf32>
    %4 = vector.broadcast %3 : vector<1x96xf32> to vector<128x96xf32>
    %5 = arith.addf %2, %4 : vector<128x96xf32>
    %6 = arith.truncf %5 : vector<128x96xf32> to vector<128x96xbf16>
    %c0_5 = arith.constant 0 : index
    %c0_6 = arith.constant 0 : index
    %7 = vector.load %arg5[%c0_5, %c0_6] : memref<128x96xbf16, #tpu.memory_space<vmem>>, vector<128x96xbf16>
    tpu.vector_store %arg5[%c0_5, %c0_6], %6 {strides = array<i32>} : memref<128x96xbf16, #tpu.memory_space<vmem>>, vector<128x96xbf16>,
    return
  }
  func.func @transform_0(%arg0: i32, %arg1: i32) -> (i32, i32) {
    %c0_i32 = arith.constant 0 : i32
    %c0_i32_0 = arith.constant 0 : i32
    return %arg0, %c0_i32 : i32, i32
  }
  func.func @transform_1(%arg0: i32, %arg1: i32) -> (i32, i32) {
    %c0_i32 = arith.constant 0 : i32
    %c0_i32_0 = arith.constant 0 : i32
    return %c0_i32, %arg1 : i32, i32
  }
  func.func @transform_2(%arg0: i32, %arg1: i32) -> (i32, i32) {
    %c0_i32 = arith.constant 0 : i32
    %c0_i32_0 = arith.constant 0 : i32
    return %c0_i32, %arg1 : i32, i32
  }
  func.func @transform_3(%arg0: i32, %arg1: i32) -> (i32, i32) {
    %c0_i32 = arith.constant 0 : i32
    return %arg0, %arg1 : i32, i32
  }
}

module attributes {stable_mosaic.version = 11 : i64} {
  func.func @_dwconv3x3_kernel(%arg0: i32, %arg1: memref<1x10x10x32xf32, #tpu.memory_space<vmem>>, %arg2: memref<9x32xf32, #tpu.memory_space<vmem>>, %arg3: memref<1x32xf32, #tpu.memory_space<vmem>>, %arg4: memref<1x8x8x32xbf16, #tpu.memory_space<vmem>>) attributes {dimension_semantics = [#tpu.dimension_semantics<parallel>], iteration_bounds = array<i64: 2>, scalar_prefetch = 0 : i64, scratch_operands = 0 : i64, tpu.core_type = #tpu.core_type<tc>, window_params = [{transform_indices = @transform_0, window_bounds = array<i64: 1, 10, 10, 32>}, {pipeline_mode = #tpu.pipeline_mode<synchronous>, transform_indices = @transform_1, window_bounds = array<i64: 9, 32>}, {pipeline_mode = #tpu.pipeline_mode<synchronous>, transform_indices = @transform_2, window_bounds = array<i64: 1, 32>}, {transform_indices = @transform_3, window_bounds = array<i64: 1, 8, 8, 32>}]} {
    %c0 = arith.constant 0 : index
    %c0_0 = arith.constant 0 : index
    %c0_1 = arith.constant 0 : index
    %c0_2 = arith.constant 0 : index
    %0 = vector.load %arg1[%c0, %c0_0, %c0_1, %c0_2] : memref<1x10x10x32xf32, #tpu.memory_space<vmem>>, vector<1x10x10x32xf32>
    %1 = vector.shape_cast %0 : vector<1x10x10x32xf32> to vector<10x10x32xf32>
    %c0_3 = arith.constant 0 : index
    %c0_4 = arith.constant 0 : index
    %2 = vector.load %arg2[%c0_3, %c0_4] : memref<9x32xf32, #tpu.memory_space<vmem>>, vector<9x32xf32>
    %cst = arith.constant 0.000000e+00 : f32
    %3 = vector.broadcast %cst : f32 to vector<8x8x32xf32>
    %c0_5 = arith.constant 0 : index
    %c0_6 = arith.constant 0 : index
    %4 = vector.load %arg3[%c0_5, %c0_6] : memref<1x32xf32, #tpu.memory_space<vmem>>, vector<1x32xf32>
    %5 = vector.shape_cast %4 : vector<1x32xf32> to vector<1x1x32xf32>
    %6 = vector.broadcast %5 : vector<1x1x32xf32> to vector<8x8x32xf32>
    %7 = arith.addf %3, %6 : vector<8x8x32xf32>
    %8 = vector.extract_strided_slice %1 {offsets = [0, 0, 0], sizes = [8, 8, 32], strides = [1, 1, 1]} : vector<10x10x32xf32> to vector<8x8x32xf32>
    %9 = vector.extract_strided_slice %2 {offsets = [0, 0], sizes = [1, 32], strides = [1, 1]} : vector<9x32xf32> to vector<1x32xf32>
    %10 = vector.shape_cast %9 : vector<1x32xf32> to vector<1x1x32xf32>
    %11 = vector.broadcast %10 : vector<1x1x32xf32> to vector<8x8x32xf32>
    %12 = arith.mulf %8, %11 : vector<8x8x32xf32>
    %13 = arith.addf %7, %12 : vector<8x8x32xf32>
    %14 = vector.extract_strided_slice %1 {offsets = [0, 1, 0], sizes = [8, 8, 32], strides = [1, 1, 1]} : vector<10x10x32xf32> to vector<8x8x32xf32>
    %15 = vector.extract_strided_slice %2 {offsets = [1, 0], sizes = [1, 32], strides = [1, 1]} : vector<9x32xf32> to vector<1x32xf32>
    %16 = vector.shape_cast %15 : vector<1x32xf32> to vector<1x1x32xf32>
    %17 = vector.broadcast %16 : vector<1x1x32xf32> to vector<8x8x32xf32>
    %18 = arith.mulf %14, %17 : vector<8x8x32xf32>
    %19 = arith.addf %13, %18 : vector<8x8x32xf32>
    %20 = vector.extract_strided_slice %1 {offsets = [0, 2, 0], sizes = [8, 8, 32], strides = [1, 1, 1]} : vector<10x10x32xf32> to vector<8x8x32xf32>
    %21 = vector.extract_strided_slice %2 {offsets = [2, 0], sizes = [1, 32], strides = [1, 1]} : vector<9x32xf32> to vector<1x32xf32>
    %22 = vector.shape_cast %21 : vector<1x32xf32> to vector<1x1x32xf32>
    %23 = vector.broadcast %22 : vector<1x1x32xf32> to vector<8x8x32xf32>
    %24 = arith.mulf %20, %23 : vector<8x8x32xf32>
    %25 = arith.addf %19, %24 : vector<8x8x32xf32>
    %26 = vector.extract_strided_slice %1 {offsets = [1, 0, 0], sizes = [8, 8, 32], strides = [1, 1, 1]} : vector<10x10x32xf32> to vector<8x8x32xf32>
    %27 = vector.extract_strided_slice %2 {offsets = [3, 0], sizes = [1, 32], strides = [1, 1]} : vector<9x32xf32> to vector<1x32xf32>
    %28 = vector.shape_cast %27 : vector<1x32xf32> to vector<1x1x32xf32>
    %29 = vector.broadcast %28 : vector<1x1x32xf32> to vector<8x8x32xf32>
    %30 = arith.mulf %26, %29 : vector<8x8x32xf32>
    %31 = arith.addf %25, %30 : vector<8x8x32xf32>
    %32 = vector.extract_strided_slice %1 {offsets = [1, 1, 0], sizes = [8, 8, 32], strides = [1, 1, 1]} : vector<10x10x32xf32> to vector<8x8x32xf32>
    %33 = vector.extract_strided_slice %2 {offsets = [4, 0], sizes = [1, 32], strides = [1, 1]} : vector<9x32xf32> to vector<1x32xf32>
    %34 = vector.shape_cast %33 : vector<1x32xf32> to vector<1x1x32xf32>
    %35 = vector.broadcast %34 : vector<1x1x32xf32> to vector<8x8x32xf32>
    %36 = arith.mulf %32, %35 : vector<8x8x32xf32>
    %37 = arith.addf %31, %36 : vector<8x8x32xf32>
    %38 = vector.extract_strided_slice %1 {offsets = [1, 2, 0], sizes = [8, 8, 32], strides = [1, 1, 1]} : vector<10x10x32xf32> to vector<8x8x32xf32>
    %39 = vector.extract_strided_slice %2 {offsets = [5, 0], sizes = [1, 32], strides = [1, 1]} : vector<9x32xf32> to vector<1x32xf32>
    %40 = vector.shape_cast %39 : vector<1x32xf32> to vector<1x1x32xf32>
    %41 = vector.broadcast %40 : vector<1x1x32xf32> to vector<8x8x32xf32>
    %42 = arith.mulf %38, %41 : vector<8x8x32xf32>
    %43 = arith.addf %37, %42 : vector<8x8x32xf32>
    %44 = vector.extract_strided_slice %1 {offsets = [2, 0, 0], sizes = [8, 8, 32], strides = [1, 1, 1]} : vector<10x10x32xf32> to vector<8x8x32xf32>
    %45 = vector.extract_strided_slice %2 {offsets = [6, 0], sizes = [1, 32], strides = [1, 1]} : vector<9x32xf32> to vector<1x32xf32>
    %46 = vector.shape_cast %45 : vector<1x32xf32> to vector<1x1x32xf32>
    %47 = vector.broadcast %46 : vector<1x1x32xf32> to vector<8x8x32xf32>
    %48 = arith.mulf %44, %47 : vector<8x8x32xf32>
    %49 = arith.addf %43, %48 : vector<8x8x32xf32>
    %50 = vector.extract_strided_slice %1 {offsets = [2, 1, 0], sizes = [8, 8, 32], strides = [1, 1, 1]} : vector<10x10x32xf32> to vector<8x8x32xf32>
    %51 = vector.extract_strided_slice %2 {offsets = [7, 0], sizes = [1, 32], strides = [1, 1]} : vector<9x32xf32> to vector<1x32xf32>
    %52 = vector.shape_cast %51 : vector<1x32xf32> to vector<1x1x32xf32>
    %53 = vector.broadcast %52 : vector<1x1x32xf32> to vector<8x8x32xf32>
    %54 = arith.mulf %50, %53 : vector<8x8x32xf32>
    %55 = arith.addf %49, %54 : vector<8x8x32xf32>
    %56 = vector.extract_strided_slice %1 {offsets = [2, 2, 0], sizes = [8, 8, 32], strides = [1, 1, 1]} : vector<10x10x32xf32> to vector<8x8x32xf32>
    %57 = vector.extract_strided_slice %2 {offsets = [8, 0], sizes = [1, 32], strides = [1, 1]} : vector<9x32xf32> to vector<1x32xf32>
    %58 = vector.shape_cast %57 : vector<1x32xf32> to vector<1x1x32xf32>
    %59 = vector.broadcast %58 : vector<1x1x32xf32> to vector<8x8x32xf32>
    %60 = arith.mulf %56, %59 : vector<8x8x32xf32>
    %61 = arith.addf %55, %60 : vector<8x8x32xf32>
    %62 = vector.extract_strided_slice %1 {offsets = [1, 1, 0], sizes = [8, 8, 32], strides = [1, 1, 1]} : vector<10x10x32xf32> to vector<8x8x32xf32>
    %63 = arith.addf %61, %62 : vector<8x8x32xf32>
    %64 = arith.truncf %63 : vector<8x8x32xf32> to vector<8x8x32xbf16>
    %c0_7 = arith.constant 0 : index
    %c0_8 = arith.constant 0 : index
    %c0_9 = arith.constant 0 : index
    %c0_10 = arith.constant 0 : index
    %65 = vector.load %arg4[%c0_7, %c0_8, %c0_9, %c0_10] : memref<1x8x8x32xbf16, #tpu.memory_space<vmem>>, vector<1x8x8x32xbf16>
    %66 = vector.shape_cast %65 : vector<1x8x8x32xbf16> to vector<8x8x32xbf16>
    %67 = vector.shape_cast %64 : vector<8x8x32xbf16> to vector<1x8x8x32xbf16>
    tpu.vector_store %arg4[%c0_7, %c0_8, %c0_9, %c0_10], %67 {strides = array<i32>} : memref<1x8x8x32xbf16, #tpu.memory_space<vmem>>, vector<1x8x8x32xbf16>,
    return
  }
  func.func @transform_0(%arg0: i32) -> (i32, i32, i32, i32) {
    %c0_i32 = arith.constant 0 : i32
    %c0_i32_0 = arith.constant 0 : i32
    %c0_i32_1 = arith.constant 0 : i32
    %c0_i32_2 = arith.constant 0 : i32
    return %arg0, %c0_i32, %c0_i32_0, %c0_i32_1 : i32, i32, i32, i32
  }
  func.func @transform_1(%arg0: i32) -> (i32, i32) {
    %c0_i32 = arith.constant 0 : i32
    %c0_i32_0 = arith.constant 0 : i32
    %c0_i32_1 = arith.constant 0 : i32
    return %c0_i32, %c0_i32_0 : i32, i32
  }
  func.func @transform_2(%arg0: i32) -> (i32, i32) {
    %c0_i32 = arith.constant 0 : i32
    %c0_i32_0 = arith.constant 0 : i32
    %c0_i32_1 = arith.constant 0 : i32
    return %c0_i32, %c0_i32_0 : i32, i32
  }
  func.func @transform_3(%arg0: i32) -> (i32, i32, i32, i32) {
    %c0_i32 = arith.constant 0 : i32
    %c0_i32_0 = arith.constant 0 : i32
    %c0_i32_1 = arith.constant 0 : i32
    %c0_i32_2 = arith.constant 0 : i32
    return %arg0, %c0_i32, %c0_i32_0, %c0_i32_1 : i32, i32, i32, i32
  }
}

module attributes {stable_mosaic.version = 11 : i64} {
  func.func @_mm_bias_kernel(%arg0: i32, %arg1: i32, %arg2: memref<128x32xbf16, #tpu.memory_space<vmem>>, %arg3: memref<32x64xbf16, #tpu.memory_space<vmem>>, %arg4: memref<1x64xf32, #tpu.memory_space<vmem>>, %arg5: memref<128x64xbf16, #tpu.memory_space<vmem>>) attributes {dimension_semantics = [#tpu.dimension_semantics<parallel>, #tpu.dimension_semantics<parallel>], iteration_bounds = array<i64: 1, 1>, scalar_prefetch = 0 : i64, scratch_operands = 0 : i64, tpu.core_type = #tpu.core_type<tc>, window_params = [{transform_indices = @transform_0, window_bounds = array<i64: 128, 32>}, {transform_indices = @transform_1, window_bounds = array<i64: 32, 64>}, {transform_indices = @transform_2, window_bounds = array<i64: 1, 64>}, {transform_indices = @transform_3, window_bounds = array<i64: 128, 64>}]} {
    %c0 = arith.constant 0 : index
    %c0_0 = arith.constant 0 : index
    %0 = vector.load %arg2[%c0, %c0_0] : memref<128x32xbf16, #tpu.memory_space<vmem>>, vector<128x32xbf16>
    %c0_1 = arith.constant 0 : index
    %c0_2 = arith.constant 0 : index
    %1 = vector.load %arg3[%c0_1, %c0_2] : memref<32x64xbf16, #tpu.memory_space<vmem>>, vector<32x64xbf16>
    %cst = arith.constant dense<0.000000e+00> : vector<128x64xf32>
    %2 = tpu.matmul %0, %1, %cst {dimension_numbers = #tpu.dot_dimension_numbers<[1], [0], [0], [1], [0, 0, 1, 1], [], []>} : vector<128x32xbf16>, vector<32x64xbf16>, vector<128x64xf32> -> vector<128x64xf32>
    %c0_3 = arith.constant 0 : index
    %c0_4 = arith.constant 0 : index
    %3 = vector.load %arg4[%c0_3, %c0_4] : memref<1x64xf32, #tpu.memory_space<vmem>>, vector<1x64xf32>
    %4 = vector.broadcast %3 : vector<1x64xf32> to vector<128x64xf32>
    %5 = arith.addf %2, %4 : vector<128x64xf32>
    %6 = arith.truncf %5 : vector<128x64xf32> to vector<128x64xbf16>
    %c0_5 = arith.constant 0 : index
    %c0_6 = arith.constant 0 : index
    %7 = vector.load %arg5[%c0_5, %c0_6] : memref<128x64xbf16, #tpu.memory_space<vmem>>, vector<128x64xbf16>
    tpu.vector_store %arg5[%c0_5, %c0_6], %6 {strides = array<i32>} : memref<128x64xbf16, #tpu.memory_space<vmem>>, vector<128x64xbf16>,
    return
  }
  func.func @transform_0(%arg0: i32, %arg1: i32) -> (i32, i32) {
    %c0_i32 = arith.constant 0 : i32
    %c0_i32_0 = arith.constant 0 : i32
    return %arg0, %c0_i32 : i32, i32
  }
  func.func @transform_1(%arg0: i32, %arg1: i32) -> (i32, i32) {
    %c0_i32 = arith.constant 0 : i32
    %c0_i32_0 = arith.constant 0 : i32
    return %c0_i32, %arg1 : i32, i32
  }
  func.func @transform_2(%arg0: i32, %arg1: i32) -> (i32, i32) {
    %c0_i32 = arith.constant 0 : i32
    %c0_i32_0 = arith.constant 0 : i32
    return %c0_i32, %arg1 : i32, i32
  }
  func.func @transform_3(%arg0: i32, %arg1: i32) -> (i32, i32) {
    %c0_i32 = arith.constant 0 : i32
    return %arg0, %arg1 : i32, i32
  }
}

module attributes {stable_mosaic.version = 11 : i64} {
  func.func @_mm_ln_self_kernel(%arg0: i32, %arg1: memref<128x32xbf16, #tpu.memory_space<vmem>>, %arg2: memref<32x32xbf16, #tpu.memory_space<vmem>>, %arg3: memref<1x32xf32, #tpu.memory_space<vmem>>, %arg4: memref<1x32xf32, #tpu.memory_space<vmem>>, %arg5: memref<1x32xf32, #tpu.memory_space<vmem>>, %arg6: memref<128x32xbf16, #tpu.memory_space<vmem>>) attributes {dimension_semantics = [#tpu.dimension_semantics<parallel>], iteration_bounds = array<i64: 1>, scalar_prefetch = 0 : i64, scratch_operands = 0 : i64, tpu.core_type = #tpu.core_type<tc>, window_params = [{transform_indices = @transform_0, window_bounds = array<i64: 128, 32>}, {pipeline_mode = #tpu.pipeline_mode<synchronous>, transform_indices = @transform_1, window_bounds = array<i64: 32, 32>}, {pipeline_mode = #tpu.pipeline_mode<synchronous>, transform_indices = @transform_2, window_bounds = array<i64: 1, 32>}, {pipeline_mode = #tpu.pipeline_mode<synchronous>, transform_indices = @transform_3, window_bounds = array<i64: 1, 32>}, {pipeline_mode = #tpu.pipeline_mode<synchronous>, transform_indices = @transform_4, window_bounds = array<i64: 1, 32>}, {transform_indices = @transform_5, window_bounds = array<i64: 128, 32>}]} {
    %c0 = arith.constant 0 : index
    %c0_0 = arith.constant 0 : index
    %0 = vector.load %arg1[%c0, %c0_0] : memref<128x32xbf16, #tpu.memory_space<vmem>>, vector<128x32xbf16>
    %c0_1 = arith.constant 0 : index
    %c0_2 = arith.constant 0 : index
    %1 = vector.load %arg2[%c0_1, %c0_2] : memref<32x32xbf16, #tpu.memory_space<vmem>>, vector<32x32xbf16>
    %cst = arith.constant dense<0.000000e+00> : vector<128x32xf32>
    %2 = tpu.matmul %0, %1, %cst {dimension_numbers = #tpu.dot_dimension_numbers<[1], [0], [0], [1], [0, 0, 1, 1], [], []>} : vector<128x32xbf16>, vector<32x32xbf16>, vector<128x32xf32> -> vector<128x32xf32>
    %c0_3 = arith.constant 0 : index
    %c0_4 = arith.constant 0 : index
    %3 = vector.load %arg3[%c0_3, %c0_4] : memref<1x32xf32, #tpu.memory_space<vmem>>, vector<1x32xf32>
    %4 = vector.broadcast %3 : vector<1x32xf32> to vector<128x32xf32>
    %5 = arith.addf %2, %4 : vector<128x32xf32>
    %6 = arith.extf %0 : vector<128x32xbf16> to vector<128x32xf32>
    %7 = arith.addf %5, %6 : vector<128x32xf32>
    %cst_5 = arith.constant dense<0.000000e+00> : vector<128xf32>
    %8 = vector.multi_reduction <add>, %7, %cst_5 [1] : vector<128x32xf32> to vector<128xf32>
    %9 = vector.shape_cast %8 : vector<128xf32> to vector<128x1xf32>
    %cst_6 = arith.constant 3.200000e+01 : f32
    %10 = vector.broadcast %cst_6 : f32 to vector<128x1xf32>
    %11 = arith.divf %9, %10 : vector<128x1xf32>
    %12 = vector.broadcast %11 : vector<128x1xf32> to vector<128x32xf32>
    %13 = arith.subf %7, %12 : vector<128x32xf32>
    %14 = arith.mulf %13, %13 : vector<128x32xf32>
    %cst_7 = arith.constant dense<0.000000e+00> : vector<128xf32>
    %15 = vector.multi_reduction <add>, %14, %cst_7 [1] : vector<128x32xf32> to vector<128xf32>
    %16 = vector.shape_cast %15 : vector<128xf32> to vector<128x1xf32>
    %cst_8 = arith.constant 3.200000e+01 : f32
    %17 = vector.broadcast %cst_8 : f32 to vector<128x1xf32>
    %18 = arith.divf %16, %17 : vector<128x1xf32>
    %19 = vector.broadcast %11 : vector<128x1xf32> to vector<128x32xf32>
    %20 = arith.subf %7, %19 : vector<128x32xf32>
    %cst_9 = arith.constant 9.99999997E-7 : f32
    %21 = vector.broadcast %cst_9 : f32 to vector<128x1xf32>
    %22 = arith.addf %18, %21 : vector<128x1xf32>
    %23 = math.rsqrt %22 : vector<128x1xf32>
    %24 = vector.broadcast %23 : vector<128x1xf32> to vector<128x32xf32>
    %25 = arith.mulf %20, %24 : vector<128x32xf32>
    %c0_10 = arith.constant 0 : index
    %c0_11 = arith.constant 0 : index
    %26 = vector.load %arg4[%c0_10, %c0_11] : memref<1x32xf32, #tpu.memory_space<vmem>>, vector<1x32xf32>
    %27 = vector.broadcast %26 : vector<1x32xf32> to vector<128x32xf32>
    %28 = arith.mulf %25, %27 : vector<128x32xf32>
    %c0_12 = arith.constant 0 : index
    %c0_13 = arith.constant 0 : index
    %29 = vector.load %arg5[%c0_12, %c0_13] : memref<1x32xf32, #tpu.memory_space<vmem>>, vector<1x32xf32>
    %30 = vector.broadcast %29 : vector<1x32xf32> to vector<128x32xf32>
    %31 = arith.addf %28, %30 : vector<128x32xf32>
    %32 = arith.truncf %31 : vector<128x32xf32> to vector<128x32xbf16>
    %c0_14 = arith.constant 0 : index
    %c0_15 = arith.constant 0 : index
    %33 = vector.load %arg6[%c0_14, %c0_15] : memref<128x32xbf16, #tpu.memory_space<vmem>>, vector<128x32xbf16>
    tpu.vector_store %arg6[%c0_14, %c0_15], %32 {strides = array<i32>} : memref<128x32xbf16, #tpu.memory_space<vmem>>, vector<128x32xbf16>,
    return
  }
  func.func @transform_0(%arg0: i32) -> (i32, i32) {
    %c0_i32 = arith.constant 0 : i32
    %c0_i32_0 = arith.constant 0 : i32
    return %arg0, %c0_i32 : i32, i32
  }
  func.func @transform_1(%arg0: i32) -> (i32, i32) {
    %c0_i32 = arith.constant 0 : i32
    %c0_i32_0 = arith.constant 0 : i32
    %c0_i32_1 = arith.constant 0 : i32
    return %c0_i32, %c0_i32_0 : i32, i32
  }
  func.func @transform_2(%arg0: i32) -> (i32, i32) {
    %c0_i32 = arith.constant 0 : i32
    %c0_i32_0 = arith.constant 0 : i32
    %c0_i32_1 = arith.constant 0 : i32
    return %c0_i32, %c0_i32_0 : i32, i32
  }
  func.func @transform_3(%arg0: i32) -> (i32, i32) {
    %c0_i32 = arith.constant 0 : i32
    %c0_i32_0 = arith.constant 0 : i32
    %c0_i32_1 = arith.constant 0 : i32
    return %c0_i32, %c0_i32_0 : i32, i32
  }
  func.func @transform_4(%arg0: i32) -> (i32, i32) {
    %c0_i32 = arith.constant 0 : i32
    %c0_i32_0 = arith.constant 0 : i32
    %c0_i32_1 = arith.constant 0 : i32
    return %c0_i32, %c0_i32_0 : i32, i32
  }
  func.func @transform_5(%arg0: i32) -> (i32, i32) {
    %c0_i32 = arith.constant 0 : i32
    %c0_i32_0 = arith.constant 0 : i32
    return %arg0, %c0_i32 : i32, i32
  }
}

module attributes {stable_mosaic.version = 11 : i64} {
  func.func @_attn_proj_ln_kernel(%arg0: i32, %arg1: memref<1x64x96xbf16, #tpu.memory_space<vmem>>, %arg2: memref<1x64x64xbf16, #tpu.memory_space<vmem>>, %arg3: memref<32x32xbf16, #tpu.memory_space<vmem>>, %arg4: memref<1x32xf32, #tpu.memory_space<vmem>>, %arg5: memref<1x64x32xbf16, #tpu.memory_space<vmem>>, %arg6: memref<1x32xf32, #tpu.memory_space<vmem>>, %arg7: memref<1x32xf32, #tpu.memory_space<vmem>>, %arg8: memref<1x64x32xbf16, #tpu.memory_space<vmem>>) attributes {dimension_semantics = [#tpu.dimension_semantics<parallel>], iteration_bounds = array<i64: 2>, scalar_prefetch = 0 : i64, scratch_operands = 0 : i64, tpu.core_type = #tpu.core_type<tc>, window_params = [{transform_indices = @transform_0, window_bounds = array<i64: 1, 64, 96>}, {transform_indices = @transform_1, window_bounds = array<i64: 1, 64, 64>}, {pipeline_mode = #tpu.pipeline_mode<synchronous>, transform_indices = @transform_2, window_bounds = array<i64: 32, 32>}, {pipeline_mode = #tpu.pipeline_mode<synchronous>, transform_indices = @transform_3, window_bounds = array<i64: 1, 32>}, {transform_indices = @transform_4, window_bounds = array<i64: 1, 64, 32>}, {pipeline_mode = #tpu.pipeline_mode<synchronous>, transform_indices = @transform_5, window_bounds = array<i64: 1, 32>}, {pipeline_mode = #tpu.pipeline_mode<synchronous>, transform_indices = @transform_6, window_bounds = array<i64: 1, 32>}, {transform_indices = @transform_7, window_bounds = array<i64: 1, 64, 32>}]} {
    %c0 = arith.constant 0 : index
    %c0_0 = arith.constant 0 : index
    %c0_1 = arith.constant 0 : index
    %0 = vector.load %arg1[%c0, %c0_0, %c0_1] : memref<1x64x96xbf16, #tpu.memory_space<vmem>>, vector<1x64x96xbf16>
    %1 = vector.shape_cast %0 : vector<1x64x96xbf16> to vector<64x96xbf16>
    %c0_2 = arith.constant 0 : index
    %c0_3 = arith.constant 0 : index
    %c0_4 = arith.constant 0 : index
    %2 = vector.load %arg2[%c0_2, %c0_3, %c0_4] : memref<1x64x64xbf16, #tpu.memory_space<vmem>>, vector<1x64x64xbf16>
    %3 = vector.shape_cast %2 : vector<1x64x64xbf16> to vector<64x64xbf16>
    %4 = vector.extract_strided_slice %1 {offsets = [0, 0], sizes = [64, 16], strides = [1, 1]} : vector<64x96xbf16> to vector<64x16xbf16>
    %5 = vector.extract_strided_slice %1 {offsets = [0, 32], sizes = [64, 16], strides = [1, 1]} : vector<64x96xbf16> to vector<64x16xbf16>
    %6 = vector.extract_strided_slice %1 {offsets = [0, 64], sizes = [64, 16], strides = [1, 1]} : vector<64x96xbf16> to vector<64x16xbf16>
    %7 = vector.extract_strided_slice %3 {offsets = [0, 0], sizes = [64, 16], strides = [1, 1]} : vector<64x64xbf16> to vector<64x16xbf16>
    %8 = vector.extract_strided_slice %3 {offsets = [0, 32], sizes = [64, 16], strides = [1, 1]} : vector<64x64xbf16> to vector<64x16xbf16>
    %cst = arith.constant dense<0.000000e+00> : vector<64x64xf32>
    %9 = tpu.matmul %4, %5, %cst {dimension_numbers = #tpu.dot_dimension_numbers<[1], [1], [0], [0], [0, 0, 1, 0], [], []>} : vector<64x16xbf16>, vector<64x16xbf16>, vector<64x64xf32> -> vector<64x64xf32>
    %cst_5 = arith.constant dense<0.000000e+00> : vector<64x64xf32>
    %10 = tpu.matmul %4, %7, %cst_5 {dimension_numbers = #tpu.dot_dimension_numbers<[1], [1], [0], [0], [0, 0, 1, 0], [], []>} : vector<64x16xbf16>, vector<64x16xbf16>, vector<64x64xf32> -> vector<64x64xf32>
    %11 = tpu.concatenate %9, %10 in 1 : vector<64x64xf32>, vector<64x64xf32> -> vector<64x128xf32>
    %cst_6 = arith.constant 2.500000e-01 : f32
    %12 = vector.broadcast %cst_6 : f32 to vector<64x128xf32>
    %13 = arith.mulf %11, %12 : vector<64x128xf32>
    %cst_7 = arith.constant dense<0xFF800000> : vector<64xf32>
    %14 = vector.multi_reduction <maximumf>, %13, %cst_7 [1] : vector<64x128xf32> to vector<64xf32>
    %15 = vector.shape_cast %14 : vector<64xf32> to vector<64x1xf32>
    %16 = vector.broadcast %15 : vector<64x1xf32> to vector<64x128xf32>
    %17 = arith.subf %13, %16 : vector<64x128xf32>
    %18 = math.exp %17 : vector<64x128xf32>
    %cst_8 = arith.constant dense<0.000000e+00> : vector<64xf32>
    %19 = vector.multi_reduction <add>, %18, %cst_8 [1] : vector<64x128xf32> to vector<64xf32>
    %20 = vector.shape_cast %19 : vector<64xf32> to vector<64x1xf32>
    %21 = tpu.reciprocal %20 {approx = true} : vector<64x1xf32> -> vector<64x1xf32>
    %22 = vector.broadcast %21 : vector<64x1xf32> to vector<64x128xf32>
    %23 = arith.mulf %18, %22 : vector<64x128xf32>
    %24 = arith.truncf %23 : vector<64x128xf32> to vector<64x128xbf16>
    %25 = vector.extract_strided_slice %24 {offsets = [0, 0], sizes = [64, 64], strides = [1, 1]} : vector<64x128xbf16> to vector<64x64xbf16>
    %cst_9 = arith.constant dense<0.000000e+00> : vector<64x16xf32>
    %26 = tpu.matmul %25, %6, %cst_9 {dimension_numbers = #tpu.dot_dimension_numbers<[1], [0], [0], [1], [0, 0, 1, 1], [], []>} : vector<64x64xbf16>, vector<64x16xbf16>, vector<64x16xf32> -> vector<64x16xf32>
    %27 = vector.extract_strided_slice %24 {offsets = [0, 64], sizes = [64, 64], strides = [1, 1]} : vector<64x128xbf16> to vector<64x64xbf16>
    %cst_10 = arith.constant dense<0.000000e+00> : vector<64x16xf32>
    %28 = tpu.matmul %27, %8, %cst_10 {dimension_numbers = #tpu.dot_dimension_numbers<[1], [0], [0], [1], [0, 0, 1, 1], [], []>} : vector<64x64xbf16>, vector<64x16xbf16>, vector<64x16xf32> -> vector<64x16xf32>
    %29 = arith.addf %26, %28 : vector<64x16xf32>
    %30 = vector.extract_strided_slice %1 {offsets = [0, 16], sizes = [64, 16], strides = [1, 1]} : vector<64x96xbf16> to vector<64x16xbf16>
    %31 = vector.extract_strided_slice %1 {offsets = [0, 48], sizes = [64, 16], strides = [1, 1]} : vector<64x96xbf16> to vector<64x16xbf16>
    %32 = vector.extract_strided_slice %1 {offsets = [0, 80], sizes = [64, 16], strides = [1, 1]} : vector<64x96xbf16> to vector<64x16xbf16>
    %33 = vector.extract_strided_slice %3 {offsets = [0, 16], sizes = [64, 16], strides = [1, 1]} : vector<64x64xbf16> to vector<64x16xbf16>
    %34 = vector.extract_strided_slice %3 {offsets = [0, 48], sizes = [64, 16], strides = [1, 1]} : vector<64x64xbf16> to vector<64x16xbf16>
    %cst_11 = arith.constant dense<0.000000e+00> : vector<64x64xf32>
    %35 = tpu.matmul %30, %31, %cst_11 {dimension_numbers = #tpu.dot_dimension_numbers<[1], [1], [0], [0], [0, 0, 1, 0], [], []>} : vector<64x16xbf16>, vector<64x16xbf16>, vector<64x64xf32> -> vector<64x64xf32>
    %cst_12 = arith.constant dense<0.000000e+00> : vector<64x64xf32>
    %36 = tpu.matmul %30, %33, %cst_12 {dimension_numbers = #tpu.dot_dimension_numbers<[1], [1], [0], [0], [0, 0, 1, 0], [], []>} : vector<64x16xbf16>, vector<64x16xbf16>, vector<64x64xf32> -> vector<64x64xf32>
    %37 = tpu.concatenate %35, %36 in 1 : vector<64x64xf32>, vector<64x64xf32> -> vector<64x128xf32>
    %cst_13 = arith.constant 2.500000e-01 : f32
    %38 = vector.broadcast %cst_13 : f32 to vector<64x128xf32>
    %39 = arith.mulf %37, %38 : vector<64x128xf32>
    %cst_14 = arith.constant dense<0xFF800000> : vector<64xf32>
    %40 = vector.multi_reduction <maximumf>, %39, %cst_14 [1] : vector<64x128xf32> to vector<64xf32>
    %41 = vector.shape_cast %40 : vector<64xf32> to vector<64x1xf32>
    %42 = vector.broadcast %41 : vector<64x1xf32> to vector<64x128xf32>
    %43 = arith.subf %39, %42 : vector<64x128xf32>
    %44 = math.exp %43 : vector<64x128xf32>
    %cst_15 = arith.constant dense<0.000000e+00> : vector<64xf32>
    %45 = vector.multi_reduction <add>, %44, %cst_15 [1] : vector<64x128xf32> to vector<64xf32>
    %46 = vector.shape_cast %45 : vector<64xf32> to vector<64x1xf32>
    %47 = tpu.reciprocal %46 {approx = true} : vector<64x1xf32> -> vector<64x1xf32>
    %48 = vector.broadcast %47 : vector<64x1xf32> to vector<64x128xf32>
    %49 = arith.mulf %44, %48 : vector<64x128xf32>
    %50 = arith.truncf %49 : vector<64x128xf32> to vector<64x128xbf16>
    %51 = vector.extract_strided_slice %50 {offsets = [0, 0], sizes = [64, 64], strides = [1, 1]} : vector<64x128xbf16> to vector<64x64xbf16>
    %cst_16 = arith.constant dense<0.000000e+00> : vector<64x16xf32>
    %52 = tpu.matmul %51, %32, %cst_16 {dimension_numbers = #tpu.dot_dimension_numbers<[1], [0], [0], [1], [0, 0, 1, 1], [], []>} : vector<64x64xbf16>, vector<64x16xbf16>, vector<64x16xf32> -> vector<64x16xf32>
    %53 = vector.extract_strided_slice %50 {offsets = [0, 64], sizes = [64, 64], strides = [1, 1]} : vector<64x128xbf16> to vector<64x64xbf16>
    %cst_17 = arith.constant dense<0.000000e+00> : vector<64x16xf32>
    %54 = tpu.matmul %53, %34, %cst_17 {dimension_numbers = #tpu.dot_dimension_numbers<[1], [0], [0], [1], [0, 0, 1, 1], [], []>} : vector<64x64xbf16>, vector<64x16xbf16>, vector<64x16xf32> -> vector<64x16xf32>
    %55 = arith.addf %52, %54 : vector<64x16xf32>
    %56 = tpu.concatenate %29, %55 in 1 : vector<64x16xf32>, vector<64x16xf32> -> vector<64x32xf32>
    %57 = arith.truncf %56 : vector<64x32xf32> to vector<64x32xbf16>
    %c0_18 = arith.constant 0 : index
    %c0_19 = arith.constant 0 : index
    %58 = vector.load %arg3[%c0_18, %c0_19] : memref<32x32xbf16, #tpu.memory_space<vmem>>, vector<32x32xbf16>
    %cst_20 = arith.constant dense<0.000000e+00> : vector<64x32xf32>
    %59 = tpu.matmul %57, %58, %cst_20 {dimension_numbers = #tpu.dot_dimension_numbers<[1], [0], [0], [1], [0, 0, 1, 1], [], []>} : vector<64x32xbf16>, vector<32x32xbf16>, vector<64x32xf32> -> vector<64x32xf32>
    %c0_21 = arith.constant 0 : index
    %c0_22 = arith.constant 0 : index
    %60 = vector.load %arg4[%c0_21, %c0_22] : memref<1x32xf32, #tpu.memory_space<vmem>>, vector<1x32xf32>
    %61 = vector.broadcast %60 : vector<1x32xf32> to vector<64x32xf32>
    %62 = arith.addf %59, %61 : vector<64x32xf32>
    %c0_23 = arith.constant 0 : index
    %c0_24 = arith.constant 0 : index
    %c0_25 = arith.constant 0 : index
    %63 = vector.load %arg5[%c0_23, %c0_24, %c0_25] : memref<1x64x32xbf16, #tpu.memory_space<vmem>>, vector<1x64x32xbf16>
    %64 = vector.shape_cast %63 : vector<1x64x32xbf16> to vector<64x32xbf16>
    %65 = arith.extf %64 : vector<64x32xbf16> to vector<64x32xf32>
    %66 = arith.addf %62, %65 : vector<64x32xf32>
    %cst_26 = arith.constant dense<0.000000e+00> : vector<64xf32>
    %67 = vector.multi_reduction <add>, %66, %cst_26 [1] : vector<64x32xf32> to vector<64xf32>
    %68 = vector.shape_cast %67 : vector<64xf32> to vector<64x1xf32>
    %cst_27 = arith.constant 3.200000e+01 : f32
    %69 = vector.broadcast %cst_27 : f32 to vector<64x1xf32>
    %70 = arith.divf %68, %69 : vector<64x1xf32>
    %71 = vector.broadcast %70 : vector<64x1xf32> to vector<64x32xf32>
    %72 = arith.subf %66, %71 : vector<64x32xf32>
    %73 = arith.mulf %72, %72 : vector<64x32xf32>
    %cst_28 = arith.constant dense<0.000000e+00> : vector<64xf32>
    %74 = vector.multi_reduction <add>, %73, %cst_28 [1] : vector<64x32xf32> to vector<64xf32>
    %75 = vector.shape_cast %74 : vector<64xf32> to vector<64x1xf32>
    %cst_29 = arith.constant 3.200000e+01 : f32
    %76 = vector.broadcast %cst_29 : f32 to vector<64x1xf32>
    %77 = arith.divf %75, %76 : vector<64x1xf32>
    %78 = vector.broadcast %70 : vector<64x1xf32> to vector<64x32xf32>
    %79 = arith.subf %66, %78 : vector<64x32xf32>
    %cst_30 = arith.constant 9.99999997E-7 : f32
    %80 = vector.broadcast %cst_30 : f32 to vector<64x1xf32>
    %81 = arith.addf %77, %80 : vector<64x1xf32>
    %82 = math.rsqrt %81 : vector<64x1xf32>
    %83 = vector.broadcast %82 : vector<64x1xf32> to vector<64x32xf32>
    %84 = arith.mulf %79, %83 : vector<64x32xf32>
    %c0_31 = arith.constant 0 : index
    %c0_32 = arith.constant 0 : index
    %85 = vector.load %arg6[%c0_31, %c0_32] : memref<1x32xf32, #tpu.memory_space<vmem>>, vector<1x32xf32>
    %86 = vector.broadcast %85 : vector<1x32xf32> to vector<64x32xf32>
    %87 = arith.mulf %84, %86 : vector<64x32xf32>
    %c0_33 = arith.constant 0 : index
    %c0_34 = arith.constant 0 : index
    %88 = vector.load %arg7[%c0_33, %c0_34] : memref<1x32xf32, #tpu.memory_space<vmem>>, vector<1x32xf32>
    %89 = vector.broadcast %88 : vector<1x32xf32> to vector<64x32xf32>
    %90 = arith.addf %87, %89 : vector<64x32xf32>
    %91 = arith.truncf %90 : vector<64x32xf32> to vector<64x32xbf16>
    %c0_35 = arith.constant 0 : index
    %c0_36 = arith.constant 0 : index
    %c0_37 = arith.constant 0 : index
    %92 = vector.load %arg8[%c0_35, %c0_36, %c0_37] : memref<1x64x32xbf16, #tpu.memory_space<vmem>>, vector<1x64x32xbf16>
    %93 = vector.shape_cast %92 : vector<1x64x32xbf16> to vector<64x32xbf16>
    %94 = vector.shape_cast %91 : vector<64x32xbf16> to vector<1x64x32xbf16>
    tpu.vector_store %arg8[%c0_35, %c0_36, %c0_37], %94 {strides = array<i32>} : memref<1x64x32xbf16, #tpu.memory_space<vmem>>, vector<1x64x32xbf16>,
    return
  }
  func.func @transform_0(%arg0: i32) -> (i32, i32, i32) {
    %c0_i32 = arith.constant 0 : i32
    %c0_i32_0 = arith.constant 0 : i32
    %c0_i32_1 = arith.constant 0 : i32
    return %arg0, %c0_i32, %c0_i32_0 : i32, i32, i32
  }
  func.func @transform_1(%arg0: i32) -> (i32, i32, i32) {
    %c0_i32 = arith.constant 0 : i32
    %c0_i32_0 = arith.constant 0 : i32
    %c0_i32_1 = arith.constant 0 : i32
    return %arg0, %c0_i32, %c0_i32_0 : i32, i32, i32
  }
  func.func @transform_2(%arg0: i32) -> (i32, i32) {
    %c0_i32 = arith.constant 0 : i32
    %c0_i32_0 = arith.constant 0 : i32
    %c0_i32_1 = arith.constant 0 : i32
    return %c0_i32, %c0_i32_0 : i32, i32
  }
  func.func @transform_3(%arg0: i32) -> (i32, i32) {
    %c0_i32 = arith.constant 0 : i32
    %c0_i32_0 = arith.constant 0 : i32
    %c0_i32_1 = arith.constant 0 : i32
    return %c0_i32, %c0_i32_0 : i32, i32
  }
  func.func @transform_4(%arg0: i32) -> (i32, i32, i32) {
    %c0_i32 = arith.constant 0 : i32
    %c0_i32_0 = arith.constant 0 : i32
    %c0_i32_1 = arith.constant 0 : i32
    return %arg0, %c0_i32, %c0_i32_0 : i32, i32, i32
  }
  func.func @transform_5(%arg0: i32) -> (i32, i32) {
    %c0_i32 = arith.constant 0 : i32
    %c0_i32_0 = arith.constant 0 : i32
    %c0_i32_1 = arith.constant 0 : i32
    return %c0_i32, %c0_i32_0 : i32, i32
  }
  func.func @transform_6(%arg0: i32) -> (i32, i32) {
    %c0_i32 = arith.constant 0 : i32
    %c0_i32_0 = arith.constant 0 : i32
    %c0_i32_1 = arith.constant 0 : i32
    return %c0_i32, %c0_i32_0 : i32, i32
  }
  func.func @transform_7(%arg0: i32) -> (i32, i32, i32) {
    %c0_i32 = arith.constant 0 : i32
    %c0_i32_0 = arith.constant 0 : i32
    %c0_i32_1 = arith.constant 0 : i32
    return %arg0, %c0_i32, %c0_i32_0 : i32, i32, i32
  }
}

module attributes {stable_mosaic.version = 11 : i64} {
  func.func @_dwconv3x3_kernel(%arg0: i32, %arg1: memref<1x10x10x32xf32, #tpu.memory_space<vmem>>, %arg2: memref<9x32xf32, #tpu.memory_space<vmem>>, %arg3: memref<1x8x8x32xbf16, #tpu.memory_space<vmem>>) attributes {dimension_semantics = [#tpu.dimension_semantics<parallel>], iteration_bounds = array<i64: 2>, scalar_prefetch = 0 : i64, scratch_operands = 0 : i64, tpu.core_type = #tpu.core_type<tc>, window_params = [{transform_indices = @transform_0, window_bounds = array<i64: 1, 10, 10, 32>}, {pipeline_mode = #tpu.pipeline_mode<synchronous>, transform_indices = @transform_1, window_bounds = array<i64: 9, 32>}, {transform_indices = @transform_2, window_bounds = array<i64: 1, 8, 8, 32>}]} {
    %c0 = arith.constant 0 : index
    %c0_0 = arith.constant 0 : index
    %c0_1 = arith.constant 0 : index
    %c0_2 = arith.constant 0 : index
    %0 = vector.load %arg1[%c0, %c0_0, %c0_1, %c0_2] : memref<1x10x10x32xf32, #tpu.memory_space<vmem>>, vector<1x10x10x32xf32>
    %1 = vector.shape_cast %0 : vector<1x10x10x32xf32> to vector<10x10x32xf32>
    %c0_3 = arith.constant 0 : index
    %c0_4 = arith.constant 0 : index
    %2 = vector.load %arg2[%c0_3, %c0_4] : memref<9x32xf32, #tpu.memory_space<vmem>>, vector<9x32xf32>
    %cst = arith.constant 0.000000e+00 : f32
    %3 = vector.broadcast %cst : f32 to vector<8x8x32xf32>
    %4 = vector.extract_strided_slice %1 {offsets = [0, 0, 0], sizes = [8, 8, 32], strides = [1, 1, 1]} : vector<10x10x32xf32> to vector<8x8x32xf32>
    %5 = vector.extract_strided_slice %2 {offsets = [0, 0], sizes = [1, 32], strides = [1, 1]} : vector<9x32xf32> to vector<1x32xf32>
    %6 = vector.shape_cast %5 : vector<1x32xf32> to vector<1x1x32xf32>
    %7 = vector.broadcast %6 : vector<1x1x32xf32> to vector<8x8x32xf32>
    %8 = arith.mulf %4, %7 : vector<8x8x32xf32>
    %9 = arith.addf %3, %8 : vector<8x8x32xf32>
    %10 = vector.extract_strided_slice %1 {offsets = [0, 1, 0], sizes = [8, 8, 32], strides = [1, 1, 1]} : vector<10x10x32xf32> to vector<8x8x32xf32>
    %11 = vector.extract_strided_slice %2 {offsets = [1, 0], sizes = [1, 32], strides = [1, 1]} : vector<9x32xf32> to vector<1x32xf32>
    %12 = vector.shape_cast %11 : vector<1x32xf32> to vector<1x1x32xf32>
    %13 = vector.broadcast %12 : vector<1x1x32xf32> to vector<8x8x32xf32>
    %14 = arith.mulf %10, %13 : vector<8x8x32xf32>
    %15 = arith.addf %9, %14 : vector<8x8x32xf32>
    %16 = vector.extract_strided_slice %1 {offsets = [0, 2, 0], sizes = [8, 8, 32], strides = [1, 1, 1]} : vector<10x10x32xf32> to vector<8x8x32xf32>
    %17 = vector.extract_strided_slice %2 {offsets = [2, 0], sizes = [1, 32], strides = [1, 1]} : vector<9x32xf32> to vector<1x32xf32>
    %18 = vector.shape_cast %17 : vector<1x32xf32> to vector<1x1x32xf32>
    %19 = vector.broadcast %18 : vector<1x1x32xf32> to vector<8x8x32xf32>
    %20 = arith.mulf %16, %19 : vector<8x8x32xf32>
    %21 = arith.addf %15, %20 : vector<8x8x32xf32>
    %22 = vector.extract_strided_slice %1 {offsets = [1, 0, 0], sizes = [8, 8, 32], strides = [1, 1, 1]} : vector<10x10x32xf32> to vector<8x8x32xf32>
    %23 = vector.extract_strided_slice %2 {offsets = [3, 0], sizes = [1, 32], strides = [1, 1]} : vector<9x32xf32> to vector<1x32xf32>
    %24 = vector.shape_cast %23 : vector<1x32xf32> to vector<1x1x32xf32>
    %25 = vector.broadcast %24 : vector<1x1x32xf32> to vector<8x8x32xf32>
    %26 = arith.mulf %22, %25 : vector<8x8x32xf32>
    %27 = arith.addf %21, %26 : vector<8x8x32xf32>
    %28 = vector.extract_strided_slice %1 {offsets = [1, 1, 0], sizes = [8, 8, 32], strides = [1, 1, 1]} : vector<10x10x32xf32> to vector<8x8x32xf32>
    %29 = vector.extract_strided_slice %2 {offsets = [4, 0], sizes = [1, 32], strides = [1, 1]} : vector<9x32xf32> to vector<1x32xf32>
    %30 = vector.shape_cast %29 : vector<1x32xf32> to vector<1x1x32xf32>
    %31 = vector.broadcast %30 : vector<1x1x32xf32> to vector<8x8x32xf32>
    %32 = arith.mulf %28, %31 : vector<8x8x32xf32>
    %33 = arith.addf %27, %32 : vector<8x8x32xf32>
    %34 = vector.extract_strided_slice %1 {offsets = [1, 2, 0], sizes = [8, 8, 32], strides = [1, 1, 1]} : vector<10x10x32xf32> to vector<8x8x32xf32>
    %35 = vector.extract_strided_slice %2 {offsets = [5, 0], sizes = [1, 32], strides = [1, 1]} : vector<9x32xf32> to vector<1x32xf32>
    %36 = vector.shape_cast %35 : vector<1x32xf32> to vector<1x1x32xf32>
    %37 = vector.broadcast %36 : vector<1x1x32xf32> to vector<8x8x32xf32>
    %38 = arith.mulf %34, %37 : vector<8x8x32xf32>
    %39 = arith.addf %33, %38 : vector<8x8x32xf32>
    %40 = vector.extract_strided_slice %1 {offsets = [2, 0, 0], sizes = [8, 8, 32], strides = [1, 1, 1]} : vector<10x10x32xf32> to vector<8x8x32xf32>
    %41 = vector.extract_strided_slice %2 {offsets = [6, 0], sizes = [1, 32], strides = [1, 1]} : vector<9x32xf32> to vector<1x32xf32>
    %42 = vector.shape_cast %41 : vector<1x32xf32> to vector<1x1x32xf32>
    %43 = vector.broadcast %42 : vector<1x1x32xf32> to vector<8x8x32xf32>
    %44 = arith.mulf %40, %43 : vector<8x8x32xf32>
    %45 = arith.addf %39, %44 : vector<8x8x32xf32>
    %46 = vector.extract_strided_slice %1 {offsets = [2, 1, 0], sizes = [8, 8, 32], strides = [1, 1, 1]} : vector<10x10x32xf32> to vector<8x8x32xf32>
    %47 = vector.extract_strided_slice %2 {offsets = [7, 0], sizes = [1, 32], strides = [1, 1]} : vector<9x32xf32> to vector<1x32xf32>
    %48 = vector.shape_cast %47 : vector<1x32xf32> to vector<1x1x32xf32>
    %49 = vector.broadcast %48 : vector<1x1x32xf32> to vector<8x8x32xf32>
    %50 = arith.mulf %46, %49 : vector<8x8x32xf32>
    %51 = arith.addf %45, %50 : vector<8x8x32xf32>
    %52 = vector.extract_strided_slice %1 {offsets = [2, 2, 0], sizes = [8, 8, 32], strides = [1, 1, 1]} : vector<10x10x32xf32> to vector<8x8x32xf32>
    %53 = vector.extract_strided_slice %2 {offsets = [8, 0], sizes = [1, 32], strides = [1, 1]} : vector<9x32xf32> to vector<1x32xf32>
    %54 = vector.shape_cast %53 : vector<1x32xf32> to vector<1x1x32xf32>
    %55 = vector.broadcast %54 : vector<1x1x32xf32> to vector<8x8x32xf32>
    %56 = arith.mulf %52, %55 : vector<8x8x32xf32>
    %57 = arith.addf %51, %56 : vector<8x8x32xf32>
    %cst_5 = arith.constant 0.000000e+00 : f32
    %58 = vector.broadcast %cst_5 : f32 to vector<8x8x32xf32>
    %59 = arith.maximumf %57, %58 : vector<8x8x32xf32>
    %60 = arith.truncf %59 : vector<8x8x32xf32> to vector<8x8x32xbf16>
    %c0_6 = arith.constant 0 : index
    %c0_7 = arith.constant 0 : index
    %c0_8 = arith.constant 0 : index
    %c0_9 = arith.constant 0 : index
    %61 = vector.load %arg3[%c0_6, %c0_7, %c0_8, %c0_9] : memref<1x8x8x32xbf16, #tpu.memory_space<vmem>>, vector<1x8x8x32xbf16>
    %62 = vector.shape_cast %61 : vector<1x8x8x32xbf16> to vector<8x8x32xbf16>
    %63 = vector.shape_cast %60 : vector<8x8x32xbf16> to vector<1x8x8x32xbf16>
    tpu.vector_store %arg3[%c0_6, %c0_7, %c0_8, %c0_9], %63 {strides = array<i32>} : memref<1x8x8x32xbf16, #tpu.memory_space<vmem>>, vector<1x8x8x32xbf16>,
    return
  }
  func.func @transform_0(%arg0: i32) -> (i32, i32, i32, i32) {
    %c0_i32 = arith.constant 0 : i32
    %c0_i32_0 = arith.constant 0 : i32
    %c0_i32_1 = arith.constant 0 : i32
    %c0_i32_2 = arith.constant 0 : i32
    return %arg0, %c0_i32, %c0_i32_0, %c0_i32_1 : i32, i32, i32, i32
  }
  func.func @transform_1(%arg0: i32) -> (i32, i32) {
    %c0_i32 = arith.constant 0 : i32
    %c0_i32_0 = arith.constant 0 : i32
    %c0_i32_1 = arith.constant 0 : i32
    return %c0_i32, %c0_i32_0 : i32, i32
  }
  func.func @transform_2(%arg0: i32) -> (i32, i32, i32, i32) {
    %c0_i32 = arith.constant 0 : i32
    %c0_i32_0 = arith.constant 0 : i32
    %c0_i32_1 = arith.constant 0 : i32
    %c0_i32_2 = arith.constant 0 : i32
    return %arg0, %c0_i32, %c0_i32_0, %c0_i32_1 : i32, i32, i32, i32
  }
}

module attributes {stable_mosaic.version = 11 : i64} {
  func.func @_proj_res_kernel(%arg0: i32, %arg1: memref<128x32xbf16, #tpu.memory_space<vmem>>, %arg2: memref<128x32xbf16, #tpu.memory_space<vmem>>, %arg3: memref<32x64xbf16, #tpu.memory_space<vmem>>, %arg4: memref<32x64xbf16, #tpu.memory_space<vmem>>, %arg5: memref<128x32xf32, #tpu.memory_space<vmem>>, %arg6: memref<128x32xf32, #tpu.memory_space<vmem>>) attributes {dimension_semantics = [#tpu.dimension_semantics<parallel>], iteration_bounds = array<i64: 1>, scalar_prefetch = 0 : i64, scratch_operands = 0 : i64, tpu.core_type = #tpu.core_type<tc>, window_params = [{transform_indices = @transform_0, window_bounds = array<i64: 128, 32>}, {transform_indices = @transform_1, window_bounds = array<i64: 128, 32>}, {pipeline_mode = #tpu.pipeline_mode<synchronous>, transform_indices = @transform_2, window_bounds = array<i64: 32, 64>}, {pipeline_mode = #tpu.pipeline_mode<synchronous>, transform_indices = @transform_3, window_bounds = array<i64: 32, 64>}, {transform_indices = @transform_4, window_bounds = array<i64: 128, 32>}, {transform_indices = @transform_5, window_bounds = array<i64: 128, 32>}]} {
    %c0 = arith.constant 0 : index
    %c0_0 = arith.constant 0 : index
    %0 = vector.load %arg1[%c0, %c0_0] : memref<128x32xbf16, #tpu.memory_space<vmem>>, vector<128x32xbf16>
    %c0_1 = arith.constant 0 : index
    %c0_2 = arith.constant 0 : index
    %1 = vector.load %arg3[%c0_1, %c0_2] : memref<32x64xbf16, #tpu.memory_space<vmem>>, vector<32x64xbf16>
    %cst = arith.constant dense<0.000000e+00> : vector<128x64xf32>
    %2 = tpu.matmul %0, %1, %cst {dimension_numbers = #tpu.dot_dimension_numbers<[1], [0], [0], [1], [0, 0, 1, 1], [], []>} : vector<128x32xbf16>, vector<32x64xbf16>, vector<128x64xf32> -> vector<128x64xf32>
    %c0_3 = arith.constant 0 : index
    %c0_4 = arith.constant 0 : index
    %3 = vector.load %arg2[%c0_3, %c0_4] : memref<128x32xbf16, #tpu.memory_space<vmem>>, vector<128x32xbf16>
    %c0_5 = arith.constant 0 : index
    %c0_6 = arith.constant 0 : index
    %4 = vector.load %arg4[%c0_5, %c0_6] : memref<32x64xbf16, #tpu.memory_space<vmem>>, vector<32x64xbf16>
    %cst_7 = arith.constant dense<0.000000e+00> : vector<128x64xf32>
    %5 = tpu.matmul %3, %4, %cst_7 {dimension_numbers = #tpu.dot_dimension_numbers<[1], [0], [0], [1], [0, 0, 1, 1], [], []>} : vector<128x32xbf16>, vector<32x64xbf16>, vector<128x64xf32> -> vector<128x64xf32>
    %6 = arith.addf %2, %5 : vector<128x64xf32>
    %7 = vector.extract_strided_slice %6 {offsets = [0, 0], sizes = [128, 32], strides = [1, 1]} : vector<128x64xf32> to vector<128x32xf32>
    %c0_8 = arith.constant 0 : index
    %c0_9 = arith.constant 0 : index
    %8 = vector.load %arg5[%c0_8, %c0_9] : memref<128x32xf32, #tpu.memory_space<vmem>>, vector<128x32xf32>
    tpu.vector_store %arg5[%c0_8, %c0_9], %7 {strides = array<i32>} : memref<128x32xf32, #tpu.memory_space<vmem>>, vector<128x32xf32>,
    %9 = vector.extract_strided_slice %6 {offsets = [0, 32], sizes = [128, 32], strides = [1, 1]} : vector<128x64xf32> to vector<128x32xf32>
    %c0_10 = arith.constant 0 : index
    %c0_11 = arith.constant 0 : index
    %10 = vector.load %arg6[%c0_10, %c0_11] : memref<128x32xf32, #tpu.memory_space<vmem>>, vector<128x32xf32>
    tpu.vector_store %arg6[%c0_10, %c0_11], %9 {strides = array<i32>} : memref<128x32xf32, #tpu.memory_space<vmem>>, vector<128x32xf32>,
    return
  }
  func.func @transform_0(%arg0: i32) -> (i32, i32) {
    %c0_i32 = arith.constant 0 : i32
    %c0_i32_0 = arith.constant 0 : i32
    return %arg0, %c0_i32 : i32, i32
  }
  func.func @transform_1(%arg0: i32) -> (i32, i32) {
    %c0_i32 = arith.constant 0 : i32
    %c0_i32_0 = arith.constant 0 : i32
    return %arg0, %c0_i32 : i32, i32
  }
  func.func @transform_2(%arg0: i32) -> (i32, i32) {
    %c0_i32 = arith.constant 0 : i32
    %c0_i32_0 = arith.constant 0 : i32
    %c0_i32_1 = arith.constant 0 : i32
    return %c0_i32, %c0_i32_0 : i32, i32
  }
  func.func @transform_3(%arg0: i32) -> (i32, i32) {
    %c0_i32 = arith.constant 0 : i32
    %c0_i32_0 = arith.constant 0 : i32
    %c0_i32_1 = arith.constant 0 : i32
    return %c0_i32, %c0_i32_0 : i32, i32
  }
  func.func @transform_4(%arg0: i32) -> (i32, i32) {
    %c0_i32 = arith.constant 0 : i32
    %c0_i32_0 = arith.constant 0 : i32
    return %arg0, %c0_i32 : i32, i32
  }
  func.func @transform_5(%arg0: i32) -> (i32, i32) {
    %c0_i32 = arith.constant 0 : i32
    %c0_i32_0 = arith.constant 0 : i32
    return %arg0, %c0_i32 : i32, i32
  }
}

module attributes {stable_mosaic.version = 11 : i64} {
  func.func @_res_final_kernel(%arg0: i32, %arg1: memref<128x32xbf16, #tpu.memory_space<vmem>>, %arg2: memref<32x32xbf16, #tpu.memory_space<vmem>>, %arg3: memref<128x32xf32, #tpu.memory_space<vmem>>, %arg4: memref<1x32xf32, #tpu.memory_space<vmem>>, %arg5: memref<1x32xf32, #tpu.memory_space<vmem>>, %arg6: memref<1x32xf32, #tpu.memory_space<vmem>>, %arg7: memref<1x32xf32, #tpu.memory_space<vmem>>, %arg8: memref<128x32xf32, #tpu.memory_space<vmem>>) attributes {dimension_semantics = [#tpu.dimension_semantics<parallel>], iteration_bounds = array<i64: 1>, scalar_prefetch = 0 : i64, scratch_operands = 0 : i64, tpu.core_type = #tpu.core_type<tc>, window_params = [{transform_indices = @transform_0, window_bounds = array<i64: 128, 32>}, {pipeline_mode = #tpu.pipeline_mode<synchronous>, transform_indices = @transform_1, window_bounds = array<i64: 32, 32>}, {transform_indices = @transform_2, window_bounds = array<i64: 128, 32>}, {pipeline_mode = #tpu.pipeline_mode<synchronous>, transform_indices = @transform_3, window_bounds = array<i64: 1, 32>}, {pipeline_mode = #tpu.pipeline_mode<synchronous>, transform_indices = @transform_4, window_bounds = array<i64: 1, 32>}, {pipeline_mode = #tpu.pipeline_mode<synchronous>, transform_indices = @transform_5, window_bounds = array<i64: 1, 32>}, {pipeline_mode = #tpu.pipeline_mode<synchronous>, transform_indices = @transform_6, window_bounds = array<i64: 1, 32>}, {transform_indices = @transform_7, window_bounds = array<i64: 128, 32>}]} {
    %c0 = arith.constant 0 : index
    %c0_0 = arith.constant 0 : index
    %0 = vector.load %arg1[%c0, %c0_0] : memref<128x32xbf16, #tpu.memory_space<vmem>>, vector<128x32xbf16>
    %c0_1 = arith.constant 0 : index
    %c0_2 = arith.constant 0 : index
    %1 = vector.load %arg2[%c0_1, %c0_2] : memref<32x32xbf16, #tpu.memory_space<vmem>>, vector<32x32xbf16>
    %cst = arith.constant dense<0.000000e+00> : vector<128x32xf32>
    %2 = tpu.matmul %0, %1, %cst {dimension_numbers = #tpu.dot_dimension_numbers<[1], [0], [0], [1], [0, 0, 1, 1], [], []>} : vector<128x32xbf16>, vector<32x32xbf16>, vector<128x32xf32> -> vector<128x32xf32>
    %c0_3 = arith.constant 0 : index
    %c0_4 = arith.constant 0 : index
    %3 = vector.load %arg3[%c0_3, %c0_4] : memref<128x32xf32, #tpu.memory_space<vmem>>, vector<128x32xf32>
    %c0_5 = arith.constant 0 : index
    %c0_6 = arith.constant 0 : index
    %4 = vector.load %arg4[%c0_5, %c0_6] : memref<1x32xf32, #tpu.memory_space<vmem>>, vector<1x32xf32>
    %5 = vector.broadcast %4 : vector<1x32xf32> to vector<128x32xf32>
    %6 = arith.mulf %2, %5 : vector<128x32xf32>
    %7 = arith.addf %3, %6 : vector<128x32xf32>
    %c0_7 = arith.constant 0 : index
    %c0_8 = arith.constant 0 : index
    %8 = vector.load %arg5[%c0_7, %c0_8] : memref<1x32xf32, #tpu.memory_space<vmem>>, vector<1x32xf32>
    %9 = vector.broadcast %8 : vector<1x32xf32> to vector<128x32xf32>
    %10 = arith.addf %7, %9 : vector<128x32xf32>
    %c0_9 = arith.constant 0 : index
    %c0_10 = arith.constant 0 : index
    %11 = vector.load %arg6[%c0_9, %c0_10] : memref<1x32xf32, #tpu.memory_space<vmem>>, vector<1x32xf32>
    %12 = vector.broadcast %11 : vector<1x32xf32> to vector<128x32xf32>
    %13 = arith.mulf %10, %12 : vector<128x32xf32>
    %c0_11 = arith.constant 0 : index
    %c0_12 = arith.constant 0 : index
    %14 = vector.load %arg7[%c0_11, %c0_12] : memref<1x32xf32, #tpu.memory_space<vmem>>, vector<1x32xf32>
    %15 = vector.broadcast %14 : vector<1x32xf32> to vector<128x32xf32>
    %16 = arith.addf %13, %15 : vector<128x32xf32>
    %c0_13 = arith.constant 0 : index
    %c0_14 = arith.constant 0 : index
    %17 = vector.load %arg8[%c0_13, %c0_14] : memref<128x32xf32, #tpu.memory_space<vmem>>, vector<128x32xf32>
    tpu.vector_store %arg8[%c0_13, %c0_14], %16 {strides = array<i32>} : memref<128x32xf32, #tpu.memory_space<vmem>>, vector<128x32xf32>,
    return
  }
  func.func @transform_0(%arg0: i32) -> (i32, i32) {
    %c0_i32 = arith.constant 0 : i32
    %c0_i32_0 = arith.constant 0 : i32
    return %arg0, %c0_i32 : i32, i32
  }
  func.func @transform_1(%arg0: i32) -> (i32, i32) {
    %c0_i32 = arith.constant 0 : i32
    %c0_i32_0 = arith.constant 0 : i32
    %c0_i32_1 = arith.constant 0 : i32
    return %c0_i32, %c0_i32_0 : i32, i32
  }
  func.func @transform_2(%arg0: i32) -> (i32, i32) {
    %c0_i32 = arith.constant 0 : i32
    %c0_i32_0 = arith.constant 0 : i32
    return %arg0, %c0_i32 : i32, i32
  }
  func.func @transform_3(%arg0: i32) -> (i32, i32) {
    %c0_i32 = arith.constant 0 : i32
    %c0_i32_0 = arith.constant 0 : i32
    %c0_i32_1 = arith.constant 0 : i32
    return %c0_i32, %c0_i32_0 : i32, i32
  }
  func.func @transform_4(%arg0: i32) -> (i32, i32) {
    %c0_i32 = arith.constant 0 : i32
    %c0_i32_0 = arith.constant 0 : i32
    %c0_i32_1 = arith.constant 0 : i32
    return %c0_i32, %c0_i32_0 : i32, i32
  }
  func.func @transform_5(%arg0: i32) -> (i32, i32) {
    %c0_i32 = arith.constant 0 : i32
    %c0_i32_0 = arith.constant 0 : i32
    %c0_i32_1 = arith.constant 0 : i32
    return %c0_i32, %c0_i32_0 : i32, i32
  }
  func.func @transform_6(%arg0: i32) -> (i32, i32) {
    %c0_i32 = arith.constant 0 : i32
    %c0_i32_0 = arith.constant 0 : i32
    %c0_i32_1 = arith.constant 0 : i32
    return %c0_i32, %c0_i32_0 : i32, i32
  }
  func.func @transform_7(%arg0: i32) -> (i32, i32) {
    %c0_i32 = arith.constant 0 : i32
    %c0_i32_0 = arith.constant 0 : i32
    return %arg0, %c0_i32 : i32, i32
  }
}

</mosaic_0001>

<llo_original>
// kernel: ff_rgb_forward.11
$region0: #{ff_rgb_forward.11}
  #allocation0 [shape = 'u32[]', space=smem, size = 0x4, offset = 0x4, fixed_abs, tag = 'smem constant byte address 0x4 - core index']
  #allocation1 [shape = 'u32[144,128]{1,0:T(1,128)}', space=vmem, size = 0x12000, scoped, tag = 'internal scratch']
  %s0 = inlined_call_operand.vmem [shape: bf16[128,32], index: 0, kind: input, shape index: {}]
  %s1 = inlined_call_operand.vmem [shape: bf16[32,96], index: 1, kind: input, shape index: {}]
  %s2 = inlined_call_operand.vmem [shape: f32[1,96], index: 2, kind: input, shape index: {}]
  %s3 = inlined_call_operand.vmem [shape: bf16[128,96], index: 3, kind: output, shape index: {}]
  %s4 = sld [smem:[#allocation0]]
  $region22: #{ff_rgb_forward.11} parent=0
    _
  %s6 = ssub.s32 1, %s4
  %s7 = scalar_select 0, %s6, %s4
  // Predicated region
  $region2: #{ff_rgb_forward.11} parent=0 // pred_check
    _
  $region3: #{ff_rgb_forward.11} parent=0 // pred_check_branch
    %9 = sbr.rel (0) target = $region5
  $region4: #{ff_rgb_forward.11} parent=0 // pred_region
    _
  $region5: #{ff_rgb_forward.11} parent=0 // pred_fallthru
    _
  // Predicated region
  $region6: #{ff_rgb_forward.11} parent=0 // pred_check
    _
  $region7: #{ff_rgb_forward.11} parent=0 // pred_check_branch
    %11 = sbr.rel (0) target = $region9
  $region8: #{ff_rgb_forward.11} parent=0 // pred_region
    _
  $region9: #{ff_rgb_forward.11} parent=0 // pred_fallthru
    _
  // Predicated region
  $region10: #{ff_rgb_forward.11} parent=0 // pred_check
    _
  $region11: #{ff_rgb_forward.11} parent=0 // pred_check_branch
    %13 = sbr.rel (0) target = $region13
  $region12: #{ff_rgb_forward.11} parent=0 // pred_region
    _
  $region13: #{ff_rgb_forward.11} parent=0 // pred_fallthru
    _
  %v15 = vld [vmem:[%s0] sm:$0xf]
  %v16 = vld [vmem:[%s0 + $0x4] sm:$0xf]
  %v17 = vld [vmem:[%s0 + $0x8] sm:$0xf]
  %v18 = vld [vmem:[%s0 + $0xc] sm:$0xf]
  %v19 = vld [vmem:[%s0 + $0x10] sm:$0xf]
  %v20 = vld [vmem:[%s0 + $0x14] sm:$0xf]
  %v21 = vld [vmem:[%s0 + $0x18] sm:$0xf]
  %v22 = vld [vmem:[%s0 + $0x1c] sm:$0xf]
  %v23 = vld [vmem:[%s0 + $0x20] sm:$0xf]
  %v24 = vld [vmem:[%s0 + $0x24] sm:$0xf]
  %v25 = vld [vmem:[%s0 + $0x28] sm:$0xf]
  %v26 = vld [vmem:[%s0 + $0x2c] sm:$0xf]
  %v27 = vld [vmem:[%s0 + $0x30] sm:$0xf]
  %v28 = vld [vmem:[%s0 + $0x34] sm:$0xf]
  %v29 = vld [vmem:[%s0 + $0x38] sm:$0xf]
  %v30 = vld [vmem:[%s0 + $0x3c] sm:$0xf]
  %v31 = vld [vmem:[%s1] sm:$0xf]
  %v32 = vld [vmem:[%s1 + $0x4] sm:$0xf]
  %v33 = vld [vmem:[%s1 + $0x8] sm:$0xf]
  %v34 = vld [vmem:[%s1 + $0xc] sm:$0xf]
  %v35 = vld [vmem:[%s2] sm:$0x1]
  %v37 = vlaneseq
  %v38 = vshrl.u32 %v37, 7
  %v39 = vsub.s32 0, %v38
  %v40 = vrot.slane %v35, %v39
  %v58 = vunpack.c.l.b16 %v15
  %v59 = vunpack.c.l.b16 %v16
  %v60 = vunpack.c.l.b16 %v17
  %v61 = vunpack.c.l.b16 %v18
  %v62 = vunpack.c.l.b16 %v19
  %v63 = vunpack.c.l.b16 %v20
  %v64 = vunpack.c.l.b16 %v21
  %v65 = vunpack.c.l.b16 %v22
  %v66 = vunpack.c.l.b16 %v23
  %v67 = vunpack.c.l.b16 %v24
  %v68 = vunpack.c.l.b16 %v25
  %v69 = vunpack.c.l.b16 %v26
  %v70 = vunpack.c.l.b16 %v27
  %v71 = vunpack.c.l.b16 %v28
  %v72 = vunpack.c.l.b16 %v29
  %v73 = vunpack.c.l.b16 %v30
  %v74 = vpack.c.b16 %v59, %v58
  %v75 = vpack.c.b16 %v61, %v60
  %v76 = vpack.c.b16 %v63, %v62
  %v77 = vpack.c.b16 %v65, %v64
  %v78 = vpack.c.b16 %v67, %v66
  %v79 = vpack.c.b16 %v69, %v68
  %v80 = vpack.c.b16 %v71, %v70
  %v81 = vpack.c.b16 %v73, %v72
  %v86 = vunpack.c.l.b16 %v31
  %v87 = vunpack.c.l.b16 %v32
  %v88 = vunpack.c.l.b16 %v33
  %v89 = vunpack.c.l.b16 %v34
  %v90 = vpack.c.b16 %v87, %v86
  %v91 = vpack.c.b16 %v89, %v88
  %vm94 = vcmask 261120
  %v96 = vsel %vm94, %v74, 0
  %v99 = vsel %vm94, %v75, 0
  %v102 = vsel %vm94, %v76, 0
  %v105 = vsel %vm94, %v77, 0
  %v108 = vsel %vm94, %v78, 0
  %v111 = vsel %vm94, %v79, 0
  %v114 = vsel %vm94, %v80, 0
  %v117 = vsel %vm94, %v81, 0
  %119 = vmatprep.subr.bf16.mxu0 0
  %120 = vmatpush1.bf16.msra.mxu0 %v90
  %121 = vmatprep.subr.bf16.mxu0 0
  %122 = vmatpush1.bf16.msra.mxu0 %v91
  %123 = vmatprep.subr.bf16.mxu0 0
  %124 = vmatpush1.bf16.msra.mxu0 0
  %125 = vmatprep.subr.bf16.mxu0 0
  %126 = vmatpush1.bf16.msra.mxu0 0
  %127 = vmatprep.subr.bf16.mxu0 0
  %128 = vmatpush1.bf16.msra.mxu0 0
  %129 = vmatprep.subr.bf16.mxu0 0
  %130 = vmatpush1.bf16.msra.mxu0 0
  %131 = vmatprep.subr.bf16.mxu0 0
  %132 = vmatpush1.bf16.msra.mxu0 0
  %133 = vmatprep.subr.bf16.mxu0 0
  %134 = vmatpush1.bf16.msra.mxu0 0
  %135 = vmatprep.subr.bf16.mxu0 0
  %136 = vmatpush1.bf16.msra.mxu0 0
  %137 = vmatprep.subr.bf16.mxu0 0
  %138 = vmatpush1.bf16.msra.mxu0 0
  %139 = vmatprep.subr.bf16.mxu0 0
  %140 = vmatpush1.bf16.msra.mxu0 0
  %141 = vmatprep.subr.bf16.mxu0 0
  %142 = vmatpush1.bf16.msra.mxu0 0
  %143 = vmatprep.subr.bf16.mxu0 0
  %144 = vmatpush1.bf16.msra.mxu0 0
  %145 = vmatprep.subr.bf16.mxu0 0
  %146 = vmatpush1.bf16.msra.mxu0 0
  %147 = vmatprep.subr.bf16.mxu0 0
  %148 = vmatpush1.bf16.msra.mxu0 0
  %149 = vmatprep.subr.bf16.mxu0 0
  %150 = vmatpush1.bf16.msra.mxu0 0
  %151 = vmatprep.mubr.bf16.mxu0 0
  %152 = vmatmul.mubr.bf16.gmra.mrb[0].mxu0 %v96
  %v153 = vpop.f32.mrb[0].mxu0
  %v154 = vadd.f32 %v40, %v153
  %v155 = vpop.f32.mrb[0].mxu0
  %v156 = vpop.f32.mrb[0].mxu0
  %v157 = vadd.f32 %v40, %v156
  %v158 = vpop.f32.mrb[0].mxu0
  %159 = vmatprep.mubr.bf16.mxu0 0
  %160 = vmatmul.mubr.bf16.gmra.mrb[0].mxu0 %v99
  %v161 = vpop.f32.mrb[0].mxu0
  %v162 = vadd.f32 %v40, %v161
  %v163 = vpop.f32.mrb[0].mxu0
  %v164 = vpop.f32.mrb[0].mxu0
  %v165 = vadd.f32 %v40, %v164
  %v166 = vpop.f32.mrb[0].mxu0
  %167 = vmatprep.mubr.bf16.mxu0 0
  %168 = vmatmul.mubr.bf16.gmra.mrb[0].mxu0 %v102
  %v169 = vpop.f32.mrb[0].mxu0
  %v170 = vadd.f32 %v40, %v169
  %v171 = vpop.f32.mrb[0].mxu0
  %v172 = vpop.f32.mrb[0].mxu0
  %v173 = vadd.f32 %v40, %v172
  %v174 = vpop.f32.mrb[0].mxu0
  %175 = vmatprep.mubr.bf16.mxu0 0
  %176 = vmatmul.mubr.bf16.gmra.mrb[0].mxu0 %v105
  %v177 = vpop.f32.mrb[0].mxu0
  %v178 = vadd.f32 %v40, %v177
  %v179 = vpop.f32.mrb[0].mxu0
  %v180 = vpop.f32.mrb[0].mxu0
  %v181 = vadd.f32 %v40, %v180
  %v182 = vpop.f32.mrb[0].mxu0
  %183 = vmatprep.mubr.bf16.mxu0 0
  %184 = vmatmul.mubr.bf16.gmra.mrb[0].mxu0 %v108
  %v185 = vpop.f32.mrb[0].mxu0
  %v186 = vadd.f32 %v40, %v185
  %v187 = vpop.f32.mrb[0].mxu0
  %v188 = vpop.f32.mrb[0].mxu0
  %v189 = vadd.f32 %v40, %v188
  %v190 = vpop.f32.mrb[0].mxu0
  %191 = vmatprep.mubr.bf16.mxu0 0
  %192 = vmatmul.mubr.bf16.gmra.mrb[0].mxu0 %v111
  %v193 = vpop.f32.mrb[0].mxu0
  %v194 = vadd.f32 %v40, %v193
  %v195 = vpop.f32.mrb[0].mxu0
  %v196 = vpop.f32.mrb[0].mxu0
  %v197 = vadd.f32 %v40, %v196
  %v198 = vpop.f32.mrb[0].mxu0
  %199 = vmatprep.mubr.bf16.mxu0 0
  %200 = vmatmul.mubr.bf16.gmra.mrb[0].mxu0 %v114
  %v201 = vpop.f32.mrb[0].mxu0
  %v202 = vadd.f32 %v40, %v201
  %v203 = vpop.f32.mrb[0].mxu0
  %v204 = vpop.f32.mrb[0].mxu0
  %v205 = vadd.f32 %v40, %v204
  %v206 = vpop.f32.mrb[0].mxu0
  %207 = vmatprep.mubr.bf16.mxu0 0
  %208 = vmatmul.mubr.bf16.gmra.mrb[0].mxu0 %v117
  %v209 = vpop.f32.mrb[0].mxu0
  %v210 = vadd.f32 %v40, %v209
  %v211 = vpop.f32.mrb[0].mxu0
  %v212 = vpop.f32.mrb[0].mxu0
  %v213 = vadd.f32 %v40, %v212
  %v214 = vpop.f32.mrb[0].mxu0
  %215 = vdwg.mxu0
  %v216 = vpack.c.bf16 %v157, %v154
  %v217 = vpack.c.bf16 %v165, %v162
  %v218 = vpack.c.bf16 %v173, %v170
  %v219 = vpack.c.bf16 %v181, %v178
  %v220 = vpack.c.bf16 %v189, %v186
  %v221 = vpack.c.bf16 %v197, %v194
  %v222 = vpack.c.bf16 %v205, %v202
  %v223 = vpack.c.bf16 %v213, %v210
  %v232 = vunpack.c.l.b16 %v216
  %v233 = vunpack.c.h.b16 %v216
  %v234 = vunpack.c.l.b16 %v217
  %v235 = vunpack.c.h.b16 %v217
  %v236 = vunpack.c.l.b16 %v218
  %v237 = vunpack.c.h.b16 %v218
  %v238 = vunpack.c.l.b16 %v219
  %v239 = vunpack.c.h.b16 %v219
  %v240 = vunpack.c.l.b16 %v220
  %v241 = vunpack.c.h.b16 %v220
  %v242 = vunpack.c.l.b16 %v221
  %v243 = vunpack.c.h.b16 %v221
  %v244 = vunpack.c.l.b16 %v222
  %v245 = vunpack.c.h.b16 %v222
  %v246 = vunpack.c.l.b16 %v223
  %v247 = vunpack.c.h.b16 %v223
  %v248 = vpack.c.b16 %v232, %v232
  %v249 = vpack.c.b16 %v233, %v233
  %v250 = vpack.c.b16 %v234, %v234
  %v251 = vpack.c.b16 %v235, %v235
  %v252 = vpack.c.b16 %v236, %v236
  %v253 = vpack.c.b16 %v237, %v237
  %v254 = vpack.c.b16 %v238, %v238
  %v255 = vpack.c.b16 %v239, %v239
  %v256 = vpack.c.b16 %v240, %v240
  %v257 = vpack.c.b16 %v241, %v241
  %v258 = vpack.c.b16 %v242, %v242
  %v259 = vpack.c.b16 %v243, %v243
  %v260 = vpack.c.b16 %v244, %v244
  %v261 = vpack.c.b16 %v245, %v245
  %v262 = vpack.c.b16 %v246, %v246
  %v263 = vpack.c.b16 %v247, %v247
  %vm280 = vcmask 781312
  %281 = vst.msk [vmem:[%s3] sm:$0xf] %vm280, %v248
  %282 = vst.msk [vmem:[%s3 + $0x4] sm:$0xf] %vm280, %v249
  %283 = vst.msk [vmem:[%s3 + $0x8] sm:$0xf] %vm280, %v250
  %284 = vst.msk [vmem:[%s3 + $0xc] sm:$0xf] %vm280, %v251
  %285 = vst.msk [vmem:[%s3 + $0x10] sm:$0xf] %vm280, %v252
  %286 = vst.msk [vmem:[%s3 + $0x14] sm:$0xf] %vm280, %v253
  %287 = vst.msk [vmem:[%s3 + $0x18] sm:$0xf] %vm280, %v254
  %288 = vst.msk [vmem:[%s3 + $0x1c] sm:$0xf] %vm280, %v255
  %289 = vst.msk [vmem:[%s3 + $0x20] sm:$0xf] %vm280, %v256
  %290 = vst.msk [vmem:[%s3 + $0x24] sm:$0xf] %vm280, %v257
  %291 = vst.msk [vmem:[%s3 + $0x28] sm:$0xf] %vm280, %v258
  %292 = vst.msk [vmem:[%s3 + $0x2c] sm:$0xf] %vm280, %v259
  %293 = vst.msk [vmem:[%s3 + $0x30] sm:$0xf] %vm280, %v260
  %294 = vst.msk [vmem:[%s3 + $0x34] sm:$0xf] %vm280, %v261
  %295 = vst.msk [vmem:[%s3 + $0x38] sm:$0xf] %vm280, %v262
  %296 = vst.msk [vmem:[%s3 + $0x3c] sm:$0xf] %vm280, %v263
  // Predicated region
  $region14: #{ff_rgb_forward.11} parent=0 // pred_check
    _
  $region15: #{ff_rgb_forward.11} parent=0 // pred_check_branch
    %298 = sbr.rel (0) target = $region17
  $region16: #{ff_rgb_forward.11} parent=0 // pred_region
    _
  $region17: #{ff_rgb_forward.11} parent=0 // pred_fallthru
    _
  // Predicated region
  $region18: #{ff_rgb_forward.11} parent=0 // pred_check
    _
  $region19: #{ff_rgb_forward.11} parent=0 // pred_check_branch
    %300 = sbr.rel (0) target = $region21
  $region20: #{ff_rgb_forward.11} parent=0 // pred_region
    _
  $region21: #{ff_rgb_forward.11} parent=0 // pred_fallthru
    _

// kernel: ff_rgb_forward.9
$region0: #{ff_rgb_forward.9}
  #allocation0 [shape = 'u32[]', space=smem, size = 0x4, offset = 0x4, fixed_abs, tag = 'smem constant byte address 0x4 - core index']
  #allocation1 [shape = 'u32[144,128]{1,0:T(1,128)}', space=vmem, size = 0x12000, scoped, tag = 'internal scratch']
  %s0 = inlined_call_operand.vmem [shape: f32[2,10,10,32], index: 0, kind: input, shape index: {}]
  %s1 = inlined_call_operand.vmem [shape: f32[9,32], index: 1, kind: input, shape index: {}]
  %s2 = inlined_call_operand.vmem [shape: f32[1,32], index: 2, kind: input, shape index: {}]
  %s3 = inlined_call_operand.vmem [shape: bf16[2,8,8,32], index: 3, kind: output, shape index: {}]
  %s4 = sld [smem:[#allocation0]]
  $region45: #{ff_rgb_forward.9} parent=0
    _
  %s6 = ssub.s32 1, %s4
  %s7 = scalar_select 0, %s6, %s4
  loop: start=0, step=1, limit=4
  $region2: #{ff_rgb_forward.9} parent=0 // loop_pre_header
    _
  $region3: #{ff_rgb_forward.9} parent=0 // loop_header
    %s9 = sphi 0, %s13
    %p10 = scmp.ge.s32.totalorder %s9, 4
    %s19 = sphi 0, %s21
    %s22 = sphi 0, %s19
    %s23 = sphi 0, %s22
    %s39 = sphi 0, %s23
    %s43 = sphi 0, %s43
    %s45 = sphi 0, %s43
    %s46 = sphi 0, %s45
    %s60 = sphi 0, %s46
    %s64 = sphi 0, %s64
    %s66 = sphi 0, %s64
    %s67 = sphi 0, %s66
    %s81 = sphi 0, %s67
    %s87 = sphi 0, %s89
    %s90 = sphi 0, %s87
    %s91 = sphi 0, %s90
    %s107 = sphi 0, %s91
  $region4: #{ff_rgb_forward.9} parent=0 // loop_header_branch
    %12 = sbr.rel (%p10) target = $region8
  $region5: #{ff_rgb_forward.9} parent=0 // loop_body
    %s14 = ssub.s32 %s9, 1
    %s15 = ssub.s32 %s9, 2
    %s16 = sadd.s32 %s9, 1
    %s17 = ssub.s32 %s9, %s16
    %p18 = scmp.eq.s32.totalorder %s17, 0
    %s20 = sadd.s32 %s19, 1
    %s21 = scalar_select %p18, %s19, %s20
    %p24 = pneg %p18
    %p25 = scmp.eq.s32.totalorder %s9, 1
    %p26 = por %p24, %p25
    %p27 = scmp.ne.s32.totalorder %s19, %s22
    %p28 = scmp.eq.s32.totalorder %s9, 0
    %p29 = por %p27, %p28
    %p30 = scmp.ne.s32.totalorder %s19, %s22
    %p31 = scmp.eq.s32.totalorder %s14, 1
    %p32 = por %p30, %p31
    %p33 = scmp.ne.s32.totalorder %s22, %s23
    %p34 = scmp.eq.s32.totalorder %s14, 0
    %p35 = por %p33, %p34
    %p36 = scmp.ne.s32.totalorder %s22, %s23
    %p37 = scmp.eq.s32.totalorder %s15, 1
    %p38 = por %p36, %p37
    %p40 = scmp.ne.s32.totalorder %s23, %s39
    %p41 = scmp.eq.s32.totalorder %s15, 0
    %p42 = por %p40, %p41
    %s44 = sadd.s32 %s43, 1
    %p47 = scmp.eq.s32.totalorder %s9, 1
    %p48 = scmp.ne.s32.totalorder %s43, %s45
    %p49 = scmp.eq.s32.totalorder %s9, 0
    %p50 = por %p48, %p49
    %p51 = scmp.ne.s32.totalorder %s43, %s45
    %p52 = scmp.eq.s32.totalorder %s14, 1
    %p53 = por %p51, %p52
    %p54 = scmp.ne.s32.totalorder %s45, %s46
    %p55 = scmp.eq.s32.totalorder %s14, 0
    %p56 = por %p54, %p55
    %p57 = scmp.ne.s32.totalorder %s45, %s46
    %p58 = scmp.eq.s32.totalorder %s15, 1
    %p59 = por %p57, %p58
    %p61 = scmp.ne.s32.totalorder %s46, %s60
    %p62 = scmp.eq.s32.totalorder %s15, 0
    %p63 = por %p61, %p62
    %s65 = sadd.s32 %s64, 1
    %p68 = scmp.eq.s32.totalorder %s9, 1
    %p69 = scmp.ne.s32.totalorder %s64, %s66
    %p70 = scmp.eq.s32.totalorder %s9, 0
    %p71 = por %p69, %p70
    %p72 = scmp.ne.s32.totalorder %s64, %s66
    %p73 = scmp.eq.s32.totalorder %s14, 1
    %p74 = por %p72, %p73
    %p75 = scmp.ne.s32.totalorder %s66, %s67
    %p76 = scmp.eq.s32.totalorder %s14, 0
    %p77 = por %p75, %p76
    %p78 = scmp.ne.s32.totalorder %s66, %s67
    %p79 = scmp.eq.s32.totalorder %s15, 1
    %p80 = por %p78, %p79
    %p82 = scmp.ne.s32.totalorder %s67, %s81
    %p83 = scmp.eq.s32.totalorder %s15, 0
    %p84 = por %p82, %p83
    %s85 = ssub.s32 %s9, %s16
    %p86 = scmp.eq.s32.totalorder %s85, 0
    %s88 = sadd.s32 %s87, 1
    %s89 = scalar_select %p86, %s87, %s88
    %p92 = pneg %p86
    %p93 = scmp.eq.s32.totalorder %s9, 1
    %p94 = por %p92, %p93
    %p95 = scmp.ne.s32.totalorder %s87, %s90
    %p96 = scmp.eq.s32.totalorder %s9, 0
    %p97 = por %p95, %p96
    %p98 = scmp.ne.s32.totalorder %s87, %s90
    %p99 = scmp.eq.s32.totalorder %s14, 1
    %p100 = por %p98, %p99
    %p101 = scmp.ne.s32.totalorder %s90, %s91
    %p102 = scmp.eq.s32.totalorder %s14, 0
    %p103 = por %p101, %p102
    %p104 = scmp.ne.s32.totalorder %s90, %s91
    %p105 = scmp.eq.s32.totalorder %s15, 1
    %p106 = por %p104, %p105
    %p108 = scmp.ne.s32.totalorder %s91, %s107
    %p109 = scmp.eq.s32.totalorder %s15, 0
    %p110 = por %p108, %p109
    %p111 = scmp.le.s32.totalorder 1, %s9
    %p112 = scmp.lt.s32.totalorder %s9, 3
    %p113 = pnand %p111, %p112
    %p114 = pneg %p113
    // Predicated region
    $region9: #{ff_rgb_forward.9} parent=5 // pred_check
      _
    $region10: #{ff_rgb_forward.9} parent=5 // pred_check_branch
      %116 = sbr.rel (%p113) target = $region12
    $region11: #{ff_rgb_forward.9} parent=5 // pred_region
      %s117 = ssub.s32 %s9, 1
      // Predicated region
      $region13: #{ff_rgb_forward.9} parent=11 // pred_check
        %p118 = pneg %p56
      $region14: #{ff_rgb_forward.9} parent=11 // pred_check_branch
        %120 = sbr.rel (%p118) target = $region16
      $region15: #{ff_rgb_forward.9} parent=11 // pred_region
        _
      $region16: #{ff_rgb_forward.9} parent=11 // pred_fallthru
        _
      // Predicated region
      $region17: #{ff_rgb_forward.9} parent=11 // pred_check
        %p121 = pneg %p77
      $region18: #{ff_rgb_forward.9} parent=11 // pred_check_branch
        %123 = sbr.rel (%p121) target = $region20
      $region19: #{ff_rgb_forward.9} parent=11 // pred_region
        _
      $region20: #{ff_rgb_forward.9} parent=11 // pred_fallthru
        _
    $region12: #{ff_rgb_forward.9} parent=5 // pred_fallthru
      _
    %p124 = scmp.lt.s32.totalorder %s9, 2
    // Predicated region
    $region21: #{ff_rgb_forward.9} parent=5 // pred_check
      %p125 = pneg %p124
    $region22: #{ff_rgb_forward.9} parent=5 // pred_check_branch
      %127 = sbr.rel (%p125) target = $region24
    $region23: #{ff_rgb_forward.9} parent=5 // pred_region
      // Predicated region
      $region25: #{ff_rgb_forward.9} parent=23 // pred_check
        %p128 = pneg %p29
      $region26: #{ff_rgb_forward.9} parent=23 // pred_check_branch
        %130 = sbr.rel (%p128) target = $region28
      $region27: #{ff_rgb_forward.9} parent=23 // pred_region
        %p131 = scmp.lt.s32.totalorder %s9, 1
        %s132 = scalar_select %p131, %s9, 1
        %s133 = smul.addr %s132, 20
        %s134 = smul.addr %s133, 8
        %s135 = scalar_lea.vmem %s0, %s134
      $region28: #{ff_rgb_forward.9} parent=23 // pred_fallthru
        _
    $region24: #{ff_rgb_forward.9} parent=5 // pred_fallthru
      _
    %p136 = scmp.le.s32.totalorder 1, %s9
    %p137 = scmp.lt.s32.totalorder %s9, 3
    %p138 = pnand %p136, %p137
    %p139 = pneg %p138
    // Predicated region
    $region29: #{ff_rgb_forward.9} parent=5 // pred_check
      _
    $region30: #{ff_rgb_forward.9} parent=5 // pred_check_branch
      %141 = sbr.rel (%p138) target = $region32
    $region31: #{ff_rgb_forward.9} parent=5 // pred_region
      %s142 = ssub.s32 %s9, 1
      %p143 = scmp.lt.s32.totalorder %s14, 1
      %s144 = scalar_select %p143, %s14, 1
      %s145 = smul.addr %s144, 20
      %s146 = smul.addr %s145, 8
      %s147 = scalar_lea.vmem %s0, %s146
      %p148 = pneg %p35
      %p149 = pneg %p32
      %p150 = pneg %p56
      %p151 = pneg %p53
      %p152 = pneg %p77
      %p153 = pneg %p74
      %p154 = pneg %p103
      %p155 = pneg %p100
      %p156 = scmp.lt.s32.totalorder %s14, 1
      %s157 = scalar_select %p156, %s14, 1
      %s158 = smul.addr %s157, 8
      %s159 = smul.addr %s158, 4
      %s160 = scalar_lea.vmem %s3, %s159
      %p161 = scmp.lt.s32.totalorder %s14, 1
      %s162 = scalar_select %p161, %s14, 1
      %s163 = smul.addr %s162, 20
      %s164 = smul.addr %s163, 8
      %s165 = scalar_lea.vmem %s0, %s164
      %p166 = scmp.lt.s32.totalorder %s14, 1
      %s167 = scalar_select %p166, %s14, 1
      %s168 = smul.addr %s167, 8
      %s169 = smul.addr %s168, 4
      %s170 = scalar_lea.vmem %s3, %s169
      %v171 = vld [vmem:[%s165] sm:$0xff]
      %v172 = vld [vmem:[%s165 + $0x8] sm:$0x3]
      %v173 = vld [vmem:[%s165 + $0x10] sm:$0xff]
      %v174 = vld [vmem:[%s165 + $0x18] sm:$0x3]
      %v175 = vld [vmem:[%s165 + $0x20] sm:$0xff]
      %v176 = vld [vmem:[%s165 + $0x28] sm:$0x3]
      %v177 = vld [vmem:[%s165 + $0x30] sm:$0xff]
      %v178 = vld [vmem:[%s165 + $0x38] sm:$0x3]
      %v179 = vld [vmem:[%s165 + $0x40] sm:$0xff]
      %v180 = vld [vmem:[%s165 + $0x48] sm:$0x3]
      %v181 = vld [vmem:[%s165 + $0x50] sm:$0xff]
      %v182 = vld [vmem:[%s165 + $0x58] sm:$0x3]
      %v183 = vld [vmem:[%s165 + $0x60] sm:$0xff]
      %v184 = vld [vmem:[%s165 + $0x68] sm:$0x3]
      %v185 = vld [vmem:[%s165 + $0x70] sm:$0xff]
      %v186 = vld [vmem:[%s165 + $0x78] sm:$0x3]
      %v187 = vld [vmem:[%s165 + $0x80] sm:$0xff]
      %v188 = vld [vmem:[%s165 + $0x88] sm:$0x3]
      %v189 = vld [vmem:[%s165 + $0x90] sm:$0xff]
      %v190 = vld [vmem:[%s165 + $0x98] sm:$0x3]
      %v191 = vld [vmem:[%s1] sm:$0xff]
      %v192 = vld [vmem:[%s1 + $0x8] sm:$0x1]
      %v193 = vld [vmem:[%s2] sm:$0x1]
      %v195 = vlaneseq
      %v196 = vshrl.u32 %v195, 7
      %v197 = vsub.s32 0, %v196
      %v198 = vrot.slane %v193, %v197
      %v200 = vadd.f32 %v198, 0.0
      %v201 = vlaneseq
      %v202 = vshrl.u32 %v201, 7
      %v203 = vsub.s32 0, %v202
      %v204 = vrot.slane %v191, %v203
      %v205 = vmul.f32 %v171, %v204
      %v206 = vmul.f32 %v173, %v204
      %v207 = vmul.f32 %v175, %v204
      %v208 = vmul.f32 %v177, %v204
      %v209 = vmul.f32 %v179, %v204
      %v210 = vmul.f32 %v181, %v204
      %v211 = vmul.f32 %v183, %v204
      %v212 = vmul.f32 %v185, %v204
      %v213 = vadd.f32 %v200, %v205
      %v214 = vadd.f32 %v200, %v206
      %v215 = vadd.f32 %v200, %v207
      %v216 = vadd.f32 %v200, %v208
      %v217 = vadd.f32 %v200, %v209
      %v218 = vadd.f32 %v200, %v210
      %v219 = vadd.f32 %v200, %v211
      %v220 = vadd.f32 %v200, %v212
      %v221 = vlaneseq
      %v222 = vshrl.u32 %v221, 7
      %v223 = vsub.s32 1, %v222
      %v224 = vrot.slane %v191, %v223
      %v225 = vmul.f32 %v171, %v224
      %v226 = vmul.f32 %v172, %v224
      %v227 = vmul.f32 %v173, %v224
      %v228 = vmul.f32 %v174, %v224
      %v229 = vmul.f32 %v175, %v224
      %v230 = vmul.f32 %v176, %v224
      %v231 = vmul.f32 %v177, %v224
      %v232 = vmul.f32 %v178, %v224
      %v233 = vmul.f32 %v179, %v224
      %v234 = vmul.f32 %v180, %v224
      %v235 = vmul.f32 %v181, %v224
      %v236 = vmul.f32 %v182, %v224
      %v237 = vmul.f32 %v183, %v224
      %v238 = vmul.f32 %v184, %v224
      %v239 = vmul.f32 %v185, %v224
      %v240 = vmul.f32 %v186, %v224
      %vm257 = vcmask 1046528
      %v258 = vrot.slane %v225, 1
      %v259 = vrot.slane %v226, 1
      %v260 = vsel %vm257, %v258, %v259
      %v261 = vrot.slane %v227, 1
      %v262 = vrot.slane %v228, 1
      %v263 = vsel %vm257, %v261, %v262
      %v264 = vrot.slane %v229, 1
      %v265 = vrot.slane %v230, 1
      %v266 = vsel %vm257, %v264, %v265
      %v267 = vrot.slane %v231, 1
      %v268 = vrot.slane %v232, 1
      %v269 = vsel %vm257, %v267, %v268
      %v270 = vrot.slane %v233, 1
      %v271 = vrot.slane %v234, 1
      %v272 = vsel %vm257, %v270, %v271
      %v273 = vrot.slane %v235, 1
      %v274 = vrot.slane %v236, 1
      %v275 = vsel %vm257, %v273, %v274
      %v276 = vrot.slane %v237, 1
      %v277 = vrot.slane %v238, 1
      %v278 = vsel %vm257, %v276, %v277
      %v279 = vrot.slane %v239, 1
      %v280 = vrot.slane %v240, 1
      %v281 = vsel %vm257, %v279, %v280
      %v290 = vadd.f32 %v213, %v260
      %v291 = vadd.f32 %v214, %v263
      %v292 = vadd.f32 %v215, %v266
      %v293 = vadd.f32 %v216, %v269
      %v294 = vadd.f32 %v217, %v272
      %v295 = vadd.f32 %v218, %v275
      %v296 = vadd.f32 %v219, %v278
      %v297 = vadd.f32 %v220, %v281
      %v298 = vlaneseq
      %v299 = vshrl.u32 %v298, 7
      %v300 = vsub.s32 2, %v299
      %v301 = vrot.slane %v191, %v300
      %v302 = vmul.f32 %v171, %v301
      %v303 = vmul.f32 %v172, %v301
      %v304 = vmul.f32 %v173, %v301
      %v305 = vmul.f32 %v174, %v301
      %v306 = vmul.f32 %v175, %v301
      %v307 = vmul.f32 %v176, %v301
      %v308 = vmul.f32 %v177, %v301
      %v309 = vmul.f32 %v178, %v301
      %v310 = vmul.f32 %v179, %v301
      %v311 = vmul.f32 %v180, %v301
      %v312 = vmul.f32 %v181, %v301
      %v313 = vmul.f32 %v182, %v301
      %v314 = vmul.f32 %v183, %v301
      %v315 = vmul.f32 %v184, %v301
      %v316 = vmul.f32 %v185, %v301
      %v317 = vmul.f32 %v186, %v301
      %vm334 = vcmask 1045504
      %v335 = vrot.slane %v302, 2
      %v336 = vrot.slane %v303, 2
      %v337 = vsel %vm334, %v335, %v336
      %v338 = vrot.slane %v304, 2
      %v339 = vrot.slane %v305, 2
      %v340 = vsel %vm334, %v338, %v339
      %v341 = vrot.slane %v306, 2
      %v342 = vrot.slane %v307, 2
      %v343 = vsel %vm334, %v341, %v342
      %v344 = vrot.slane %v308, 2
      %v345 = vrot.slane %v309, 2
      %v346 = vsel %vm334, %v344, %v345
      %v347 = vrot.slane %v310, 2
      %v348 = vrot.slane %v311, 2
      %v349 = vsel %vm334, %v347, %v348
      %v350 = vrot.slane %v312, 2
      %v351 = vrot.slane %v313, 2
      %v352 = vsel %vm334, %v350, %v351
      %v353 = vrot.slane %v314, 2
      %v354 = vrot.slane %v315, 2
      %v355 = vsel %vm334, %v353, %v354
      %v356 = vrot.slane %v316, 2
      %v357 = vrot.slane %v317, 2
      %v358 = vsel %vm334, %v356, %v357
      %v367 = vadd.f32 %v290, %v337
      %v368 = vadd.f32 %v291, %v340
      %v369 = vadd.f32 %v292, %v343
      %v370 = vadd.f32 %v293, %v346
      %v371 = vadd.f32 %v294, %v349
      %v372 = vadd.f32 %v295, %v352
      %v373 = vadd.f32 %v296, %v355
      %v374 = vadd.f32 %v297, %v358
      %v375 = vlaneseq
      %v376 = vshrl.u32 %v375, 7
      %v377 = vsub.s32 3, %v376
      %v378 = vrot.slane %v191, %v377
      %v379 = vmul.f32 %v173, %v378
      %v380 = vmul.f32 %v175, %v378
      %v381 = vmul.f32 %v177, %v378
      %v382 = vmul.f32 %v179, %v378
      %v383 = vmul.f32 %v181, %v378
      %v384 = vmul.f32 %v183, %v378
      %v385 = vmul.f32 %v185, %v378
      %v386 = vmul.f32 %v187, %v378
      %v387 = vadd.f32 %v367, %v379
      %v388 = vadd.f32 %v368, %v380
      %v389 = vadd.f32 %v369, %v381
      %v390 = vadd.f32 %v370, %v382
      %v391 = vadd.f32 %v371, %v383
      %v392 = vadd.f32 %v372, %v384
      %v393 = vadd.f32 %v373, %v385
      %v394 = vadd.f32 %v374, %v386
      %v395 = vlaneseq
      %v396 = vshrl.u32 %v395, 7
      %v397 = vsub.s32 4, %v396
      %v398 = vrot.slane %v191, %v397
      %v399 = vmul.f32 %v173, %v398
      %v400 = vmul.f32 %v174, %v398
      %v401 = vmul.f32 %v175, %v398
      %v402 = vmul.f32 %v176, %v398
      %v403 = vmul.f32 %v177, %v398
      %v404 = vmul.f32 %v178, %v398
      %v405 = vmul.f32 %v179, %v398
      %v406 = vmul.f32 %v180, %v398
      %v407 = vmul.f32 %v181, %v398
      %v408 = vmul.f32 %v182, %v398
      %v409 = vmul.f32 %v183, %v398
      %v410 = vmul.f32 %v184, %v398
      %v411 = vmul.f32 %v185, %v398
      %v412 = vmul.f32 %v186, %v398
      %v413 = vmul.f32 %v187, %v398
      %v414 = vmul.f32 %v188, %v398
      %v431 = vrot.slane %v399, 1
      %v432 = vrot.slane %v400, 1
      %v433 = vsel %vm257, %v431, %v432
      %v434 = vrot.slane %v401, 1
      %v435 = vrot.slane %v402, 1
      %v436 = vsel %vm257, %v434, %v435
      %v437 = vrot.slane %v403, 1
      %v438 = vrot.slane %v404, 1
      %v439 = vsel %vm257, %v437, %v438
      %v440 = vrot.slane %v405, 1
      %v441 = vrot.slane %v406, 1
      %v442 = vsel %vm257, %v440, %v441
      %v443 = vrot.slane %v407, 1
      %v444 = vrot.slane %v408, 1
      %v445 = vsel %vm257, %v443, %v444
      %v446 = vrot.slane %v409, 1
      %v447 = vrot.slane %v410, 1
      %v448 = vsel %vm257, %v446, %v447
      %v449 = vrot.slane %v411, 1
      %v450 = vrot.slane %v412, 1
      %v451 = vsel %vm257, %v449, %v450
      %v452 = vrot.slane %v413, 1
      %v453 = vrot.slane %v414, 1
      %v454 = vsel %vm257, %v452, %v453
      %v463 = vadd.f32 %v387, %v433
      %v464 = vadd.f32 %v388, %v436
      %v465 = vadd.f32 %v389, %v439
      %v466 = vadd.f32 %v390, %v442
      %v467 = vadd.f32 %v391, %v445
      %v468 = vadd.f32 %v392, %v448
      %v469 = vadd.f32 %v393, %v451
      %v470 = vadd.f32 %v394, %v454
      %v471 = vlaneseq
      %v472 = vshrl.u32 %v471, 7
      %v473 = vsub.s32 5, %v472
      %v474 = vrot.slane %v191, %v473
      %v475 = vmul.f32 %v173, %v474
      %v476 = vmul.f32 %v174, %v474
      %v477 = vmul.f32 %v175, %v474
      %v478 = vmul.f32 %v176, %v474
      %v479 = vmul.f32 %v177, %v474
      %v480 = vmul.f32 %v178, %v474
      %v481 = vmul.f32 %v179, %v474
      %v482 = vmul.f32 %v180, %v474
      %v483 = vmul.f32 %v181, %v474
      %v484 = vmul.f32 %v182, %v474
      %v485 = vmul.f32 %v183, %v474
      %v486 = vmul.f32 %v184, %v474
      %v487 = vmul.f32 %v185, %v474
      %v488 = vmul.f32 %v186, %v474
      %v489 = vmul.f32 %v187, %v474
      %v490 = vmul.f32 %v188, %v474
      %v507 = vrot.slane %v475, 2
      %v508 = vrot.slane %v476, 2
      %v509 = vsel %vm334, %v507, %v508
      %v510 = vrot.slane %v477, 2
      %v511 = vrot.slane %v478, 2
      %v512 = vsel %vm334, %v510, %v511
      %v513 = vrot.slane %v479, 2
      %v514 = vrot.slane %v480, 2
      %v515 = vsel %vm334, %v513, %v514
      %v516 = vrot.slane %v481, 2
      %v517 = vrot.slane %v482, 2
      %v518 = vsel %vm334, %v516, %v517
      %v519 = vrot.slane %v483, 2
      %v520 = vrot.slane %v484, 2
      %v521 = vsel %vm334, %v519, %v520
      %v522 = vrot.slane %v485, 2
      %v523 = vrot.slane %v486, 2
      %v524 = vsel %vm334, %v522, %v523
      %v525 = vrot.slane %v487, 2
      %v526 = vrot.slane %v488, 2
      %v527 = vsel %vm334, %v525, %v526
      %v528 = vrot.slane %v489, 2
      %v529 = vrot.slane %v490, 2
      %v530 = vsel %vm334, %v528, %v529
      %v539 = vadd.f32 %v463, %v509
      %v540 = vadd.f32 %v464, %v512
      %v541 = vadd.f32 %v465, %v515
      %v542 = vadd.f32 %v466, %v518
      %v543 = vadd.f32 %v467, %v521
      %v544 = vadd.f32 %v468, %v524
      %v545 = vadd.f32 %v469, %v527
      %v546 = vadd.f32 %v470, %v530
      %v547 = vlaneseq
      %v548 = vshrl.u32 %v547, 7
      %v549 = vsub.s32 6, %v548
      %v550 = vrot.slane %v191, %v549
      %v551 = vmul.f32 %v175, %v550
      %v552 = vmul.f32 %v177, %v550
      %v553 = vmul.f32 %v179, %v550
      %v554 = vmul.f32 %v181, %v550
      %v555 = vmul.f32 %v183, %v550
      %v556 = vmul.f32 %v185, %v550
      %v557 = vmul.f32 %v187, %v550
      %v558 = vmul.f32 %v189, %v550
      %v559 = vadd.f32 %v539, %v551
      %v560 = vadd.f32 %v540, %v552
      %v561 = vadd.f32 %v541, %v553
      %v562 = vadd.f32 %v542, %v554
      %v563 = vadd.f32 %v543, %v555
      %v564 = vadd.f32 %v544, %v556
      %v565 = vadd.f32 %v545, %v557
      %v566 = vadd.f32 %v546, %v558
      %v567 = vlaneseq
      %v568 = vshrl.u32 %v567, 7
      %v569 = vsub.s32 7, %v568
      %v570 = vrot.slane %v191, %v569
      %v571 = vmul.f32 %v175, %v570
      %v572 = vmul.f32 %v176, %v570
      %v573 = vmul.f32 %v177, %v570
      %v574 = vmul.f32 %v178, %v570
      %v575 = vmul.f32 %v179, %v570
      %v576 = vmul.f32 %v180, %v570
      %v577 = vmul.f32 %v181, %v570
      %v578 = vmul.f32 %v182, %v570
      %v579 = vmul.f32 %v183, %v570
      %v580 = vmul.f32 %v184, %v570
      %v581 = vmul.f32 %v185, %v570
      %v582 = vmul.f32 %v186, %v570
      %v583 = vmul.f32 %v187, %v570
      %v584 = vmul.f32 %v188, %v570
      %v585 = vmul.f32 %v189, %v570
      %v586 = vmul.f32 %v190, %v570
      %v603 = vrot.slane %v571, 1
      %v604 = vrot.slane %v572, 1
      %v605 = vsel %vm257, %v603, %v604
      %v606 = vrot.slane %v573, 1
      %v607 = vrot.slane %v574, 1
      %v608 = vsel %vm257, %v606, %v607
      %v609 = vrot.slane %v575, 1
      %v610 = vrot.slane %v576, 1
      %v611 = vsel %vm257, %v609, %v610
      %v612 = vrot.slane %v577, 1
      %v613 = vrot.slane %v578, 1
      %v614 = vsel %vm257, %v612, %v613
      %v615 = vrot.slane %v579, 1
      %v616 = vrot.slane %v580, 1
      %v617 = vsel %vm257, %v615, %v616
      %v618 = vrot.slane %v581, 1
      %v619 = vrot.slane %v582, 1
      %v620 = vsel %vm257, %v618, %v619
      %v621 = vrot.slane %v583, 1
      %v622 = vrot.slane %v584, 1
      %v623 = vsel %vm257, %v621, %v622
      %v624 = vrot.slane %v585, 1
      %v625 = vrot.slane %v586, 1
      %v626 = vsel %vm257, %v624, %v625
      %v635 = vadd.f32 %v559, %v605
      %v636 = vadd.f32 %v560, %v608
      %v637 = vadd.f32 %v561, %v611
      %v638 = vadd.f32 %v562, %v614
      %v639 = vadd.f32 %v563, %v617
      %v640 = vadd.f32 %v564, %v620
      %v641 = vadd.f32 %v565, %v623
      %v642 = vadd.f32 %v566, %v626
      %v643 = vlaneseq
      %v644 = vshrl.u32 %v643, 7
      %v645 = vsub.s32 0, %v644
      %v646 = vrot.slane %v192, %v645
      %v647 = vmul.f32 %v175, %v646
      %v648 = vmul.f32 %v176, %v646
      %v649 = vmul.f32 %v177, %v646
      %v650 = vmul.f32 %v178, %v646
      %v651 = vmul.f32 %v179, %v646
      %v652 = vmul.f32 %v180, %v646
      %v653 = vmul.f32 %v181, %v646
      %v654 = vmul.f32 %v182, %v646
      %v655 = vmul.f32 %v183, %v646
      %v656 = vmul.f32 %v184, %v646
      %v657 = vmul.f32 %v185, %v646
      %v658 = vmul.f32 %v186, %v646
      %v659 = vmul.f32 %v187, %v646
      %v660 = vmul.f32 %v188, %v646
      %v661 = vmul.f32 %v189, %v646
      %v662 = vmul.f32 %v190, %v646
      %v679 = vrot.slane %v647, 2
      %v680 = vrot.slane %v648, 2
      %v681 = vsel %vm334, %v679, %v680
      %v682 = vrot.slane %v649, 2
      %v683 = vrot.slane %v650, 2
      %v684 = vsel %vm334, %v682, %v683
      %v685 = vrot.slane %v651, 2
      %v686 = vrot.slane %v652, 2
      %v687 = vsel %vm334, %v685, %v686
      %v688 = vrot.slane %v653, 2
      %v689 = vrot.slane %v654, 2
      %v690 = vsel %vm334, %v688, %v689
      %v691 = vrot.slane %v655, 2
      %v692 = vrot.slane %v656, 2
      %v693 = vsel %vm334, %v691, %v692
      %v694 = vrot.slane %v657, 2
      %v695 = vrot.slane %v658, 2
      %v696 = vsel %vm334, %v694, %v695
      %v697 = vrot.slane %v659, 2
      %v698 = vrot.slane %v660, 2
      %v699 = vsel %vm334, %v697, %v698
      %v700 = vrot.slane %v661, 2
      %v701 = vrot.slane %v662, 2
      %v702 = vsel %vm334, %v700, %v701
      %v711 = vadd.f32 %v635, %v681
      %v712 = vadd.f32 %v636, %v684
      %v713 = vadd.f32 %v637, %v687
      %v714 = vadd.f32 %v638, %v690
      %v715 = vadd.f32 %v639, %v693
      %v716 = vadd.f32 %v640, %v696
      %v717 = vadd.f32 %v641, %v699
      %v718 = vadd.f32 %v642, %v702
      %v735 = vrot.slane %v173, 1
      %v736 = vrot.slane %v174, 1
      %v737 = vsel %vm257, %v735, %v736
      %v738 = vrot.slane %v175, 1
      %v739 = vrot.slane %v176, 1
      %v740 = vsel %vm257, %v738, %v739
      %v741 = vrot.slane %v177, 1
      %v742 = vrot.slane %v178, 1
      %v743 = vsel %vm257, %v741, %v742
      %v744 = vrot.slane %v179, 1
      %v745 = vrot.slane %v180, 1
      %v746 = vsel %vm257, %v744, %v745
      %v747 = vrot.slane %v181, 1
      %v748 = vrot.slane %v182, 1
      %v749 = vsel %vm257, %v747, %v748
      %v750 = vrot.slane %v183, 1
      %v751 = vrot.slane %v184, 1
      %v752 = vsel %vm257, %v750, %v751
      %v753 = vrot.slane %v185, 1
      %v754 = vrot.slane %v186, 1
      %v755 = vsel %vm257, %v753, %v754
      %v756 = vrot.slane %v187, 1
      %v757 = vrot.slane %v188, 1
      %v758 = vsel %vm257, %v756, %v757
      %v767 = vadd.f32 %v711, %v737
      %v768 = vadd.f32 %v712, %v740
      %v769 = vadd.f32 %v713, %v743
      %v770 = vadd.f32 %v714, %v746
      %v771 = vadd.f32 %v715, %v749
      %v772 = vadd.f32 %v716, %v752
      %v773 = vadd.f32 %v717, %v755
      %v774 = vadd.f32 %v718, %v758
      %v775 = vpack.c.bf16 %v767, %v767
      %v776 = vpack.c.bf16 %v768, %v768
      %v777 = vpack.c.bf16 %v769, %v769
      %v778 = vpack.c.bf16 %v770, %v770
      %v779 = vpack.c.bf16 %v771, %v771
      %v780 = vpack.c.bf16 %v772, %v772
      %v781 = vpack.c.bf16 %v773, %v773
      %v782 = vpack.c.bf16 %v774, %v774
      %vm783 = vcmask 257024
      %784 = vst.msk [vmem:[%s170] sm:$0xf] %vm783, %v775
      %785 = vst.msk [vmem:[%s170 + $0x4] sm:$0xf] %vm783, %v776
      %786 = vst.msk [vmem:[%s170 + $0x8] sm:$0xf] %vm783, %v777
      %787 = vst.msk [vmem:[%s170 + $0xc] sm:$0xf] %vm783, %v778
      %788 = vst.msk [vmem:[%s170 + $0x10] sm:$0xf] %vm783, %v779
      %789 = vst.msk [vmem:[%s170 + $0x14] sm:$0xf] %vm783, %v780
      %790 = vst.msk [vmem:[%s170 + $0x18] sm:$0xf] %vm783, %v781
      %791 = vst.msk [vmem:[%s170 + $0x1c] sm:$0xf] %vm783, %v782
      %p792 = scmp.lt.s32.totalorder %s14, 1
      %s793 = scalar_select %p792, %s14, 1
      %s794 = smul.addr %s793, 8
      %s795 = smul.addr %s794, 4
      %s796 = scalar_lea.vmem %s3, %s795
      // Predicated region
      $region33: #{ff_rgb_forward.9} parent=31 // pred_check
        %p797 = pneg %p100
      $region34: #{ff_rgb_forward.9} parent=31 // pred_check_branch
        %799 = sbr.rel (%p797) target = $region36
      $region35: #{ff_rgb_forward.9} parent=31 // pred_region
        _
      $region36: #{ff_rgb_forward.9} parent=31 // pred_fallthru
        _
    $region32: #{ff_rgb_forward.9} parent=5 // pred_fallthru
      _
    %p800 = scmp.le.s32.totalorder 2, %s9
    // Predicated region
    $region37: #{ff_rgb_forward.9} parent=5 // pred_check
      %p801 = pneg %p800
    $region38: #{ff_rgb_forward.9} parent=5 // pred_check_branch
      %803 = sbr.rel (%p801) target = $region40
    $region39: #{ff_rgb_forward.9} parent=5 // pred_region
      %s804 = ssub.s32 %s9, 2
      // Predicated region
      $region41: #{ff_rgb_forward.9} parent=39 // pred_check
        %p805 = pneg %p106
      $region42: #{ff_rgb_forward.9} parent=39 // pred_check_branch
        %807 = sbr.rel (%p805) target = $region44
      $region43: #{ff_rgb_forward.9} parent=39 // pred_region
        %p808 = scmp.lt.s32.totalorder %s15, 1
        %s809 = scalar_select %p808, %s15, 1
        %s810 = smul.addr %s809, 8
        %s811 = smul.addr %s810, 4
        %s812 = scalar_lea.vmem %s3, %s811
      $region44: #{ff_rgb_forward.9} parent=39 // pred_fallthru
        _
    $region40: #{ff_rgb_forward.9} parent=5 // pred_fallthru
      _
  $region6: #{ff_rgb_forward.9} parent=0 // loop_footer
    %s13 = sadd.s32 1, %s9
  $region7: #{ff_rgb_forward.9} parent=0 // loop_footer_branch
    %8 = sbr.rel target = $region3
  $region8: #{ff_rgb_forward.9} parent=0 // loop_exit
    _

// kernel: ff_rgb_forward.12
$region0: #{ff_rgb_forward.12}
  #allocation0 [shape = 'u32[]', space=smem, size = 0x4, offset = 0x4, fixed_abs, tag = 'smem constant byte address 0x4 - core index']
  #allocation1 [shape = 'u32[144,128]{1,0:T(1,128)}', space=vmem, size = 0x12000, scoped, tag = 'internal scratch']
  %s0 = inlined_call_operand.vmem [shape: bf16[128,32], index: 0, kind: input, shape index: {}]
  %s1 = inlined_call_operand.vmem [shape: bf16[32,64], index: 1, kind: input, shape index: {}]
  %s2 = inlined_call_operand.vmem [shape: f32[1,64], index: 2, kind: input, shape index: {}]
  %s3 = inlined_call_operand.vmem [shape: bf16[128,64], index: 3, kind: output, shape index: {}]
  %s4 = sld [smem:[#allocation0]]
  $region22: #{ff_rgb_forward.12} parent=0
    _
  %s6 = ssub.s32 1, %s4
  %s7 = scalar_select 0, %s6, %s4
  // Predicated region
  $region2: #{ff_rgb_forward.12} parent=0 // pred_check
    _
  $region3: #{ff_rgb_forward.12} parent=0 // pred_check_branch
    %9 = sbr.rel (0) target = $region5
  $region4: #{ff_rgb_forward.12} parent=0 // pred_region
    _
  $region5: #{ff_rgb_forward.12} parent=0 // pred_fallthru
    _
  // Predicated region
  $region6: #{ff_rgb_forward.12} parent=0 // pred_check
    _
  $region7: #{ff_rgb_forward.12} parent=0 // pred_check_branch
    %11 = sbr.rel (0) target = $region9
  $region8: #{ff_rgb_forward.12} parent=0 // pred_region
    _
  $region9: #{ff_rgb_forward.12} parent=0 // pred_fallthru
    _
  // Predicated region
  $region10: #{ff_rgb_forward.12} parent=0 // pred_check
    _
  $region11: #{ff_rgb_forward.12} parent=0 // pred_check_branch
    %13 = sbr.rel (0) target = $region13
  $region12: #{ff_rgb_forward.12} parent=0 // pred_region
    _
  $region13: #{ff_rgb_forward.12} parent=0 // pred_fallthru
    _
  %v15 = vld [vmem:[%s0] sm:$0xf]
  %v16 = vld [vmem:[%s0 + $0x4] sm:$0xf]
  %v17 = vld [vmem:[%s0 + $0x8] sm:$0xf]
  %v18 = vld [vmem:[%s0 + $0xc] sm:$0xf]
  %v19 = vld [vmem:[%s0 + $0x10] sm:$0xf]
  %v20 = vld [vmem:[%s0 + $0x14] sm:$0xf]
  %v21 = vld [vmem:[%s0 + $0x18] sm:$0xf]
  %v22 = vld [vmem:[%s0 + $0x1c] sm:$0xf]
  %v23 = vld [vmem:[%s0 + $0x20] sm:$0xf]
  %v24 = vld [vmem:[%s0 + $0x24] sm:$0xf]
  %v25 = vld [vmem:[%s0 + $0x28] sm:$0xf]
  %v26 = vld [vmem:[%s0 + $0x2c] sm:$0xf]
  %v27 = vld [vmem:[%s0 + $0x30] sm:$0xf]
  %v28 = vld [vmem:[%s0 + $0x34] sm:$0xf]
  %v29 = vld [vmem:[%s0 + $0x38] sm:$0xf]
  %v30 = vld [vmem:[%s0 + $0x3c] sm:$0xf]
  %v31 = vld [vmem:[%s1] sm:$0xf]
  %v32 = vld [vmem:[%s1 + $0x4] sm:$0xf]
  %v33 = vld [vmem:[%s1 + $0x8] sm:$0xf]
  %v34 = vld [vmem:[%s1 + $0xc] sm:$0xf]
  %v35 = vld [vmem:[%s2] sm:$0x1]
  %v37 = vlaneseq
  %v38 = vshrl.u32 %v37, 7
  %v39 = vsub.s32 0, %v38
  %v40 = vrot.slane %v35, %v39
  %v58 = vunpack.c.l.b16 %v15
  %v59 = vunpack.c.l.b16 %v16
  %v60 = vunpack.c.l.b16 %v17
  %v61 = vunpack.c.l.b16 %v18
  %v62 = vunpack.c.l.b16 %v19
  %v63 = vunpack.c.l.b16 %v20
  %v64 = vunpack.c.l.b16 %v21
  %v65 = vunpack.c.l.b16 %v22
  %v66 = vunpack.c.l.b16 %v23
  %v67 = vunpack.c.l.b16 %v24
  %v68 = vunpack.c.l.b16 %v25
  %v69 = vunpack.c.l.b16 %v26
  %v70 = vunpack.c.l.b16 %v27
  %v71 = vunpack.c.l.b16 %v28
  %v72 = vunpack.c.l.b16 %v29
  %v73 = vunpack.c.l.b16 %v30
  %v74 = vpack.c.b16 %v59, %v58
  %v75 = vpack.c.b16 %v61, %v60
  %v76 = vpack.c.b16 %v63, %v62
  %v77 = vpack.c.b16 %v65, %v64
  %v78 = vpack.c.b16 %v67, %v66
  %v79 = vpack.c.b16 %v69, %v68
  %v80 = vpack.c.b16 %v71, %v70
  %v81 = vpack.c.b16 %v73, %v72
  %v86 = vunpack.c.l.b16 %v31
  %v87 = vunpack.c.l.b16 %v32
  %v88 = vunpack.c.l.b16 %v33
  %v89 = vunpack.c.l.b16 %v34
  %v90 = vpack.c.b16 %v87, %v86
  %v91 = vpack.c.b16 %v89, %v88
  %vm94 = vcmask 261120
  %v96 = vsel %vm94, %v74, 0
  %v99 = vsel %vm94, %v75, 0
  %v102 = vsel %vm94, %v76, 0
  %v105 = vsel %vm94, %v77, 0
  %v108 = vsel %vm94, %v78, 0
  %v111 = vsel %vm94, %v79, 0
  %v114 = vsel %vm94, %v80, 0
  %v117 = vsel %vm94, %v81, 0
  %119 = vmatprep.subr.bf16.mxu0 0
  %120 = vmatpush1.bf16.msra.mxu0 %v90
  %121 = vmatprep.subr.bf16.mxu0 0
  %122 = vmatpush1.bf16.msra.mxu0 %v91
  %123 = vmatprep.subr.bf16.mxu0 0
  %124 = vmatpush1.bf16.msra.mxu0 0
  %125 = vmatprep.subr.bf16.mxu0 0
  %126 = vmatpush1.bf16.msra.mxu0 0
  %127 = vmatprep.subr.bf16.mxu0 0
  %128 = vmatpush1.bf16.msra.mxu0 0
  %129 = vmatprep.subr.bf16.mxu0 0
  %130 = vmatpush1.bf16.msra.mxu0 0
  %131 = vmatprep.subr.bf16.mxu0 0
  %132 = vmatpush1.bf16.msra.mxu0 0
  %133 = vmatprep.subr.bf16.mxu0 0
  %134 = vmatpush1.bf16.msra.mxu0 0
  %135 = vmatprep.subr.bf16.mxu0 0
  %136 = vmatpush1.bf16.msra.mxu0 0
  %137 = vmatprep.subr.bf16.mxu0 0
  %138 = vmatpush1.bf16.msra.mxu0 0
  %139 = vmatprep.subr.bf16.mxu0 0
  %140 = vmatpush1.bf16.msra.mxu0 0
  %141 = vmatprep.subr.bf16.mxu0 0
  %142 = vmatpush1.bf16.msra.mxu0 0
  %143 = vmatprep.subr.bf16.mxu0 0
  %144 = vmatpush1.bf16.msra.mxu0 0
  %145 = vmatprep.subr.bf16.mxu0 0
  %146 = vmatpush1.bf16.msra.mxu0 0
  %147 = vmatprep.subr.bf16.mxu0 0
  %148 = vmatpush1.bf16.msra.mxu0 0
  %149 = vmatprep.subr.bf16.mxu0 0
  %150 = vmatpush1.bf16.msra.mxu0 0
  %151 = vmatprep.mubr.bf16.mxu0 0
  %152 = vmatmul.mubr.bf16.gmra.mrb[0].mxu0 %v96
  %v153 = vpop.f32.mrb[0].mxu0
  %v154 = vadd.f32 %v40, %v153
  %v155 = vpop.f32.mrb[0].mxu0
  %v156 = vpop.f32.mrb[0].mxu0
  %v157 = vadd.f32 %v40, %v156
  %v158 = vpop.f32.mrb[0].mxu0
  %159 = vmatprep.mubr.bf16.mxu0 0
  %160 = vmatmul.mubr.bf16.gmra.mrb[0].mxu0 %v99
  %v161 = vpop.f32.mrb[0].mxu0
  %v162 = vadd.f32 %v40, %v161
  %v163 = vpop.f32.mrb[0].mxu0
  %v164 = vpop.f32.mrb[0].mxu0
  %v165 = vadd.f32 %v40, %v164
  %v166 = vpop.f32.mrb[0].mxu0
  %167 = vmatprep.mubr.bf16.mxu0 0
  %168 = vmatmul.mubr.bf16.gmra.mrb[0].mxu0 %v102
  %v169 = vpop.f32.mrb[0].mxu0
  %v170 = vadd.f32 %v40, %v169
  %v171 = vpop.f32.mrb[0].mxu0
  %v172 = vpop.f32.mrb[0].mxu0
  %v173 = vadd.f32 %v40, %v172
  %v174 = vpop.f32.mrb[0].mxu0
  %175 = vmatprep.mubr.bf16.mxu0 0
  %176 = vmatmul.mubr.bf16.gmra.mrb[0].mxu0 %v105
  %v177 = vpop.f32.mrb[0].mxu0
  %v178 = vadd.f32 %v40, %v177
  %v179 = vpop.f32.mrb[0].mxu0
  %v180 = vpop.f32.mrb[0].mxu0
  %v181 = vadd.f32 %v40, %v180
  %v182 = vpop.f32.mrb[0].mxu0
  %183 = vmatprep.mubr.bf16.mxu0 0
  %184 = vmatmul.mubr.bf16.gmra.mrb[0].mxu0 %v108
  %v185 = vpop.f32.mrb[0].mxu0
  %v186 = vadd.f32 %v40, %v185
  %v187 = vpop.f32.mrb[0].mxu0
  %v188 = vpop.f32.mrb[0].mxu0
  %v189 = vadd.f32 %v40, %v188
  %v190 = vpop.f32.mrb[0].mxu0
  %191 = vmatprep.mubr.bf16.mxu0 0
  %192 = vmatmul.mubr.bf16.gmra.mrb[0].mxu0 %v111
  %v193 = vpop.f32.mrb[0].mxu0
  %v194 = vadd.f32 %v40, %v193
  %v195 = vpop.f32.mrb[0].mxu0
  %v196 = vpop.f32.mrb[0].mxu0
  %v197 = vadd.f32 %v40, %v196
  %v198 = vpop.f32.mrb[0].mxu0
  %199 = vmatprep.mubr.bf16.mxu0 0
  %200 = vmatmul.mubr.bf16.gmra.mrb[0].mxu0 %v114
  %v201 = vpop.f32.mrb[0].mxu0
  %v202 = vadd.f32 %v40, %v201
  %v203 = vpop.f32.mrb[0].mxu0
  %v204 = vpop.f32.mrb[0].mxu0
  %v205 = vadd.f32 %v40, %v204
  %v206 = vpop.f32.mrb[0].mxu0
  %207 = vmatprep.mubr.bf16.mxu0 0
  %208 = vmatmul.mubr.bf16.gmra.mrb[0].mxu0 %v117
  %v209 = vpop.f32.mrb[0].mxu0
  %v210 = vadd.f32 %v40, %v209
  %v211 = vpop.f32.mrb[0].mxu0
  %v212 = vpop.f32.mrb[0].mxu0
  %v213 = vadd.f32 %v40, %v212
  %v214 = vpop.f32.mrb[0].mxu0
  %215 = vdwg.mxu0
  %v216 = vpack.c.bf16 %v157, %v154
  %v217 = vpack.c.bf16 %v165, %v162
  %v218 = vpack.c.bf16 %v173, %v170
  %v219 = vpack.c.bf16 %v181, %v178
  %v220 = vpack.c.bf16 %v189, %v186
  %v221 = vpack.c.bf16 %v197, %v194
  %v222 = vpack.c.bf16 %v205, %v202
  %v223 = vpack.c.bf16 %v213, %v210
  %v232 = vunpack.c.l.b16 %v216
  %v233 = vunpack.c.h.b16 %v216
  %v234 = vunpack.c.l.b16 %v217
  %v235 = vunpack.c.h.b16 %v217
  %v236 = vunpack.c.l.b16 %v218
  %v237 = vunpack.c.h.b16 %v218
  %v238 = vunpack.c.l.b16 %v219
  %v239 = vunpack.c.h.b16 %v219
  %v240 = vunpack.c.l.b16 %v220
  %v241 = vunpack.c.h.b16 %v220
  %v242 = vunpack.c.l.b16 %v221
  %v243 = vunpack.c.h.b16 %v221
  %v244 = vunpack.c.l.b16 %v222
  %v245 = vunpack.c.h.b16 %v222
  %v246 = vunpack.c.l.b16 %v223
  %v247 = vunpack.c.h.b16 %v223
  %v248 = vpack.c.b16 %v232, %v232
  %v249 = vpack.c.b16 %v233, %v233
  %v250 = vpack.c.b16 %v234, %v234
  %v251 = vpack.c.b16 %v235, %v235
  %v252 = vpack.c.b16 %v236, %v236
  %v253 = vpack.c.b16 %v237, %v237
  %v254 = vpack.c.b16 %v238, %v238
  %v255 = vpack.c.b16 %v239, %v239
  %v256 = vpack.c.b16 %v240, %v240
  %v257 = vpack.c.b16 %v241, %v241
  %v258 = vpack.c.b16 %v242, %v242
  %v259 = vpack.c.b16 %v243, %v243
  %v260 = vpack.c.b16 %v244, %v244
  %v261 = vpack.c.b16 %v245, %v245
  %v262 = vpack.c.b16 %v246, %v246
  %v263 = vpack.c.b16 %v247, %v247
  %vm280 = vcmask 519168
  %281 = vst.msk [vmem:[%s3] sm:$0xf] %vm280, %v248
  %282 = vst.msk [vmem:[%s3 + $0x4] sm:$0xf] %vm280, %v249
  %283 = vst.msk [vmem:[%s3 + $0x8] sm:$0xf] %vm280, %v250
  %284 = vst.msk [vmem:[%s3 + $0xc] sm:$0xf] %vm280, %v251
  %285 = vst.msk [vmem:[%s3 + $0x10] sm:$0xf] %vm280, %v252
  %286 = vst.msk [vmem:[%s3 + $0x14] sm:$0xf] %vm280, %v253
  %287 = vst.msk [vmem:[%s3 + $0x18] sm:$0xf] %vm280, %v254
  %288 = vst.msk [vmem:[%s3 + $0x1c] sm:$0xf] %vm280, %v255
  %289 = vst.msk [vmem:[%s3 + $0x20] sm:$0xf] %vm280, %v256
  %290 = vst.msk [vmem:[%s3 + $0x24] sm:$0xf] %vm280, %v257
  %291 = vst.msk [vmem:[%s3 + $0x28] sm:$0xf] %vm280, %v258
  %292 = vst.msk [vmem:[%s3 + $0x2c] sm:$0xf] %vm280, %v259
  %293 = vst.msk [vmem:[%s3 + $0x30] sm:$0xf] %vm280, %v260
  %294 = vst.msk [vmem:[%s3 + $0x34] sm:$0xf] %vm280, %v261
  %295 = vst.msk [vmem:[%s3 + $0x38] sm:$0xf] %vm280, %v262
  %296 = vst.msk [vmem:[%s3 + $0x3c] sm:$0xf] %vm280, %v263
  // Predicated region
  $region14: #{ff_rgb_forward.12} parent=0 // pred_check
    _
  $region15: #{ff_rgb_forward.12} parent=0 // pred_check_branch
    %298 = sbr.rel (0) target = $region17
  $region16: #{ff_rgb_forward.12} parent=0 // pred_region
    _
  $region17: #{ff_rgb_forward.12} parent=0 // pred_fallthru
    _
  // Predicated region
  $region18: #{ff_rgb_forward.12} parent=0 // pred_check
    _
  $region19: #{ff_rgb_forward.12} parent=0 // pred_check_branch
    %300 = sbr.rel (0) target = $region21
  $region20: #{ff_rgb_forward.12} parent=0 // pred_region
    _
  $region21: #{ff_rgb_forward.12} parent=0 // pred_fallthru
    _

// kernel: ff_rgb_forward.14
$region0: #{ff_rgb_forward.14}
  #allocation0 [shape = 'u32[]', space=smem, size = 0x4, offset = 0x4, fixed_abs, tag = 'smem constant byte address 0x4 - core index']
  #allocation1 [shape = 'u32[144,128]{1,0:T(1,128)}', space=vmem, size = 0x12000, scoped, tag = 'internal scratch']
  %s0 = inlined_call_operand.vmem [shape: bf16[128,32], index: 0, kind: input, shape index: {}]
  %s1 = inlined_call_operand.vmem [shape: bf16[32,32], index: 1, kind: input, shape index: {}]
  %s2 = inlined_call_operand.vmem [shape: f32[1,32], index: 2, kind: input, shape index: {}]
  %s3 = inlined_call_operand.vmem [shape: f32[1,32], index: 3, kind: input, shape index: {}]
  %s4 = inlined_call_operand.vmem [shape: f32[1,32], index: 4, kind: input, shape index: {}]
  %s5 = inlined_call_operand.vmem [shape: bf16[128,32], index: 5, kind: output, shape index: {}]
  %s6 = sld [smem:[#allocation0]]
  $region30: #{ff_rgb_forward.14} parent=0
    _
  %s8 = ssub.s32 1, %s6
  %s9 = scalar_select 0, %s8, %s6
  // Predicated region
  $region2: #{ff_rgb_forward.14} parent=0 // pred_check
    _
  $region3: #{ff_rgb_forward.14} parent=0 // pred_check_branch
    %11 = sbr.rel (0) target = $region5
  $region4: #{ff_rgb_forward.14} parent=0 // pred_region
    _
  $region5: #{ff_rgb_forward.14} parent=0 // pred_fallthru
    _
  // Predicated region
  $region6: #{ff_rgb_forward.14} parent=0 // pred_check
    _
  $region7: #{ff_rgb_forward.14} parent=0 // pred_check_branch
    %13 = sbr.rel (0) target = $region9
  $region8: #{ff_rgb_forward.14} parent=0 // pred_region
    _
  $region9: #{ff_rgb_forward.14} parent=0 // pred_fallthru
    _
  // Predicated region
  $region10: #{ff_rgb_forward.14} parent=0 // pred_check
    _
  $region11: #{ff_rgb_forward.14} parent=0 // pred_check_branch
    %15 = sbr.rel (0) target = $region13
  $region12: #{ff_rgb_forward.14} parent=0 // pred_region
    _
  $region13: #{ff_rgb_forward.14} parent=0 // pred_fallthru
    _
  // Predicated region
  $region14: #{ff_rgb_forward.14} parent=0 // pred_check
    _
  $region15: #{ff_rgb_forward.14} parent=0 // pred_check_branch
    %17 = sbr.rel (0) target = $region17
  $region16: #{ff_rgb_forward.14} parent=0 // pred_region
    _
  $region17: #{ff_rgb_forward.14} parent=0 // pred_fallthru
    _
  // Predicated region
  $region18: #{ff_rgb_forward.14} parent=0 // pred_check
    _
  $region19: #{ff_rgb_forward.14} parent=0 // pred_check_branch
    %19 = sbr.rel (0) target = $region21
  $region20: #{ff_rgb_forward.14} parent=0 // pred_region
    _
  $region21: #{ff_rgb_forward.14} parent=0 // pred_fallthru
    _
  %v21 = vld [vmem:[%s0] sm:$0xf]
  %v22 = vld [vmem:[%s0 + $0x4] sm:$0xf]
  %v23 = vld [vmem:[%s0 + $0x8] sm:$0xf]
  %v24 = vld [vmem:[%s0 + $0xc] sm:$0xf]
  %v25 = vld [vmem:[%s0 + $0x10] sm:$0xf]
  %v26 = vld [vmem:[%s0 + $0x14] sm:$0xf]
  %v27 = vld [vmem:[%s0 + $0x18] sm:$0xf]
  %v28 = vld [vmem:[%s0 + $0x1c] sm:$0xf]
  %v29 = vld [vmem:[%s0 + $0x20] sm:$0xf]
  %v30 = vld [vmem:[%s0 + $0x24] sm:$0xf]
  %v31 = vld [vmem:[%s0 + $0x28] sm:$0xf]
  %v32 = vld [vmem:[%s0 + $0x2c] sm:$0xf]
  %v33 = vld [vmem:[%s0 + $0x30] sm:$0xf]
  %v34 = vld [vmem:[%s0 + $0x34] sm:$0xf]
  %v35 = vld [vmem:[%s0 + $0x38] sm:$0xf]
  %v36 = vld [vmem:[%s0 + $0x3c] sm:$0xf]
  %v37 = vld [vmem:[%s1] sm:$0xf]
  %v38 = vld [vmem:[%s1 + $0x4] sm:$0xf]
  %v39 = vld [vmem:[%s1 + $0x8] sm:$0xf]
  %v40 = vld [vmem:[%s1 + $0xc] sm:$0xf]
  %v41 = vld [vmem:[%s2] sm:$0x1]
  %v43 = vlaneseq
  %v44 = vshrl.u32 %v43, 7
  %v45 = vsub.s32 0, %v44
  %v46 = vrot.slane %v41, %v45
  %v64 = vunpack.c.l.b16 %v21
  %v65 = vunpack.c.l.b16 %v22
  %v66 = vunpack.c.l.b16 %v23
  %v67 = vunpack.c.l.b16 %v24
  %v68 = vunpack.c.l.b16 %v25
  %v69 = vunpack.c.l.b16 %v26
  %v70 = vunpack.c.l.b16 %v27
  %v71 = vunpack.c.l.b16 %v28
  %v72 = vunpack.c.l.b16 %v29
  %v73 = vunpack.c.l.b16 %v30
  %v74 = vunpack.c.l.b16 %v31
  %v75 = vunpack.c.l.b16 %v32
  %v76 = vunpack.c.l.b16 %v33
  %v77 = vunpack.c.l.b16 %v34
  %v78 = vunpack.c.l.b16 %v35
  %v79 = vunpack.c.l.b16 %v36
  %v80 = vpack.c.b16 %v65, %v64
  %v81 = vpack.c.b16 %v67, %v66
  %v82 = vpack.c.b16 %v69, %v68
  %v83 = vpack.c.b16 %v71, %v70
  %v84 = vpack.c.b16 %v73, %v72
  %v85 = vpack.c.b16 %v75, %v74
  %v86 = vpack.c.b16 %v77, %v76
  %v87 = vpack.c.b16 %v79, %v78
  %v92 = vunpack.c.l.b16 %v37
  %v93 = vunpack.c.l.b16 %v38
  %v94 = vunpack.c.l.b16 %v39
  %v95 = vunpack.c.l.b16 %v40
  %v96 = vpack.c.b16 %v93, %v92
  %v97 = vpack.c.b16 %v95, %v94
  %vm100 = vcmask 261120
  %v102 = vsel %vm100, %v80, 0
  %v105 = vsel %vm100, %v81, 0
  %v108 = vsel %vm100, %v82, 0
  %v111 = vsel %vm100, %v83, 0
  %v114 = vsel %vm100, %v84, 0
  %v117 = vsel %vm100, %v85, 0
  %v120 = vsel %vm100, %v86, 0
  %v123 = vsel %vm100, %v87, 0
  %125 = vmatprep.subr.bf16.mxu0 0
  %126 = vmatpush1.bf16.msra.mxu0 %v96
  %127 = vmatprep.subr.bf16.mxu0 0
  %128 = vmatpush1.bf16.msra.mxu0 %v97
  %129 = vmatprep.subr.bf16.mxu0 0
  %130 = vmatpush1.bf16.msra.mxu0 0
  %131 = vmatprep.subr.bf16.mxu0 0
  %132 = vmatpush1.bf16.msra.mxu0 0
  %133 = vmatprep.subr.bf16.mxu0 0
  %134 = vmatpush1.bf16.msra.mxu0 0
  %135 = vmatprep.subr.bf16.mxu0 0
  %136 = vmatpush1.bf16.msra.mxu0 0
  %137 = vmatprep.subr.bf16.mxu0 0
  %138 = vmatpush1.bf16.msra.mxu0 0
  %139 = vmatprep.subr.bf16.mxu0 0
  %140 = vmatpush1.bf16.msra.mxu0 0
  %141 = vmatprep.subr.bf16.mxu0 0
  %142 = vmatpush1.bf16.msra.mxu0 0
  %143 = vmatprep.subr.bf16.mxu0 0
  %144 = vmatpush1.bf16.msra.mxu0 0
  %145 = vmatprep.subr.bf16.mxu0 0
  %146 = vmatpush1.bf16.msra.mxu0 0
  %147 = vmatprep.subr.bf16.mxu0 0
  %148 = vmatpush1.bf16.msra.mxu0 0
  %149 = vmatprep.subr.bf16.mxu0 0
  %150 = vmatpush1.bf16.msra.mxu0 0
  %151 = vmatprep.subr.bf16.mxu0 0
  %152 = vmatpush1.bf16.msra.mxu0 0
  %153 = vmatprep.subr.bf16.mxu0 0
  %154 = vmatpush1.bf16.msra.mxu0 0
  %155 = vmatprep.subr.bf16.mxu0 0
  %156 = vmatpush1.bf16.msra.mxu0 0
  %157 = vmatprep.mubr.bf16.mxu0 0
  %158 = vmatmul.mubr.bf16.gmra.mrb[0].mxu0 %v102
  %v159 = vpop.f32.mrb[0].mxu0
  %v160 = vadd.f32 %v46, %v159
  %v161 = vpop.f32.mrb[0].mxu0
  %v162 = vpop.f32.mrb[0].mxu0
  %v163 = vadd.f32 %v46, %v162
  %v164 = vpop.f32.mrb[0].mxu0
  %165 = vmatprep.mubr.bf16.mxu0 0
  %166 = vmatmul.mubr.bf16.gmra.mrb[0].mxu0 %v105
  %v167 = vpop.f32.mrb[0].mxu0
  %v168 = vadd.f32 %v46, %v167
  %v169 = vpop.f32.mrb[0].mxu0
  %v170 = vpop.f32.mrb[0].mxu0
  %v171 = vadd.f32 %v46, %v170
  %v172 = vpop.f32.mrb[0].mxu0
  %173 = vmatprep.mubr.bf16.mxu0 0
  %174 = vmatmul.mubr.bf16.gmra.mrb[0].mxu0 %v108
  %v175 = vpop.f32.mrb[0].mxu0
  %v176 = vadd.f32 %v46, %v175
  %v177 = vpop.f32.mrb[0].mxu0
  %v178 = vpop.f32.mrb[0].mxu0
  %v179 = vadd.f32 %v46, %v178
  %v180 = vpop.f32.mrb[0].mxu0
  %181 = vmatprep.mubr.bf16.mxu0 0
  %182 = vmatmul.mubr.bf16.gmra.mrb[0].mxu0 %v111
  %v183 = vpop.f32.mrb[0].mxu0
  %v184 = vadd.f32 %v46, %v183
  %v185 = vpop.f32.mrb[0].mxu0
  %v186 = vpop.f32.mrb[0].mxu0
  %v187 = vadd.f32 %v46, %v186
  %v188 = vpop.f32.mrb[0].mxu0
  %189 = vmatprep.mubr.bf16.mxu0 0
  %190 = vmatmul.mubr.bf16.gmra.mrb[0].mxu0 %v114
  %v191 = vpop.f32.mrb[0].mxu0
  %v192 = vadd.f32 %v46, %v191
  %v193 = vpop.f32.mrb[0].mxu0
  %v194 = vpop.f32.mrb[0].mxu0
  %v195 = vadd.f32 %v46, %v194
  %v196 = vpop.f32.mrb[0].mxu0
  %197 = vmatprep.mubr.bf16.mxu0 0
  %198 = vmatmul.mubr.bf16.gmra.mrb[0].mxu0 %v117
  %v199 = vpop.f32.mrb[0].mxu0
  %v200 = vadd.f32 %v46, %v199
  %v201 = vpop.f32.mrb[0].mxu0
  %v202 = vpop.f32.mrb[0].mxu0
  %v203 = vadd.f32 %v46, %v202
  %v204 = vpop.f32.mrb[0].mxu0
  %205 = vmatprep.mubr.bf16.mxu0 0
  %206 = vmatmul.mubr.bf16.gmra.mrb[0].mxu0 %v120
  %v207 = vpop.f32.mrb[0].mxu0
  %v208 = vadd.f32 %v46, %v207
  %v209 = vpop.f32.mrb[0].mxu0
  %v210 = vpop.f32.mrb[0].mxu0
  %v211 = vadd.f32 %v46, %v210
  %v212 = vpop.f32.mrb[0].mxu0
  %213 = vmatprep.mubr.bf16.mxu0 0
  %214 = vmatmul.mubr.bf16.gmra.mrb[0].mxu0 %v123
  %v215 = vpop.f32.mrb[0].mxu0
  %v216 = vadd.f32 %v46, %v215
  %v217 = vpop.f32.mrb[0].mxu0
  %v218 = vpop.f32.mrb[0].mxu0
  %v219 = vadd.f32 %v46, %v218
  %v220 = vpop.f32.mrb[0].mxu0
  %221 = vdwg.mxu0
  %v222 = vunpack.c.l.bf16 %v21
  %v223 = vunpack.c.l.bf16 %v22
  %v224 = vunpack.c.l.bf16 %v23
  %v225 = vunpack.c.l.bf16 %v24
  %v226 = vunpack.c.l.bf16 %v25
  %v227 = vunpack.c.l.bf16 %v26
  %v228 = vunpack.c.l.bf16 %v27
  %v229 = vunpack.c.l.bf16 %v28
  %v230 = vunpack.c.l.bf16 %v29
  %v231 = vunpack.c.l.bf16 %v30
  %v232 = vunpack.c.l.bf16 %v31
  %v233 = vunpack.c.l.bf16 %v32
  %v234 = vunpack.c.l.bf16 %v33
  %v235 = vunpack.c.l.bf16 %v34
  %v236 = vunpack.c.l.bf16 %v35
  %v237 = vunpack.c.l.bf16 %v36
  %v238 = vadd.f32 %v160, %v222
  %v239 = vadd.f32 %v163, %v223
  %v240 = vadd.f32 %v168, %v224
  %v241 = vadd.f32 %v171, %v225
  %v242 = vadd.f32 %v176, %v226
  %v243 = vadd.f32 %v179, %v227
  %v244 = vadd.f32 %v184, %v228
  %v245 = vadd.f32 %v187, %v229
  %v246 = vadd.f32 %v192, %v230
  %v247 = vadd.f32 %v195, %v231
  %v248 = vadd.f32 %v200, %v232
  %v249 = vadd.f32 %v203, %v233
  %v250 = vadd.f32 %v208, %v234
  %v251 = vadd.f32 %v211, %v235
  %v252 = vadd.f32 %v216, %v236
  %v253 = vadd.f32 %v219, %v237
  %v254 = vsel %vm100, %v238, 0.0
  %255 = vadd.xlane.f32.xlu0 %v254
  %v256 = vpop.xlane.xlu0 %255
  %v257 = vsel %vm100, %v239, 0.0
  %258 = vadd.xlane.f32.xlu0 %v257
  %v259 = vpop.xlane.xlu0 %258
  %v260 = vsel %vm100, %v240, 0.0
  %261 = vadd.xlane.f32.xlu0 %v260
  %v262 = vpop.xlane.xlu0 %261
  %v263 = vsel %vm100, %v241, 0.0
  %264 = vadd.xlane.f32.xlu0 %v263
  %v265 = vpop.xlane.xlu0 %264
  %v266 = vsel %vm100, %v242, 0.0
  %267 = vadd.xlane.f32.xlu0 %v266
  %v268 = vpop.xlane.xlu0 %267
  %v269 = vsel %vm100, %v243, 0.0
  %270 = vadd.xlane.f32.xlu0 %v269
  %v271 = vpop.xlane.xlu0 %270
  %v272 = vsel %vm100, %v244, 0.0
  %273 = vadd.xlane.f32.xlu0 %v272
  %v274 = vpop.xlane.xlu0 %273
  %v275 = vsel %vm100, %v245, 0.0
  %276 = vadd.xlane.f32.xlu0 %v275
  %v277 = vpop.xlane.xlu0 %276
  %v278 = vsel %vm100, %v246, 0.0
  %279 = vadd.xlane.f32.xlu0 %v278
  %v280 = vpop.xlane.xlu0 %279
  %v281 = vsel %vm100, %v247, 0.0
  %282 = vadd.xlane.f32.xlu0 %v281
  %v283 = vpop.xlane.xlu0 %282
  %v284 = vsel %vm100, %v248, 0.0
  %285 = vadd.xlane.f32.xlu0 %v284
  %v286 = vpop.xlane.xlu0 %285
  %v287 = vsel %vm100, %v249, 0.0
  %288 = vadd.xlane.f32.xlu0 %v287
  %v289 = vpop.xlane.xlu0 %288
  %v290 = vsel %vm100, %v250, 0.0
  %291 = vadd.xlane.f32.xlu0 %v290
  %v292 = vpop.xlane.xlu0 %291
  %v293 = vsel %vm100, %v251, 0.0
  %294 = vadd.xlane.f32.xlu0 %v293
  %v295 = vpop.xlane.xlu0 %294
  %v296 = vsel %vm100, %v252, 0.0
  %297 = vadd.xlane.f32.xlu0 %v296
  %v298 = vpop.xlane.xlu0 %297
  %v299 = vsel %vm100, %v253, 0.0
  %300 = vadd.xlane.f32.xlu0 %v299
  %v301 = vpop.xlane.xlu0 %300
  %v302 = vrcp.pop 32.0
  %v303 = vmul.f32 %v256, %v302
  %v304 = vmul.f32 %v259, %v302
  %v305 = vmul.f32 %v262, %v302
  %v306 = vmul.f32 %v265, %v302
  %v307 = vmul.f32 %v268, %v302
  %v308 = vmul.f32 %v271, %v302
  %v309 = vmul.f32 %v274, %v302
  %v310 = vmul.f32 %v277, %v302
  %v311 = vmul.f32 %v280, %v302
  %v312 = vmul.f32 %v283, %v302
  %v313 = vmul.f32 %v286, %v302
  %v314 = vmul.f32 %v289, %v302
  %v315 = vmul.f32 %v292, %v302
  %v316 = vmul.f32 %v295, %v302
  %v317 = vmul.f32 %v298, %v302
  %v318 = vmul.f32 %v301, %v302
  %v319 = vsub.f32 %v238, %v303
  %v320 = vsub.f32 %v239, %v304
  %v321 = vsub.f32 %v240, %v305
  %v322 = vsub.f32 %v241, %v306
  %v323 = vsub.f32 %v242, %v307
  %v324 = vsub.f32 %v243, %v308
  %v325 = vsub.f32 %v244, %v309
  %v326 = vsub.f32 %v245, %v310
  %v327 = vsub.f32 %v246, %v311
  %v328 = vsub.f32 %v247, %v312
  %v329 = vsub.f32 %v248, %v313
  %v330 = vsub.f32 %v249, %v314
  %v331 = vsub.f32 %v250, %v315
  %v332 = vsub.f32 %v251, %v316
  %v333 = vsub.f32 %v252, %v317
  %v334 = vsub.f32 %v253, %v318
  %v335 = vmul.f32 %v319, %v319
  %v336 = vmul.f32 %v320, %v320
  %v337 = vmul.f32 %v321, %v321
  %v338 = vmul.f32 %v322, %v322
  %v339 = vmul.f32 %v323, %v323
  %v340 = vmul.f32 %v324, %v324
  %v341 = vmul.f32 %v325, %v325
  %v342 = vmul.f32 %v326, %v326
  %v343 = vmul.f32 %v327, %v327
  %v344 = vmul.f32 %v328, %v328
  %v345 = vmul.f32 %v329, %v329
  %v346 = vmul.f32 %v330, %v330
  %v347 = vmul.f32 %v331, %v331
  %v348 = vmul.f32 %v332, %v332
  %v349 = vmul.f32 %v333, %v333
  %v350 = vmul.f32 %v334, %v334
  %v351 = vsel %vm100, %v335, 0.0
  %352 = vadd.xlane.f32.xlu0 %v351
  %v353 = vpop.xlane.xlu0 %352
  %v354 = vsel %vm100, %v336, 0.0
  %355 = vadd.xlane.f32.xlu0 %v354
  %v356 = vpop.xlane.xlu0 %355
  %v357 = vsel %vm100, %v337, 0.0
  %358 = vadd.xlane.f32.xlu0 %v357
  %v359 = vpop.xlane.xlu0 %358
  %v360 = vsel %vm100, %v338, 0.0
  %361 = vadd.xlane.f32.xlu0 %v360
  %v362 = vpop.xlane.xlu0 %361
  %v363 = vsel %vm100, %v339, 0.0
  %364 = vadd.xlane.f32.xlu0 %v363
  %v365 = vpop.xlane.xlu0 %364
  %v366 = vsel %vm100, %v340, 0.0
  %367 = vadd.xlane.f32.xlu0 %v366
  %v368 = vpop.xlane.xlu0 %367
  %v369 = vsel %vm100, %v341, 0.0
  %370 = vadd.xlane.f32.xlu0 %v369
  %v371 = vpop.xlane.xlu0 %370
  %v372 = vsel %vm100, %v342, 0.0
  %373 = vadd.xlane.f32.xlu0 %v372
  %v374 = vpop.xlane.xlu0 %373
  %v375 = vsel %vm100, %v343, 0.0
  %376 = vadd.xlane.f32.xlu0 %v375
  %v377 = vpop.xlane.xlu0 %376
  %v378 = vsel %vm100, %v344, 0.0
  %379 = vadd.xlane.f32.xlu0 %v378
  %v380 = vpop.xlane.xlu0 %379
  %v381 = vsel %vm100, %v345, 0.0
  %382 = vadd.xlane.f32.xlu0 %v381
  %v383 = vpop.xlane.xlu0 %382
  %v384 = vsel %vm100, %v346, 0.0
  %385 = vadd.xlane.f32.xlu0 %v384
  %v386 = vpop.xlane.xlu0 %385
  %v387 = vsel %vm100, %v347, 0.0
  %388 = vadd.xlane.f32.xlu0 %v387
  %v389 = vpop.xlane.xlu0 %388
  %v390 = vsel %vm100, %v348, 0.0
  %391 = vadd.xlane.f32.xlu0 %v390
  %v392 = vpop.xlane.xlu0 %391
  %v393 = vsel %vm100, %v349, 0.0
  %394 = vadd.xlane.f32.xlu0 %v393
  %v395 = vpop.xlane.xlu0 %394
  %v396 = vsel %vm100, %v350, 0.0
  %397 = vadd.xlane.f32.xlu0 %v396
  %v398 = vpop.xlane.xlu0 %397
  %v399 = vmul.f32 %v353, %v302
  %v400 = vmul.f32 %v356, %v302
  %v401 = vmul.f32 %v359, %v302
  %v402 = vmul.f32 %v362, %v302
  %v403 = vmul.f32 %v365, %v302
  %v404 = vmul.f32 %v368, %v302
  %v405 = vmul.f32 %v371, %v302
  %v406 = vmul.f32 %v374, %v302
  %v407 = vmul.f32 %v377, %v302
  %v408 = vmul.f32 %v380, %v302
  %v409 = vmul.f32 %v383, %v302
  %v410 = vmul.f32 %v386, %v302
  %v411 = vmul.f32 %v389, %v302
  %v412 = vmul.f32 %v392, %v302
  %v413 = vmul.f32 %v395, %v302
  %v414 = vmul.f32 %v398, %v302
  %v415 = vadd.f32 %v399, 1e-06
  %v416 = vadd.f32 %v400, 1e-06
  %v417 = vadd.f32 %v401, 1e-06
  %v418 = vadd.f32 %v402, 1e-06
  %v419 = vadd.f32 %v403, 1e-06
  %v420 = vadd.f32 %v404, 1e-06
  %v421 = vadd.f32 %v405, 1e-06
  %v422 = vadd.f32 %v406, 1e-06
  %v423 = vadd.f32 %v407, 1e-06
  %v424 = vadd.f32 %v408, 1e-06
  %v425 = vadd.f32 %v409, 1e-06
  %v426 = vadd.f32 %v410, 1e-06
  %v427 = vadd.f32 %v411, 1e-06
  %v428 = vadd.f32 %v412, 1e-06
  %v429 = vadd.f32 %v413, 1e-06
  %v430 = vadd.f32 %v414, 1e-06
  %v431 = vrsqrt.pop %v415
  %v432 = vrsqrt.pop %v416
  %v433 = vrsqrt.pop %v417
  %v434 = vrsqrt.pop %v418
  %v435 = vrsqrt.pop %v419
  %v436 = vrsqrt.pop %v420
  %v437 = vrsqrt.pop %v421
  %v438 = vrsqrt.pop %v422
  %v439 = vrsqrt.pop %v423
  %v440 = vrsqrt.pop %v424
  %v441 = vrsqrt.pop %v425
  %v442 = vrsqrt.pop %v426
  %v443 = vrsqrt.pop %v427
  %v444 = vrsqrt.pop %v428
  %v445 = vrsqrt.pop %v429
  %v446 = vrsqrt.pop %v430
  %v447 = vmul.f32 %v319, %v431
  %v448 = vmul.f32 %v320, %v432
  %v449 = vmul.f32 %v321, %v433
  %v450 = vmul.f32 %v322, %v434
  %v451 = vmul.f32 %v323, %v435
  %v452 = vmul.f32 %v324, %v436
  %v453 = vmul.f32 %v325, %v437
  %v454 = vmul.f32 %v326, %v438
  %v455 = vmul.f32 %v327, %v439
  %v456 = vmul.f32 %v328, %v440
  %v457 = vmul.f32 %v329, %v441
  %v458 = vmul.f32 %v330, %v442
  %v459 = vmul.f32 %v331, %v443
  %v460 = vmul.f32 %v332, %v444
  %v461 = vmul.f32 %v333, %v445
  %v462 = vmul.f32 %v334, %v446
  %v463 = vld [vmem:[%s3] sm:$0x1]
  %v465 = vlaneseq
  %v466 = vshrl.u32 %v465, 7
  %v467 = vsub.s32 0, %v466
  %v468 = vrot.slane %v463, %v467
  %v470 = vmul.f32 %v447, %v468
  %v471 = vmul.f32 %v448, %v468
  %v472 = vmul.f32 %v449, %v468
  %v473 = vmul.f32 %v450, %v468
  %v474 = vmul.f32 %v451, %v468
  %v475 = vmul.f32 %v452, %v468
  %v476 = vmul.f32 %v453, %v468
  %v477 = vmul.f32 %v454, %v468
  %v478 = vmul.f32 %v455, %v468
  %v479 = vmul.f32 %v456, %v468
  %v480 = vmul.f32 %v457, %v468
  %v481 = vmul.f32 %v458, %v468
  %v482 = vmul.f32 %v459, %v468
  %v483 = vmul.f32 %v460, %v468
  %v484 = vmul.f32 %v461, %v468
  %v485 = vmul.f32 %v462, %v468
  %v486 = vld [vmem:[%s4] sm:$0x1]
  %v488 = vlaneseq
  %v489 = vshrl.u32 %v488, 7
  %v490 = vsub.s32 0, %v489
  %v491 = vrot.slane %v486, %v490
  %v493 = vadd.f32 %v470, %v491
  %v494 = vadd.f32 %v471, %v491
  %v495 = vadd.f32 %v472, %v491
  %v496 = vadd.f32 %v473, %v491
  %v497 = vadd.f32 %v474, %v491
  %v498 = vadd.f32 %v475, %v491
  %v499 = vadd.f32 %v476, %v491
  %v500 = vadd.f32 %v477, %v491
  %v501 = vadd.f32 %v478, %v491
  %v502 = vadd.f32 %v479, %v491
  %v503 = vadd.f32 %v480, %v491
  %v504 = vadd.f32 %v481, %v491
  %v505 = vadd.f32 %v482, %v491
  %v506 = vadd.f32 %v483, %v491
  %v507 = vadd.f32 %v484, %v491
  %v508 = vadd.f32 %v485, %v491
  %v509 = vpack.c.bf16 %v494, %v493
  %v510 = vpack.c.bf16 %v496, %v495
  %v511 = vpack.c.bf16 %v498, %v497
  %v512 = vpack.c.bf16 %v500, %v499
  %v513 = vpack.c.bf16 %v502, %v501
  %v514 = vpack.c.bf16 %v504, %v503
  %v515 = vpack.c.bf16 %v506, %v505
  %v516 = vpack.c.bf16 %v508, %v507
  %v525 = vunpack.c.l.b16 %v509
  %v526 = vunpack.c.h.b16 %v509
  %v527 = vunpack.c.l.b16 %v510
  %v528 = vunpack.c.h.b16 %v510
  %v529 = vunpack.c.l.b16 %v511
  %v530 = vunpack.c.h.b16 %v511
  %v531 = vunpack.c.l.b16 %v512
  %v532 = vunpack.c.h.b16 %v512
  %v533 = vunpack.c.l.b16 %v513
  %v534 = vunpack.c.h.b16 %v513
  %v535 = vunpack.c.l.b16 %v514
  %v536 = vunpack.c.h.b16 %v514
  %v537 = vunpack.c.l.b16 %v515
  %v538 = vunpack.c.h.b16 %v515
  %v539 = vunpack.c.l.b16 %v516
  %v540 = vunpack.c.h.b16 %v516
  %v541 = vpack.c.b16 %v525, %v525
  %v542 = vpack.c.b16 %v526, %v526
  %v543 = vpack.c.b16 %v527, %v527
  %v544 = vpack.c.b16 %v528, %v528
  %v545 = vpack.c.b16 %v529, %v529
  %v546 = vpack.c.b16 %v530, %v530
  %v547 = vpack.c.b16 %v531, %v531
  %v548 = vpack.c.b16 %v532, %v532
  %v549 = vpack.c.b16 %v533, %v533
  %v550 = vpack.c.b16 %v534, %v534
  %v551 = vpack.c.b16 %v535, %v535
  %v552 = vpack.c.b16 %v536, %v536
  %v553 = vpack.c.b16 %v537, %v537
  %v554 = vpack.c.b16 %v538, %v538
  %v555 = vpack.c.b16 %v539, %v539
  %v556 = vpack.c.b16 %v540, %v540
  %vm573 = vcmask 257024
  %574 = vst.msk [vmem:[%s5] sm:$0xf] %vm573, %v541
  %575 = vst.msk [vmem:[%s5 + $0x4] sm:$0xf] %vm573, %v542
  %576 = vst.msk [vmem:[%s5 + $0x8] sm:$0xf] %vm573, %v543
  %577 = vst.msk [vmem:[%s5 + $0xc] sm:$0xf] %vm573, %v544
  %578 = vst.msk [vmem:[%s5 + $0x10] sm:$0xf] %vm573, %v545
  %579 = vst.msk [vmem:[%s5 + $0x14] sm:$0xf] %vm573, %v546
  %580 = vst.msk [vmem:[%s5 + $0x18] sm:$0xf] %vm573, %v547
  %581 = vst.msk [vmem:[%s5 + $0x1c] sm:$0xf] %vm573, %v548
  %582 = vst.msk [vmem:[%s5 + $0x20] sm:$0xf] %vm573, %v549
  %583 = vst.msk [vmem:[%s5 + $0x24] sm:$0xf] %vm573, %v550
  %584 = vst.msk [vmem:[%s5 + $0x28] sm:$0xf] %vm573, %v551
  %585 = vst.msk [vmem:[%s5 + $0x2c] sm:$0xf] %vm573, %v552
  %586 = vst.msk [vmem:[%s5 + $0x30] sm:$0xf] %vm573, %v553
  %587 = vst.msk [vmem:[%s5 + $0x34] sm:$0xf] %vm573, %v554
  %588 = vst.msk [vmem:[%s5 + $0x38] sm:$0xf] %vm573, %v555
  %589 = vst.msk [vmem:[%s5 + $0x3c] sm:$0xf] %vm573, %v556
  // Predicated region
  $region22: #{ff_rgb_forward.14} parent=0 // pred_check
    _
  $region23: #{ff_rgb_forward.14} parent=0 // pred_check_branch
    %591 = sbr.rel (0) target = $region25
  $region24: #{ff_rgb_forward.14} parent=0 // pred_region
    _
  $region25: #{ff_rgb_forward.14} parent=0 // pred_fallthru
    _
  // Predicated region
  $region26: #{ff_rgb_forward.14} parent=0 // pred_check
    _
  $region27: #{ff_rgb_forward.14} parent=0 // pred_check_branch
    %593 = sbr.rel (0) target = $region29
  $region28: #{ff_rgb_forward.14} parent=0 // pred_region
    _
  $region29: #{ff_rgb_forward.14} parent=0 // pred_fallthru
    _

// kernel: ff_rgb_forward.16
$region0: #{ff_rgb_forward.16}
  #allocation0 [shape = 'u32[]', space=smem, size = 0x4, offset = 0x4, fixed_abs, tag = 'smem constant byte address 0x4 - core index']
  #allocation1 [shape = 'u32[144,128]{1,0:T(1,128)}', space=vmem, size = 0x12000, scoped, tag = 'internal scratch']
  %s0 = inlined_call_operand.vmem [shape: f32[2,10,10,32], index: 0, kind: input, shape index: {}]
  %s1 = inlined_call_operand.vmem [shape: f32[9,32], index: 1, kind: input, shape index: {}]
  %s2 = inlined_call_operand.vmem [shape: bf16[2,8,8,32], index: 2, kind: output, shape index: {}]
  %s3 = sld [smem:[#allocation0]]
  $region41: #{ff_rgb_forward.16} parent=0
    _
  %s5 = ssub.s32 1, %s3
  %s6 = scalar_select 0, %s5, %s3
  loop: start=0, step=1, limit=4
  $region2: #{ff_rgb_forward.16} parent=0 // loop_pre_header
    _
  $region3: #{ff_rgb_forward.16} parent=0 // loop_header
    %s8 = sphi 0, %s12
    %p9 = scmp.ge.s32.totalorder %s8, 4
    %s18 = sphi 0, %s20
    %s21 = sphi 0, %s18
    %s22 = sphi 0, %s21
    %s38 = sphi 0, %s22
    %s42 = sphi 0, %s42
    %s44 = sphi 0, %s42
    %s45 = sphi 0, %s44
    %s59 = sphi 0, %s45
    %s65 = sphi 0, %s67
    %s68 = sphi 0, %s65
    %s69 = sphi 0, %s68
    %s85 = sphi 0, %s69
  $region4: #{ff_rgb_forward.16} parent=0 // loop_header_branch
    %11 = sbr.rel (%p9) target = $region8
  $region5: #{ff_rgb_forward.16} parent=0 // loop_body
    %s13 = ssub.s32 %s8, 1
    %s14 = ssub.s32 %s8, 2
    %s15 = sadd.s32 %s8, 1
    %s16 = ssub.s32 %s8, %s15
    %p17 = scmp.eq.s32.totalorder %s16, 0
    %s19 = sadd.s32 %s18, 1
    %s20 = scalar_select %p17, %s18, %s19
    %p23 = pneg %p17
    %p24 = scmp.eq.s32.totalorder %s8, 1
    %p25 = por %p23, %p24
    %p26 = scmp.ne.s32.totalorder %s18, %s21
    %p27 = scmp.eq.s32.totalorder %s8, 0
    %p28 = por %p26, %p27
    %p29 = scmp.ne.s32.totalorder %s18, %s21
    %p30 = scmp.eq.s32.totalorder %s13, 1
    %p31 = por %p29, %p30
    %p32 = scmp.ne.s32.totalorder %s21, %s22
    %p33 = scmp.eq.s32.totalorder %s13, 0
    %p34 = por %p32, %p33
    %p35 = scmp.ne.s32.totalorder %s21, %s22
    %p36 = scmp.eq.s32.totalorder %s14, 1
    %p37 = por %p35, %p36
    %p39 = scmp.ne.s32.totalorder %s22, %s38
    %p40 = scmp.eq.s32.totalorder %s14, 0
    %p41 = por %p39, %p40
    %s43 = sadd.s32 %s42, 1
    %p46 = scmp.eq.s32.totalorder %s8, 1
    %p47 = scmp.ne.s32.totalorder %s42, %s44
    %p48 = scmp.eq.s32.totalorder %s8, 0
    %p49 = por %p47, %p48
    %p50 = scmp.ne.s32.totalorder %s42, %s44
    %p51 = scmp.eq.s32.totalorder %s13, 1
    %p52 = por %p50, %p51
    %p53 = scmp.ne.s32.totalorder %s44, %s45
    %p54 = scmp.eq.s32.totalorder %s13, 0
    %p55 = por %p53, %p54
    %p56 = scmp.ne.s32.totalorder %s44, %s45
    %p57 = scmp.eq.s32.totalorder %s14, 1
    %p58 = por %p56, %p57
    %p60 = scmp.ne.s32.totalorder %s45, %s59
    %p61 = scmp.eq.s32.totalorder %s14, 0
    %p62 = por %p60, %p61
    %s63 = ssub.s32 %s8, %s15
    %p64 = scmp.eq.s32.totalorder %s63, 0
    %s66 = sadd.s32 %s65, 1
    %s67 = scalar_select %p64, %s65, %s66
    %p70 = pneg %p64
    %p71 = scmp.eq.s32.totalorder %s8, 1
    %p72 = por %p70, %p71
    %p73 = scmp.ne.s32.totalorder %s65, %s68
    %p74 = scmp.eq.s32.totalorder %s8, 0
    %p75 = por %p73, %p74
    %p76 = scmp.ne.s32.totalorder %s65, %s68
    %p77 = scmp.eq.s32.totalorder %s13, 1
    %p78 = por %p76, %p77
    %p79 = scmp.ne.s32.totalorder %s68, %s69
    %p80 = scmp.eq.s32.totalorder %s13, 0
    %p81 = por %p79, %p80
    %p82 = scmp.ne.s32.totalorder %s68, %s69
    %p83 = scmp.eq.s32.totalorder %s14, 1
    %p84 = por %p82, %p83
    %p86 = scmp.ne.s32.totalorder %s69, %s85
    %p87 = scmp.eq.s32.totalorder %s14, 0
    %p88 = por %p86, %p87
    %p89 = scmp.le.s32.totalorder 1, %s8
    %p90 = scmp.lt.s32.totalorder %s8, 3
    %p91 = pnand %p89, %p90
    %p92 = pneg %p91
    // Predicated region
    $region9: #{ff_rgb_forward.16} parent=5 // pred_check
      _
    $region10: #{ff_rgb_forward.16} parent=5 // pred_check_branch
      %94 = sbr.rel (%p91) target = $region12
    $region11: #{ff_rgb_forward.16} parent=5 // pred_region
      %s95 = ssub.s32 %s8, 1
      // Predicated region
      $region13: #{ff_rgb_forward.16} parent=11 // pred_check
        %p96 = pneg %p55
      $region14: #{ff_rgb_forward.16} parent=11 // pred_check_branch
        %98 = sbr.rel (%p96) target = $region16
      $region15: #{ff_rgb_forward.16} parent=11 // pred_region
        _
      $region16: #{ff_rgb_forward.16} parent=11 // pred_fallthru
        _
    $region12: #{ff_rgb_forward.16} parent=5 // pred_fallthru
      _
    %p99 = scmp.lt.s32.totalorder %s8, 2
    // Predicated region
    $region17: #{ff_rgb_forward.16} parent=5 // pred_check
      %p100 = pneg %p99
    $region18: #{ff_rgb_forward.16} parent=5 // pred_check_branch
      %102 = sbr.rel (%p100) target = $region20
    $region19: #{ff_rgb_forward.16} parent=5 // pred_region
      // Predicated region
      $region21: #{ff_rgb_forward.16} parent=19 // pred_check
        %p103 = pneg %p28
      $region22: #{ff_rgb_forward.16} parent=19 // pred_check_branch
        %105 = sbr.rel (%p103) target = $region24
      $region23: #{ff_rgb_forward.16} parent=19 // pred_region
        %p106 = scmp.lt.s32.totalorder %s8, 1
        %s107 = scalar_select %p106, %s8, 1
        %s108 = smul.addr %s107, 20
        %s109 = smul.addr %s108, 8
        %s110 = scalar_lea.vmem %s0, %s109
      $region24: #{ff_rgb_forward.16} parent=19 // pred_fallthru
        _
    $region20: #{ff_rgb_forward.16} parent=5 // pred_fallthru
      _
    %p111 = scmp.le.s32.totalorder 1, %s8
    %p112 = scmp.lt.s32.totalorder %s8, 3
    %p113 = pnand %p111, %p112
    %p114 = pneg %p113
    // Predicated region
    $region25: #{ff_rgb_forward.16} parent=5 // pred_check
      _
    $region26: #{ff_rgb_forward.16} parent=5 // pred_check_branch
      %116 = sbr.rel (%p113) target = $region28
    $region27: #{ff_rgb_forward.16} parent=5 // pred_region
      %s117 = ssub.s32 %s8, 1
      %p118 = scmp.lt.s32.totalorder %s13, 1
      %s119 = scalar_select %p118, %s13, 1
      %s120 = smul.addr %s119, 20
      %s121 = smul.addr %s120, 8
      %s122 = scalar_lea.vmem %s0, %s121
      %p123 = pneg %p34
      %p124 = pneg %p31
      %p125 = pneg %p55
      %p126 = pneg %p52
      %p127 = pneg %p81
      %p128 = pneg %p78
      %p129 = scmp.lt.s32.totalorder %s13, 1
      %s130 = scalar_select %p129, %s13, 1
      %s131 = smul.addr %s130, 8
      %s132 = smul.addr %s131, 4
      %s133 = scalar_lea.vmem %s2, %s132
      %p134 = scmp.lt.s32.totalorder %s13, 1
      %s135 = scalar_select %p134, %s13, 1
      %s136 = smul.addr %s135, 20
      %s137 = smul.addr %s136, 8
      %s138 = scalar_lea.vmem %s0, %s137
      %p139 = scmp.lt.s32.totalorder %s13, 1
      %s140 = scalar_select %p139, %s13, 1
      %s141 = smul.addr %s140, 8
      %s142 = smul.addr %s141, 4
      %s143 = scalar_lea.vmem %s2, %s142
      %v144 = vld [vmem:[%s138] sm:$0xff]
      %v145 = vld [vmem:[%s138 + $0x8] sm:$0x3]
      %v146 = vld [vmem:[%s138 + $0x10] sm:$0xff]
      %v147 = vld [vmem:[%s138 + $0x18] sm:$0x3]
      %v148 = vld [vmem:[%s138 + $0x20] sm:$0xff]
      %v149 = vld [vmem:[%s138 + $0x28] sm:$0x3]
      %v150 = vld [vmem:[%s138 + $0x30] sm:$0xff]
      %v151 = vld [vmem:[%s138 + $0x38] sm:$0x3]
      %v152 = vld [vmem:[%s138 + $0x40] sm:$0xff]
      %v153 = vld [vmem:[%s138 + $0x48] sm:$0x3]
      %v154 = vld [vmem:[%s138 + $0x50] sm:$0xff]
      %v155 = vld [vmem:[%s138 + $0x58] sm:$0x3]
      %v156 = vld [vmem:[%s138 + $0x60] sm:$0xff]
      %v157 = vld [vmem:[%s138 + $0x68] sm:$0x3]
      %v158 = vld [vmem:[%s138 + $0x70] sm:$0xff]
      %v159 = vld [vmem:[%s138 + $0x78] sm:$0x3]
      %v160 = vld [vmem:[%s138 + $0x80] sm:$0xff]
      %v161 = vld [vmem:[%s138 + $0x88] sm:$0x3]
      %v162 = vld [vmem:[%s138 + $0x90] sm:$0xff]
      %v163 = vld [vmem:[%s138 + $0x98] sm:$0x3]
      %v164 = vld [vmem:[%s1] sm:$0xff]
      %v165 = vld [vmem:[%s1 + $0x8] sm:$0x1]
      %v166 = vlaneseq
      %v167 = vshrl.u32 %v166, 7
      %v168 = vsub.s32 0, %v167
      %v169 = vrot.slane %v164, %v168
      %v170 = vmul.f32 %v144, %v169
      %v171 = vmul.f32 %v146, %v169
      %v172 = vmul.f32 %v148, %v169
      %v173 = vmul.f32 %v150, %v169
      %v174 = vmul.f32 %v152, %v169
      %v175 = vmul.f32 %v154, %v169
      %v176 = vmul.f32 %v156, %v169
      %v177 = vmul.f32 %v158, %v169
      %v178 = vadd.f32 %v170, 0.0
      %v179 = vadd.f32 %v171, 0.0
      %v180 = vadd.f32 %v172, 0.0
      %v181 = vadd.f32 %v173, 0.0
      %v182 = vadd.f32 %v174, 0.0
      %v183 = vadd.f32 %v175, 0.0
      %v184 = vadd.f32 %v176, 0.0
      %v185 = vadd.f32 %v177, 0.0
      %v186 = vlaneseq
      %v187 = vshrl.u32 %v186, 7
      %v188 = vsub.s32 1, %v187
      %v189 = vrot.slane %v164, %v188
      %v190 = vmul.f32 %v144, %v189
      %v191 = vmul.f32 %v145, %v189
      %v192 = vmul.f32 %v146, %v189
      %v193 = vmul.f32 %v147, %v189
      %v194 = vmul.f32 %v148, %v189
      %v195 = vmul.f32 %v149, %v189
      %v196 = vmul.f32 %v150, %v189
      %v197 = vmul.f32 %v151, %v189
      %v198 = vmul.f32 %v152, %v189
      %v199 = vmul.f32 %v153, %v189
      %v200 = vmul.f32 %v154, %v189
      %v201 = vmul.f32 %v155, %v189
      %v202 = vmul.f32 %v156, %v189
      %v203 = vmul.f32 %v157, %v189
      %v204 = vmul.f32 %v158, %v189
      %v205 = vmul.f32 %v159, %v189
      %vm222 = vcmask 1046528
      %v223 = vrot.slane %v190, 1
      %v224 = vrot.slane %v191, 1
      %v225 = vsel %vm222, %v223, %v224
      %v226 = vrot.slane %v192, 1
      %v227 = vrot.slane %v193, 1
      %v228 = vsel %vm222, %v226, %v227
      %v229 = vrot.slane %v194, 1
      %v230 = vrot.slane %v195, 1
      %v231 = vsel %vm222, %v229, %v230
      %v232 = vrot.slane %v196, 1
      %v233 = vrot.slane %v197, 1
      %v234 = vsel %vm222, %v232, %v233
      %v235 = vrot.slane %v198, 1
      %v236 = vrot.slane %v199, 1
      %v237 = vsel %vm222, %v235, %v236
      %v238 = vrot.slane %v200, 1
      %v239 = vrot.slane %v201, 1
      %v240 = vsel %vm222, %v238, %v239
      %v241 = vrot.slane %v202, 1
      %v242 = vrot.slane %v203, 1
      %v243 = vsel %vm222, %v241, %v242
      %v244 = vrot.slane %v204, 1
      %v245 = vrot.slane %v205, 1
      %v246 = vsel %vm222, %v244, %v245
      %v255 = vadd.f32 %v178, %v225
      %v256 = vadd.f32 %v179, %v228
      %v257 = vadd.f32 %v180, %v231
      %v258 = vadd.f32 %v181, %v234
      %v259 = vadd.f32 %v182, %v237
      %v260 = vadd.f32 %v183, %v240
      %v261 = vadd.f32 %v184, %v243
      %v262 = vadd.f32 %v185, %v246
      %v263 = vlaneseq
      %v264 = vshrl.u32 %v263, 7
      %v265 = vsub.s32 2, %v264
      %v266 = vrot.slane %v164, %v265
      %v267 = vmul.f32 %v144, %v266
      %v268 = vmul.f32 %v145, %v266
      %v269 = vmul.f32 %v146, %v266
      %v270 = vmul.f32 %v147, %v266
      %v271 = vmul.f32 %v148, %v266
      %v272 = vmul.f32 %v149, %v266
      %v273 = vmul.f32 %v150, %v266
      %v274 = vmul.f32 %v151, %v266
      %v275 = vmul.f32 %v152, %v266
      %v276 = vmul.f32 %v153, %v266
      %v277 = vmul.f32 %v154, %v266
      %v278 = vmul.f32 %v155, %v266
      %v279 = vmul.f32 %v156, %v266
      %v280 = vmul.f32 %v157, %v266
      %v281 = vmul.f32 %v158, %v266
      %v282 = vmul.f32 %v159, %v266
      %vm299 = vcmask 1045504
      %v300 = vrot.slane %v267, 2
      %v301 = vrot.slane %v268, 2
      %v302 = vsel %vm299, %v300, %v301
      %v303 = vrot.slane %v269, 2
      %v304 = vrot.slane %v270, 2
      %v305 = vsel %vm299, %v303, %v304
      %v306 = vrot.slane %v271, 2
      %v307 = vrot.slane %v272, 2
      %v308 = vsel %vm299, %v306, %v307
      %v309 = vrot.slane %v273, 2
      %v310 = vrot.slane %v274, 2
      %v311 = vsel %vm299, %v309, %v310
      %v312 = vrot.slane %v275, 2
      %v313 = vrot.slane %v276, 2
      %v314 = vsel %vm299, %v312, %v313
      %v315 = vrot.slane %v277, 2
      %v316 = vrot.slane %v278, 2
      %v317 = vsel %vm299, %v315, %v316
      %v318 = vrot.slane %v279, 2
      %v319 = vrot.slane %v280, 2
      %v320 = vsel %vm299, %v318, %v319
      %v321 = vrot.slane %v281, 2
      %v322 = vrot.slane %v282, 2
      %v323 = vsel %vm299, %v321, %v322
      %v332 = vadd.f32 %v255, %v302
      %v333 = vadd.f32 %v256, %v305
      %v334 = vadd.f32 %v257, %v308
      %v335 = vadd.f32 %v258, %v311
      %v336 = vadd.f32 %v259, %v314
      %v337 = vadd.f32 %v260, %v317
      %v338 = vadd.f32 %v261, %v320
      %v339 = vadd.f32 %v262, %v323
      %v340 = vlaneseq
      %v341 = vshrl.u32 %v340, 7
      %v342 = vsub.s32 3, %v341
      %v343 = vrot.slane %v164, %v342
      %v344 = vmul.f32 %v146, %v343
      %v345 = vmul.f32 %v148, %v343
      %v346 = vmul.f32 %v150, %v343
      %v347 = vmul.f32 %v152, %v343
      %v348 = vmul.f32 %v154, %v343
      %v349 = vmul.f32 %v156, %v343
      %v350 = vmul.f32 %v158, %v343
      %v351 = vmul.f32 %v160, %v343
      %v352 = vadd.f32 %v332, %v344
      %v353 = vadd.f32 %v333, %v345
      %v354 = vadd.f32 %v334, %v346
      %v355 = vadd.f32 %v335, %v347
      %v356 = vadd.f32 %v336, %v348
      %v357 = vadd.f32 %v337, %v349
      %v358 = vadd.f32 %v338, %v350
      %v359 = vadd.f32 %v339, %v351
      %v360 = vlaneseq
      %v361 = vshrl.u32 %v360, 7
      %v362 = vsub.s32 4, %v361
      %v363 = vrot.slane %v164, %v362
      %v364 = vmul.f32 %v146, %v363
      %v365 = vmul.f32 %v147, %v363
      %v366 = vmul.f32 %v148, %v363
      %v367 = vmul.f32 %v149, %v363
      %v368 = vmul.f32 %v150, %v363
      %v369 = vmul.f32 %v151, %v363
      %v370 = vmul.f32 %v152, %v363
      %v371 = vmul.f32 %v153, %v363
      %v372 = vmul.f32 %v154, %v363
      %v373 = vmul.f32 %v155, %v363
      %v374 = vmul.f32 %v156, %v363
      %v375 = vmul.f32 %v157, %v363
      %v376 = vmul.f32 %v158, %v363
      %v377 = vmul.f32 %v159, %v363
      %v378 = vmul.f32 %v160, %v363
      %v379 = vmul.f32 %v161, %v363
      %v396 = vrot.slane %v364, 1
      %v397 = vrot.slane %v365, 1
      %v398 = vsel %vm222, %v396, %v397
      %v399 = vrot.slane %v366, 1
      %v400 = vrot.slane %v367, 1
      %v401 = vsel %vm222, %v399, %v400
      %v402 = vrot.slane %v368, 1
      %v403 = vrot.slane %v369, 1
      %v404 = vsel %vm222, %v402, %v403
      %v405 = vrot.slane %v370, 1
      %v406 = vrot.slane %v371, 1
      %v407 = vsel %vm222, %v405, %v406
      %v408 = vrot.slane %v372, 1
      %v409 = vrot.slane %v373, 1
      %v410 = vsel %vm222, %v408, %v409
      %v411 = vrot.slane %v374, 1
      %v412 = vrot.slane %v375, 1
      %v413 = vsel %vm222, %v411, %v412
      %v414 = vrot.slane %v376, 1
      %v415 = vrot.slane %v377, 1
      %v416 = vsel %vm222, %v414, %v415
      %v417 = vrot.slane %v378, 1
      %v418 = vrot.slane %v379, 1
      %v419 = vsel %vm222, %v417, %v418
      %v428 = vadd.f32 %v352, %v398
      %v429 = vadd.f32 %v353, %v401
      %v430 = vadd.f32 %v354, %v404
      %v431 = vadd.f32 %v355, %v407
      %v432 = vadd.f32 %v356, %v410
      %v433 = vadd.f32 %v357, %v413
      %v434 = vadd.f32 %v358, %v416
      %v435 = vadd.f32 %v359, %v419
      %v436 = vlaneseq
      %v437 = vshrl.u32 %v436, 7
      %v438 = vsub.s32 5, %v437
      %v439 = vrot.slane %v164, %v438
      %v440 = vmul.f32 %v146, %v439
      %v441 = vmul.f32 %v147, %v439
      %v442 = vmul.f32 %v148, %v439
      %v443 = vmul.f32 %v149, %v439
      %v444 = vmul.f32 %v150, %v439
      %v445 = vmul.f32 %v151, %v439
      %v446 = vmul.f32 %v152, %v439
      %v447 = vmul.f32 %v153, %v439
      %v448 = vmul.f32 %v154, %v439
      %v449 = vmul.f32 %v155, %v439
      %v450 = vmul.f32 %v156, %v439
      %v451 = vmul.f32 %v157, %v439
      %v452 = vmul.f32 %v158, %v439
      %v453 = vmul.f32 %v159, %v439
      %v454 = vmul.f32 %v160, %v439
      %v455 = vmul.f32 %v161, %v439
      %v472 = vrot.slane %v440, 2
      %v473 = vrot.slane %v441, 2
      %v474 = vsel %vm299, %v472, %v473
      %v475 = vrot.slane %v442, 2
      %v476 = vrot.slane %v443, 2
      %v477 = vsel %vm299, %v475, %v476
      %v478 = vrot.slane %v444, 2
      %v479 = vrot.slane %v445, 2
      %v480 = vsel %vm299, %v478, %v479
      %v481 = vrot.slane %v446, 2
      %v482 = vrot.slane %v447, 2
      %v483 = vsel %vm299, %v481, %v482
      %v484 = vrot.slane %v448, 2
      %v485 = vrot.slane %v449, 2
      %v486 = vsel %vm299, %v484, %v485
      %v487 = vrot.slane %v450, 2
      %v488 = vrot.slane %v451, 2
      %v489 = vsel %vm299, %v487, %v488
      %v490 = vrot.slane %v452, 2
      %v491 = vrot.slane %v453, 2
      %v492 = vsel %vm299, %v490, %v491
      %v493 = vrot.slane %v454, 2
      %v494 = vrot.slane %v455, 2
      %v495 = vsel %vm299, %v493, %v494
      %v504 = vadd.f32 %v428, %v474
      %v505 = vadd.f32 %v429, %v477
      %v506 = vadd.f32 %v430, %v480
      %v507 = vadd.f32 %v431, %v483
      %v508 = vadd.f32 %v432, %v486
      %v509 = vadd.f32 %v433, %v489
      %v510 = vadd.f32 %v434, %v492
      %v511 = vadd.f32 %v435, %v495
      %v512 = vlaneseq
      %v513 = vshrl.u32 %v512, 7
      %v514 = vsub.s32 6, %v513
      %v515 = vrot.slane %v164, %v514
      %v516 = vmul.f32 %v148, %v515
      %v517 = vmul.f32 %v150, %v515
      %v518 = vmul.f32 %v152, %v515
      %v519 = vmul.f32 %v154, %v515
      %v520 = vmul.f32 %v156, %v515
      %v521 = vmul.f32 %v158, %v515
      %v522 = vmul.f32 %v160, %v515
      %v523 = vmul.f32 %v162, %v515
      %v524 = vadd.f32 %v504, %v516
      %v525 = vadd.f32 %v505, %v517
      %v526 = vadd.f32 %v506, %v518
      %v527 = vadd.f32 %v507, %v519
      %v528 = vadd.f32 %v508, %v520
      %v529 = vadd.f32 %v509, %v521
      %v530 = vadd.f32 %v510, %v522
      %v531 = vadd.f32 %v511, %v523
      %v532 = vlaneseq
      %v533 = vshrl.u32 %v532, 7
      %v534 = vsub.s32 7, %v533
      %v535 = vrot.slane %v164, %v534
      %v536 = vmul.f32 %v148, %v535
      %v537 = vmul.f32 %v149, %v535
      %v538 = vmul.f32 %v150, %v535
      %v539 = vmul.f32 %v151, %v535
      %v540 = vmul.f32 %v152, %v535
      %v541 = vmul.f32 %v153, %v535
      %v542 = vmul.f32 %v154, %v535
      %v543 = vmul.f32 %v155, %v535
      %v544 = vmul.f32 %v156, %v535
      %v545 = vmul.f32 %v157, %v535
      %v546 = vmul.f32 %v158, %v535
      %v547 = vmul.f32 %v159, %v535
      %v548 = vmul.f32 %v160, %v535
      %v549 = vmul.f32 %v161, %v535
      %v550 = vmul.f32 %v162, %v535
      %v551 = vmul.f32 %v163, %v535
      %v568 = vrot.slane %v536, 1
      %v569 = vrot.slane %v537, 1
      %v570 = vsel %vm222, %v568, %v569
      %v571 = vrot.slane %v538, 1
      %v572 = vrot.slane %v539, 1
      %v573 = vsel %vm222, %v571, %v572
      %v574 = vrot.slane %v540, 1
      %v575 = vrot.slane %v541, 1
      %v576 = vsel %vm222, %v574, %v575
      %v577 = vrot.slane %v542, 1
      %v578 = vrot.slane %v543, 1
      %v579 = vsel %vm222, %v577, %v578
      %v580 = vrot.slane %v544, 1
      %v581 = vrot.slane %v545, 1
      %v582 = vsel %vm222, %v580, %v581
      %v583 = vrot.slane %v546, 1
      %v584 = vrot.slane %v547, 1
      %v585 = vsel %vm222, %v583, %v584
      %v586 = vrot.slane %v548, 1
      %v587 = vrot.slane %v549, 1
      %v588 = vsel %vm222, %v586, %v587
      %v589 = vrot.slane %v550, 1
      %v590 = vrot.slane %v551, 1
      %v591 = vsel %vm222, %v589, %v590
      %v600 = vadd.f32 %v524, %v570
      %v601 = vadd.f32 %v525, %v573
      %v602 = vadd.f32 %v526, %v576
      %v603 = vadd.f32 %v527, %v579
      %v604 = vadd.f32 %v528, %v582
      %v605 = vadd.f32 %v529, %v585
      %v606 = vadd.f32 %v530, %v588
      %v607 = vadd.f32 %v531, %v591
      %v608 = vlaneseq
      %v609 = vshrl.u32 %v608, 7
      %v610 = vsub.s32 0, %v609
      %v611 = vrot.slane %v165, %v610
      %v612 = vmul.f32 %v148, %v611
      %v613 = vmul.f32 %v149, %v611
      %v614 = vmul.f32 %v150, %v611
      %v615 = vmul.f32 %v151, %v611
      %v616 = vmul.f32 %v152, %v611
      %v617 = vmul.f32 %v153, %v611
      %v618 = vmul.f32 %v154, %v611
      %v619 = vmul.f32 %v155, %v611
      %v620 = vmul.f32 %v156, %v611
      %v621 = vmul.f32 %v157, %v611
      %v622 = vmul.f32 %v158, %v611
      %v623 = vmul.f32 %v159, %v611
      %v624 = vmul.f32 %v160, %v611
      %v625 = vmul.f32 %v161, %v611
      %v626 = vmul.f32 %v162, %v611
      %v627 = vmul.f32 %v163, %v611
      %v644 = vrot.slane %v612, 2
      %v645 = vrot.slane %v613, 2
      %v646 = vsel %vm299, %v644, %v645
      %v647 = vrot.slane %v614, 2
      %v648 = vrot.slane %v615, 2
      %v649 = vsel %vm299, %v647, %v648
      %v650 = vrot.slane %v616, 2
      %v651 = vrot.slane %v617, 2
      %v652 = vsel %vm299, %v650, %v651
      %v653 = vrot.slane %v618, 2
      %v654 = vrot.slane %v619, 2
      %v655 = vsel %vm299, %v653, %v654
      %v656 = vrot.slane %v620, 2
      %v657 = vrot.slane %v621, 2
      %v658 = vsel %vm299, %v656, %v657
      %v659 = vrot.slane %v622, 2
      %v660 = vrot.slane %v623, 2
      %v661 = vsel %vm299, %v659, %v660
      %v662 = vrot.slane %v624, 2
      %v663 = vrot.slane %v625, 2
      %v664 = vsel %vm299, %v662, %v663
      %v665 = vrot.slane %v626, 2
      %v666 = vrot.slane %v627, 2
      %v667 = vsel %vm299, %v665, %v666
      %v676 = vadd.f32 %v600, %v646
      %v677 = vadd.f32 %v601, %v649
      %v678 = vadd.f32 %v602, %v652
      %v679 = vadd.f32 %v603, %v655
      %v680 = vadd.f32 %v604, %v658
      %v681 = vadd.f32 %v605, %v661
      %v682 = vadd.f32 %v606, %v664
      %v683 = vadd.f32 %v607, %v667
      %v684 = vmax.f32 %v676, 0.0
      %v685 = vmax.f32 %v677, 0.0
      %v686 = vmax.f32 %v678, 0.0
      %v687 = vmax.f32 %v679, 0.0
      %v688 = vmax.f32 %v680, 0.0
      %v689 = vmax.f32 %v681, 0.0
      %v690 = vmax.f32 %v682, 0.0
      %v691 = vmax.f32 %v683, 0.0
      %v692 = vpack.c.bf16 %v684, %v684
      %v693 = vpack.c.bf16 %v685, %v685
      %v694 = vpack.c.bf16 %v686, %v686
      %v695 = vpack.c.bf16 %v687, %v687
      %v696 = vpack.c.bf16 %v688, %v688
      %v697 = vpack.c.bf16 %v689, %v689
      %v698 = vpack.c.bf16 %v690, %v690
      %v699 = vpack.c.bf16 %v691, %v691
      %vm700 = vcmask 257024
      %701 = vst.msk [vmem:[%s143] sm:$0xf] %vm700, %v692
      %702 = vst.msk [vmem:[%s143 + $0x4] sm:$0xf] %vm700, %v693
      %703 = vst.msk [vmem:[%s143 + $0x8] sm:$0xf] %vm700, %v694
      %704 = vst.msk [vmem:[%s143 + $0xc] sm:$0xf] %vm700, %v695
      %705 = vst.msk [vmem:[%s143 + $0x10] sm:$0xf] %vm700, %v696
      %706 = vst.msk [vmem:[%s143 + $0x14] sm:$0xf] %vm700, %v697
      %707 = vst.msk [vmem:[%s143 + $0x18] sm:$0xf] %vm700, %v698
      %708 = vst.msk [vmem:[%s143 + $0x1c] sm:$0xf] %vm700, %v699
      %p709 = scmp.lt.s32.totalorder %s13, 1
      %s710 = scalar_select %p709, %s13, 1
      %s711 = smul.addr %s710, 8
      %s712 = smul.addr %s711, 4
      %s713 = scalar_lea.vmem %s2, %s712
      // Predicated region
      $region29: #{ff_rgb_forward.16} parent=27 // pred_check
        %p714 = pneg %p78
      $region30: #{ff_rgb_forward.16} parent=27 // pred_check_branch
        %716 = sbr.rel (%p714) target = $region32
      $region31: #{ff_rgb_forward.16} parent=27 // pred_region
        _
      $region32: #{ff_rgb_forward.16} parent=27 // pred_fallthru
        _
    $region28: #{ff_rgb_forward.16} parent=5 // pred_fallthru
      _
    %p717 = scmp.le.s32.totalorder 2, %s8
    // Predicated region
    $region33: #{ff_rgb_forward.16} parent=5 // pred_check
      %p718 = pneg %p717
    $region34: #{ff_rgb_forward.16} parent=5 // pred_check_branch
      %720 = sbr.rel (%p718) target = $region36
    $region35: #{ff_rgb_forward.16} parent=5 // pred_region
      %s721 = ssub.s32 %s8, 2
      // Predicated region
      $region37: #{ff_rgb_forward.16} parent=35 // pred_check
        %p722 = pneg %p84
      $region38: #{ff_rgb_forward.16} parent=35 // pred_check_branch
        %724 = sbr.rel (%p722) target = $region40
      $region39: #{ff_rgb_forward.16} parent=35 // pred_region
        %p725 = scmp.lt.s32.totalorder %s14, 1
        %s726 = scalar_select %p725, %s14, 1
        %s727 = smul.addr %s726, 8
        %s728 = smul.addr %s727, 4
        %s729 = scalar_lea.vmem %s2, %s728
      $region40: #{ff_rgb_forward.16} parent=35 // pred_fallthru
        _
    $region36: #{ff_rgb_forward.16} parent=5 // pred_fallthru
      _
  $region6: #{ff_rgb_forward.16} parent=0 // loop_footer
    %s12 = sadd.s32 1, %s8
  $region7: #{ff_rgb_forward.16} parent=0 // loop_footer_branch
    %7 = sbr.rel target = $region3
  $region8: #{ff_rgb_forward.16} parent=0 // loop_exit
    _

// kernel: ff_rgb_forward.15
$region0: #{ff_rgb_forward.15}
  #allocation0 [shape = 'u32[]', space=smem, size = 0x4, offset = 0x4, fixed_abs, tag = 'smem constant byte address 0x4 - core index']
  #allocation1 [shape = 'u32[144,128]{1,0:T(1,128)}', space=vmem, size = 0x12000, scoped, tag = 'internal scratch']
  %s0 = inlined_call_operand.vmem [shape: bf16[128,32], index: 0, kind: input, shape index: {}]
  %s1 = inlined_call_operand.vmem [shape: bf16[128,32], index: 1, kind: input, shape index: {}]
  %s2 = inlined_call_operand.vmem [shape: bf16[32,64], index: 2, kind: input, shape index: {}]
  %s3 = inlined_call_operand.vmem [shape: bf16[32,64], index: 3, kind: input, shape index: {}]
  %s4 = inlined_call_operand.vmem [shape: f32[128,32], index: 4, kind: output, shape index: {0}]
  %s5 = inlined_call_operand.vmem [shape: f32[128,32], index: 5, kind: output, shape index: {1}]
  %6 = xla_tuple %s4, %s5
  %s7 = sld [smem:[#allocation0]]
  $region34: #{ff_rgb_forward.15} parent=0
    _
  %s9 = ssub.s32 1, %s7
  %s10 = scalar_select 0, %s9, %s7
  // Predicated region
  $region2: #{ff_rgb_forward.15} parent=0 // pred_check
    _
  $region3: #{ff_rgb_forward.15} parent=0 // pred_check_branch
    %12 = sbr.rel (0) target = $region5
  $region4: #{ff_rgb_forward.15} parent=0 // pred_region
    _
  $region5: #{ff_rgb_forward.15} parent=0 // pred_fallthru
    _
  // Predicated region
  $region6: #{ff_rgb_forward.15} parent=0 // pred_check
    _
  $region7: #{ff_rgb_forward.15} parent=0 // pred_check_branch
    %14 = sbr.rel (0) target = $region9
  $region8: #{ff_rgb_forward.15} parent=0 // pred_region
    _
  $region9: #{ff_rgb_forward.15} parent=0 // pred_fallthru
    _
  // Predicated region
  $region10: #{ff_rgb_forward.15} parent=0 // pred_check
    _
  $region11: #{ff_rgb_forward.15} parent=0 // pred_check_branch
    %16 = sbr.rel (0) target = $region13
  $region12: #{ff_rgb_forward.15} parent=0 // pred_region
    _
  $region13: #{ff_rgb_forward.15} parent=0 // pred_fallthru
    _
  // Predicated region
  $region14: #{ff_rgb_forward.15} parent=0 // pred_check
    _
  $region15: #{ff_rgb_forward.15} parent=0 // pred_check_branch
    %18 = sbr.rel (0) target = $region17
  $region16: #{ff_rgb_forward.15} parent=0 // pred_region
    _
  $region17: #{ff_rgb_forward.15} parent=0 // pred_fallthru
    _
  %v20 = vld [vmem:[%s0] sm:$0xf]
  %v21 = vld [vmem:[%s0 + $0x4] sm:$0xf]
  %v22 = vld [vmem:[%s0 + $0x8] sm:$0xf]
  %v23 = vld [vmem:[%s0 + $0xc] sm:$0xf]
  %v24 = vld [vmem:[%s0 + $0x10] sm:$0xf]
  %v25 = vld [vmem:[%s0 + $0x14] sm:$0xf]
  %v26 = vld [vmem:[%s0 + $0x18] sm:$0xf]
  %v27 = vld [vmem:[%s0 + $0x1c] sm:$0xf]
  %v28 = vld [vmem:[%s0 + $0x20] sm:$0xf]
  %v29 = vld [vmem:[%s0 + $0x24] sm:$0xf]
  %v30 = vld [vmem:[%s0 + $0x28] sm:$0xf]
  %v31 = vld [vmem:[%s0 + $0x2c] sm:$0xf]
  %v32 = vld [vmem:[%s0 + $0x30] sm:$0xf]
  %v33 = vld [vmem:[%s0 + $0x34] sm:$0xf]
  %v34 = vld [vmem:[%s0 + $0x38] sm:$0xf]
  %v35 = vld [vmem:[%s0 + $0x3c] sm:$0xf]
  %v36 = vld [vmem:[%s2] sm:$0xf]
  %v37 = vld [vmem:[%s2 + $0x4] sm:$0xf]
  %v38 = vld [vmem:[%s2 + $0x8] sm:$0xf]
  %v39 = vld [vmem:[%s2 + $0xc] sm:$0xf]
  %v40 = vld [vmem:[%s1] sm:$0xf]
  %v41 = vld [vmem:[%s1 + $0x4] sm:$0xf]
  %v42 = vld [vmem:[%s1 + $0x8] sm:$0xf]
  %v43 = vld [vmem:[%s1 + $0xc] sm:$0xf]
  %v44 = vld [vmem:[%s1 + $0x10] sm:$0xf]
  %v45 = vld [vmem:[%s1 + $0x14] sm:$0xf]
  %v46 = vld [vmem:[%s1 + $0x18] sm:$0xf]
  %v47 = vld [vmem:[%s1 + $0x1c] sm:$0xf]
  %v48 = vld [vmem:[%s1 + $0x20] sm:$0xf]
  %v49 = vld [vmem:[%s1 + $0x24] sm:$0xf]
  %v50 = vld [vmem:[%s1 + $0x28] sm:$0xf]
  %v51 = vld [vmem:[%s1 + $0x2c] sm:$0xf]
  %v52 = vld [vmem:[%s1 + $0x30] sm:$0xf]
  %v53 = vld [vmem:[%s1 + $0x34] sm:$0xf]
  %v54 = vld [vmem:[%s1 + $0x38] sm:$0xf]
  %v55 = vld [vmem:[%s1 + $0x3c] sm:$0xf]
  %v56 = vld [vmem:[%s3] sm:$0xf]
  %v57 = vld [vmem:[%s3 + $0x4] sm:$0xf]
  %v58 = vld [vmem:[%s3 + $0x8] sm:$0xf]
  %v59 = vld [vmem:[%s3 + $0xc] sm:$0xf]
  %v76 = vunpack.c.l.b16 %v40
  %v77 = vunpack.c.l.b16 %v41
  %v78 = vunpack.c.l.b16 %v42
  %v79 = vunpack.c.l.b16 %v43
  %v80 = vunpack.c.l.b16 %v44
  %v81 = vunpack.c.l.b16 %v45
  %v82 = vunpack.c.l.b16 %v46
  %v83 = vunpack.c.l.b16 %v47
  %v84 = vunpack.c.l.b16 %v48
  %v85 = vunpack.c.l.b16 %v49
  %v86 = vunpack.c.l.b16 %v50
  %v87 = vunpack.c.l.b16 %v51
  %v88 = vunpack.c.l.b16 %v52
  %v89 = vunpack.c.l.b16 %v53
  %v90 = vunpack.c.l.b16 %v54
  %v91 = vunpack.c.l.b16 %v55
  %v92 = vpack.c.b16 %v77, %v76
  %v93 = vpack.c.b16 %v79, %v78
  %v94 = vpack.c.b16 %v81, %v80
  %v95 = vpack.c.b16 %v83, %v82
  %v96 = vpack.c.b16 %v85, %v84
  %v97 = vpack.c.b16 %v87, %v86
  %v98 = vpack.c.b16 %v89, %v88
  %v99 = vpack.c.b16 %v91, %v90
  %v104 = vunpack.c.l.b16 %v56
  %v105 = vunpack.c.l.b16 %v57
  %v106 = vunpack.c.l.b16 %v58
  %v107 = vunpack.c.l.b16 %v59
  %v108 = vpack.c.b16 %v105, %v104
  %v109 = vpack.c.b16 %v107, %v106
  %vm112 = vcmask 261120
  %v114 = vsel %vm112, %v92, 0
  %v117 = vsel %vm112, %v93, 0
  %v120 = vsel %vm112, %v94, 0
  %v123 = vsel %vm112, %v95, 0
  %v126 = vsel %vm112, %v96, 0
  %v129 = vsel %vm112, %v97, 0
  %v132 = vsel %vm112, %v98, 0
  %v135 = vsel %vm112, %v99, 0
  %137 = vmatprep.subr.bf16.mxu0 0
  %138 = vmatpush1.bf16.msra.mxu0 %v108
  %139 = vmatprep.subr.bf16.mxu0 0
  %140 = vmatpush1.bf16.msra.mxu0 %v109
  %141 = vmatprep.subr.bf16.mxu0 0
  %142 = vmatpush1.bf16.msra.mxu0 0
  %143 = vmatprep.subr.bf16.mxu0 0
  %144 = vmatpush1.bf16.msra.mxu0 0
  %145 = vmatprep.subr.bf16.mxu0 0
  %146 = vmatpush1.bf16.msra.mxu0 0
  %147 = vmatprep.subr.bf16.mxu0 0
  %148 = vmatpush1.bf16.msra.mxu0 0
  %149 = vmatprep.subr.bf16.mxu0 0
  %150 = vmatpush1.bf16.msra.mxu0 0
  %151 = vmatprep.subr.bf16.mxu0 0
  %152 = vmatpush1.bf16.msra.mxu0 0
  %153 = vmatprep.subr.bf16.mxu0 0
  %154 = vmatpush1.bf16.msra.mxu0 0
  %155 = vmatprep.subr.bf16.mxu0 0
  %156 = vmatpush1.bf16.msra.mxu0 0
  %157 = vmatprep.subr.bf16.mxu0 0
  %158 = vmatpush1.bf16.msra.mxu0 0
  %159 = vmatprep.subr.bf16.mxu0 0
  %160 = vmatpush1.bf16.msra.mxu0 0
  %161 = vmatprep.subr.bf16.mxu0 0
  %162 = vmatpush1.bf16.msra.mxu0 0
  %163 = vmatprep.subr.bf16.mxu0 0
  %164 = vmatpush1.bf16.msra.mxu0 0
  %165 = vmatprep.subr.bf16.mxu0 0
  %166 = vmatpush1.bf16.msra.mxu0 0
  %167 = vmatprep.subr.bf16.mxu0 0
  %168 = vmatpush1.bf16.msra.mxu0 0
  %169 = vmatprep.mubr.bf16.mxu0 0
  %170 = vmatmul.mubr.bf16.gmra.mrb[0].mxu0 %v114
  %v171 = vpop.f32.mrb[0].mxu0
  %v172 = vadd.f32 0.0, %v171
  %v173 = vpop.f32.mrb[0].mxu0
  %v174 = vpop.f32.mrb[0].mxu0
  %v175 = vadd.f32 0.0, %v174
  %v176 = vpop.f32.mrb[0].mxu0
  %177 = vmatprep.mubr.bf16.mxu0 0
  %178 = vmatmul.mubr.bf16.gmra.mrb[0].mxu0 %v117
  %v179 = vpop.f32.mrb[0].mxu0
  %v180 = vadd.f32 0.0, %v179
  %v181 = vpop.f32.mrb[0].mxu0
  %v182 = vpop.f32.mrb[0].mxu0
  %v183 = vadd.f32 0.0, %v182
  %v184 = vpop.f32.mrb[0].mxu0
  %185 = vmatprep.mubr.bf16.mxu0 0
  %186 = vmatmul.mubr.bf16.gmra.mrb[0].mxu0 %v120
  %v187 = vpop.f32.mrb[0].mxu0
  %v188 = vadd.f32 0.0, %v187
  %v189 = vpop.f32.mrb[0].mxu0
  %v190 = vpop.f32.mrb[0].mxu0
  %v191 = vadd.f32 0.0, %v190
  %v192 = vpop.f32.mrb[0].mxu0
  %193 = vmatprep.mubr.bf16.mxu0 0
  %194 = vmatmul.mubr.bf16.gmra.mrb[0].mxu0 %v123
  %v195 = vpop.f32.mrb[0].mxu0
  %v196 = vadd.f32 0.0, %v195
  %v197 = vpop.f32.mrb[0].mxu0
  %v198 = vpop.f32.mrb[0].mxu0
  %v199 = vadd.f32 0.0, %v198
  %v200 = vpop.f32.mrb[0].mxu0
  %201 = vmatprep.mubr.bf16.mxu0 0
  %202 = vmatmul.mubr.bf16.gmra.mrb[0].mxu0 %v126
  %v203 = vpop.f32.mrb[0].mxu0
  %v204 = vadd.f32 0.0, %v203
  %v205 = vpop.f32.mrb[0].mxu0
  %v206 = vpop.f32.mrb[0].mxu0
  %v207 = vadd.f32 0.0, %v206
  %v208 = vpop.f32.mrb[0].mxu0
  %209 = vmatprep.mubr.bf16.mxu0 0
  %210 = vmatmul.mubr.bf16.gmra.mrb[0].mxu0 %v129
  %v211 = vpop.f32.mrb[0].mxu0
  %v212 = vadd.f32 0.0, %v211
  %v213 = vpop.f32.mrb[0].mxu0
  %v214 = vpop.f32.mrb[0].mxu0
  %v215 = vadd.f32 0.0, %v214
  %v216 = vpop.f32.mrb[0].mxu0
  %217 = vmatprep.mubr.bf16.mxu0 0
  %218 = vmatmul.mubr.bf16.gmra.mrb[0].mxu0 %v132
  %v219 = vpop.f32.mrb[0].mxu0
  %v220 = vadd.f32 0.0, %v219
  %v221 = vpop.f32.mrb[0].mxu0
  %v222 = vpop.f32.mrb[0].mxu0
  %v223 = vadd.f32 0.0, %v222
  %v224 = vpop.f32.mrb[0].mxu0
  %225 = vmatprep.mubr.bf16.mxu0 0
  %226 = vmatmul.mubr.bf16.gmra.mrb[0].mxu0 %v135
  %v227 = vpop.f32.mrb[0].mxu0
  %v228 = vadd.f32 0.0, %v227
  %v229 = vpop.f32.mrb[0].mxu0
  %v230 = vpop.f32.mrb[0].mxu0
  %v231 = vadd.f32 0.0, %v230
  %v232 = vpop.f32.mrb[0].mxu0
  %233 = vdwg.mxu0
  %v250 = vunpack.c.l.b16 %v20
  %v251 = vunpack.c.l.b16 %v21
  %v252 = vunpack.c.l.b16 %v22
  %v253 = vunpack.c.l.b16 %v23
  %v254 = vunpack.c.l.b16 %v24
  %v255 = vunpack.c.l.b16 %v25
  %v256 = vunpack.c.l.b16 %v26
  %v257 = vunpack.c.l.b16 %v27
  %v258 = vunpack.c.l.b16 %v28
  %v259 = vunpack.c.l.b16 %v29
  %v260 = vunpack.c.l.b16 %v30
  %v261 = vunpack.c.l.b16 %v31
  %v262 = vunpack.c.l.b16 %v32
  %v263 = vunpack.c.l.b16 %v33
  %v264 = vunpack.c.l.b16 %v34
  %v265 = vunpack.c.l.b16 %v35
  %v266 = vpack.c.b16 %v251, %v250
  %v267 = vpack.c.b16 %v253, %v252
  %v268 = vpack.c.b16 %v255, %v254
  %v269 = vpack.c.b16 %v257, %v256
  %v270 = vpack.c.b16 %v259, %v258
  %v271 = vpack.c.b16 %v261, %v260
  %v272 = vpack.c.b16 %v263, %v262
  %v273 = vpack.c.b16 %v265, %v264
  %v278 = vunpack.c.l.b16 %v36
  %v279 = vunpack.c.l.b16 %v37
  %v280 = vunpack.c.l.b16 %v38
  %v281 = vunpack.c.l.b16 %v39
  %v282 = vpack.c.b16 %v279, %v278
  %v283 = vpack.c.b16 %v281, %v280
  %v287 = vsel %vm112, %v266, 0
  %v290 = vsel %vm112, %v267, 0
  %v293 = vsel %vm112, %v268, 0
  %v296 = vsel %vm112, %v269, 0
  %v299 = vsel %vm112, %v270, 0
  %v302 = vsel %vm112, %v271, 0
  %v305 = vsel %vm112, %v272, 0
  %v308 = vsel %vm112, %v273, 0
  %310 = vmatprep.subr.bf16.mxu0 0
  %311 = vmatpush1.bf16.msra.mxu0 %v282
  %312 = vmatprep.subr.bf16.mxu0 0
  %313 = vmatpush1.bf16.msra.mxu0 %v283
  %314 = vmatprep.subr.bf16.mxu0 0
  %315 = vmatpush1.bf16.msra.mxu0 0
  %316 = vmatprep.subr.bf16.mxu0 0
  %317 = vmatpush1.bf16.msra.mxu0 0
  %318 = vmatprep.subr.bf16.mxu0 0
  %319 = vmatpush1.bf16.msra.mxu0 0
  %320 = vmatprep.subr.bf16.mxu0 0
  %321 = vmatpush1.bf16.msra.mxu0 0
  %322 = vmatprep.subr.bf16.mxu0 0
  %323 = vmatpush1.bf16.msra.mxu0 0
  %324 = vmatprep.subr.bf16.mxu0 0
  %325 = vmatpush1.bf16.msra.mxu0 0
  %326 = vmatprep.subr.bf16.mxu0 0
  %327 = vmatpush1.bf16.msra.mxu0 0
  %328 = vmatprep.subr.bf16.mxu0 0
  %329 = vmatpush1.bf16.msra.mxu0 0
  %330 = vmatprep.subr.bf16.mxu0 0
  %331 = vmatpush1.bf16.msra.mxu0 0
  %332 = vmatprep.subr.bf16.mxu0 0
  %333 = vmatpush1.bf16.msra.mxu0 0
  %334 = vmatprep.subr.bf16.mxu0 0
  %335 = vmatpush1.bf16.msra.mxu0 0
  %336 = vmatprep.subr.bf16.mxu0 0
  %337 = vmatpush1.bf16.msra.mxu0 0
  %338 = vmatprep.subr.bf16.mxu0 0
  %339 = vmatpush1.bf16.msra.mxu0 0
  %340 = vmatprep.subr.bf16.mxu0 0
  %341 = vmatpush1.bf16.msra.mxu0 0
  %342 = vmatprep.mubr.bf16.mxu0 0
  %343 = vmatmul.mubr.bf16.gmra.mrb[0].mxu0 %v287
  %v344 = vpop.f32.mrb[0].mxu0
  %v345 = vadd.f32 %v172, %v344
  %v346 = vpop.f32.mrb[0].mxu0
  %v347 = vpop.f32.mrb[0].mxu0
  %v348 = vadd.f32 %v175, %v347
  %v349 = vpop.f32.mrb[0].mxu0
  %350 = vmatprep.mubr.bf16.mxu0 0
  %351 = vmatmul.mubr.bf16.gmra.mrb[0].mxu0 %v290
  %v352 = vpop.f32.mrb[0].mxu0
  %v353 = vadd.f32 %v180, %v352
  %v354 = vpop.f32.mrb[0].mxu0
  %v355 = vpop.f32.mrb[0].mxu0
  %v356 = vadd.f32 %v183, %v355
  %v357 = vpop.f32.mrb[0].mxu0
  %358 = vmatprep.mubr.bf16.mxu0 0
  %359 = vmatmul.mubr.bf16.gmra.mrb[0].mxu0 %v293
  %v360 = vpop.f32.mrb[0].mxu0
  %v361 = vadd.f32 %v188, %v360
  %v362 = vpop.f32.mrb[0].mxu0
  %v363 = vpop.f32.mrb[0].mxu0
  %v364 = vadd.f32 %v191, %v363
  %v365 = vpop.f32.mrb[0].mxu0
  %366 = vmatprep.mubr.bf16.mxu0 0
  %367 = vmatmul.mubr.bf16.gmra.mrb[0].mxu0 %v296
  %v368 = vpop.f32.mrb[0].mxu0
  %v369 = vadd.f32 %v196, %v368
  %v370 = vpop.f32.mrb[0].mxu0
  %v371 = vpop.f32.mrb[0].mxu0
  %v372 = vadd.f32 %v199, %v371
  %v373 = vpop.f32.mrb[0].mxu0
  %374 = vmatprep.mubr.bf16.mxu0 0
  %375 = vmatmul.mubr.bf16.gmra.mrb[0].mxu0 %v299
  %v376 = vpop.f32.mrb[0].mxu0
  %v377 = vadd.f32 %v204, %v376
  %v378 = vpop.f32.mrb[0].mxu0
  %v379 = vpop.f32.mrb[0].mxu0
  %v380 = vadd.f32 %v207, %v379
  %v381 = vpop.f32.mrb[0].mxu0
  %382 = vmatprep.mubr.bf16.mxu0 0
  %383 = vmatmul.mubr.bf16.gmra.mrb[0].mxu0 %v302
  %v384 = vpop.f32.mrb[0].mxu0
  %v385 = vadd.f32 %v212, %v384
  %v386 = vpop.f32.mrb[0].mxu0
  %v387 = vpop.f32.mrb[0].mxu0
  %v388 = vadd.f32 %v215, %v387
  %v389 = vpop.f32.mrb[0].mxu0
  %390 = vmatprep.mubr.bf16.mxu0 0
  %391 = vmatmul.mubr.bf16.gmra.mrb[0].mxu0 %v305
  %v392 = vpop.f32.mrb[0].mxu0
  %v393 = vadd.f32 %v220, %v392
  %v394 = vpop.f32.mrb[0].mxu0
  %v395 = vpop.f32.mrb[0].mxu0
  %v396 = vadd.f32 %v223, %v395
  %v397 = vpop.f32.mrb[0].mxu0
  %398 = vmatprep.mubr.bf16.mxu0 0
  %399 = vmatmul.mubr.bf16.gmra.mrb[0].mxu0 %v308
  %v400 = vpop.f32.mrb[0].mxu0
  %v401 = vadd.f32 %v228, %v400
  %v402 = vpop.f32.mrb[0].mxu0
  %v403 = vpop.f32.mrb[0].mxu0
  %v404 = vadd.f32 %v231, %v403
  %v405 = vpop.f32.mrb[0].mxu0
  %406 = vdwg.mxu0
  %407 = vst.msk [vmem:[%s4] sm:$0xff] %vm112, %v345
  %408 = vst.msk [vmem:[%s4 + $0x8] sm:$0xff] %vm112, %v348
  %409 = vst.msk [vmem:[%s4 + $0x10] sm:$0xff] %vm112, %v353
  %410 = vst.msk [vmem:[%s4 + $0x18] sm:$0xff] %vm112, %v356
  %411 = vst.msk [vmem:[%s4 + $0x20] sm:$0xff] %vm112, %v361
  %412 = vst.msk [vmem:[%s4 + $0x28] sm:$0xff] %vm112, %v364
  %413 = vst.msk [vmem:[%s4 + $0x30] sm:$0xff] %vm112, %v369
  %414 = vst.msk [vmem:[%s4 + $0x38] sm:$0xff] %vm112, %v372
  %415 = vst.msk [vmem:[%s4 + $0x40] sm:$0xff] %vm112, %v377
  %416 = vst.msk [vmem:[%s4 + $0x48] sm:$0xff] %vm112, %v380
  %417 = vst.msk [vmem:[%s4 + $0x50] sm:$0xff] %vm112, %v385
  %418 = vst.msk [vmem:[%s4 + $0x58] sm:$0xff] %vm112, %v388
  %419 = vst.msk [vmem:[%s4 + $0x60] sm:$0xff] %vm112, %v393
  %420 = vst.msk [vmem:[%s4 + $0x68] sm:$0xff] %vm112, %v396
  %421 = vst.msk [vmem:[%s4 + $0x70] sm:$0xff] %vm112, %v401
  %422 = vst.msk [vmem:[%s4 + $0x78] sm:$0xff] %vm112, %v404
  %439 = vrot.lane.b32.xlu0 %v345, 96
  %v440 = vpop.permute.xlu0 %439
  %441 = vrot.lane.b32.xlu0 %v348, 96
  %v442 = vpop.permute.xlu0 %441
  %443 = vrot.lane.b32.xlu0 %v353, 96
  %v444 = vpop.permute.xlu0 %443
  %445 = vrot.lane.b32.xlu0 %v356, 96
  %v446 = vpop.permute.xlu0 %445
  %447 = vrot.lane.b32.xlu0 %v361, 96
  %v448 = vpop.permute.xlu0 %447
  %449 = vrot.lane.b32.xlu0 %v364, 96
  %v450 = vpop.permute.xlu0 %449
  %451 = vrot.lane.b32.xlu0 %v369, 96
  %v452 = vpop.permute.xlu0 %451
  %453 = vrot.lane.b32.xlu0 %v372, 96
  %v454 = vpop.permute.xlu0 %453
  %455 = vrot.lane.b32.xlu0 %v377, 96
  %v456 = vpop.permute.xlu0 %455
  %457 = vrot.lane.b32.xlu0 %v380, 96
  %v458 = vpop.permute.xlu0 %457
  %459 = vrot.lane.b32.xlu0 %v385, 96
  %v460 = vpop.permute.xlu0 %459
  %461 = vrot.lane.b32.xlu0 %v388, 96
  %v462 = vpop.permute.xlu0 %461
  %463 = vrot.lane.b32.xlu0 %v393, 96
  %v464 = vpop.permute.xlu0 %463
  %465 = vrot.lane.b32.xlu0 %v396, 96
  %v466 = vpop.permute.xlu0 %465
  %467 = vrot.lane.b32.xlu0 %v401, 96
  %v468 = vpop.permute.xlu0 %467
  %469 = vrot.lane.b32.xlu0 %v404, 96
  %v470 = vpop.permute.xlu0 %469
  %487 = vst.msk [vmem:[%s5] sm:$0xff] %vm112, %v440
  %488 = vst.msk [vmem:[%s5 + $0x8] sm:$0xff] %vm112, %v442
  %489 = vst.msk [vmem:[%s5 + $0x10] sm:$0xff] %vm112, %v444
  %490 = vst.msk [vmem:[%s5 + $0x18] sm:$0xff] %vm112, %v446
  %491 = vst.msk [vmem:[%s5 + $0x20] sm:$0xff] %vm112, %v448
  %492 = vst.msk [vmem:[%s5 + $0x28] sm:$0xff] %vm112, %v450
  %493 = vst.msk [vmem:[%s5 + $0x30] sm:$0xff] %vm112, %v452
  %494 = vst.msk [vmem:[%s5 + $0x38] sm:$0xff] %vm112, %v454
  %495 = vst.msk [vmem:[%s5 + $0x40] sm:$0xff] %vm112, %v456
  %496 = vst.msk [vmem:[%s5 + $0x48] sm:$0xff] %vm112, %v458
  %497 = vst.msk [vmem:[%s5 + $0x50] sm:$0xff] %vm112, %v460
  %498 = vst.msk [vmem:[%s5 + $0x58] sm:$0xff] %vm112, %v462
  %499 = vst.msk [vmem:[%s5 + $0x60] sm:$0xff] %vm112, %v464
  %500 = vst.msk [vmem:[%s5 + $0x68] sm:$0xff] %vm112, %v466
  %501 = vst.msk [vmem:[%s5 + $0x70] sm:$0xff] %vm112, %v468
  %502 = vst.msk [vmem:[%s5 + $0x78] sm:$0xff] %vm112, %v470
  // Predicated region
  $region18: #{ff_rgb_forward.15} parent=0 // pred_check
    _
  $region19: #{ff_rgb_forward.15} parent=0 // pred_check_branch
    %504 = sbr.rel (0) target = $region21
  $region20: #{ff_rgb_forward.15} parent=0 // pred_region
    _
  $region21: #{ff_rgb_forward.15} parent=0 // pred_fallthru
    _
  // Predicated region
  $region22: #{ff_rgb_forward.15} parent=0 // pred_check
    _
  $region23: #{ff_rgb_forward.15} parent=0 // pred_check_branch
    %506 = sbr.rel (0) target = $region25
  $region24: #{ff_rgb_forward.15} parent=0 // pred_region
    _
  $region25: #{ff_rgb_forward.15} parent=0 // pred_fallthru
    _
  // Predicated region
  $region26: #{ff_rgb_forward.15} parent=0 // pred_check
    _
  $region27: #{ff_rgb_forward.15} parent=0 // pred_check_branch
    %508 = sbr.rel (0) target = $region29
  $region28: #{ff_rgb_forward.15} parent=0 // pred_region
    _
  $region29: #{ff_rgb_forward.15} parent=0 // pred_fallthru
    _
  // Predicated region
  $region30: #{ff_rgb_forward.15} parent=0 // pred_check
    _
  $region31: #{ff_rgb_forward.15} parent=0 // pred_check_branch
    %510 = sbr.rel (0) target = $region33
  $region32: #{ff_rgb_forward.15} parent=0 // pred_region
    _
  $region33: #{ff_rgb_forward.15} parent=0 // pred_fallthru
    _

// kernel: ff_rgb_forward.13
$region0: #{ff_rgb_forward.13}
  #allocation0 [shape = 'u32[]', space=smem, size = 0x4, offset = 0x4, fixed_abs, tag = 'smem constant byte address 0x4 - core index']
  #allocation1 [shape = 'u32[144,128]{1,0:T(1,128)}', space=vmem, size = 0x12000, scoped, tag = 'internal scratch']
  %s0 = inlined_call_operand.vmem [shape: bf16[2,64,96], index: 0, kind: input, shape index: {}]
  %s1 = inlined_call_operand.vmem [shape: bf16[2,64,64], index: 1, kind: input, shape index: {}]
  %s2 = inlined_call_operand.vmem [shape: bf16[32,32], index: 2, kind: input, shape index: {}]
  %s3 = inlined_call_operand.vmem [shape: f32[1,32], index: 3, kind: input, shape index: {}]
  %s4 = inlined_call_operand.vmem [shape: bf16[2,64,32], index: 4, kind: input, shape index: {}]
  %s5 = inlined_call_operand.vmem [shape: f32[1,32], index: 5, kind: input, shape index: {}]
  %s6 = inlined_call_operand.vmem [shape: f32[1,32], index: 6, kind: input, shape index: {}]
  %s7 = inlined_call_operand.vmem [shape: bf16[2,64,32], index: 7, kind: output, shape index: {}]
  %s8 = sld [smem:[#allocation0]]
  $region61: #{ff_rgb_forward.13} parent=0
    _
  %s10 = ssub.s32 1, %s8
  %s11 = scalar_select 0, %s10, %s8
  loop: start=0, step=1, limit=4
  $region2: #{ff_rgb_forward.13} parent=0 // loop_pre_header
    _
  $region3: #{ff_rgb_forward.13} parent=0 // loop_header
    %s13 = sphi 0, %s17
    %p14 = scmp.ge.s32.totalorder %s13, 4
    %s23 = sphi 0, %s25
    %s26 = sphi 0, %s23
    %s27 = sphi 0, %s26
    %s43 = sphi 0, %s27
    %s49 = sphi 0, %s51
    %s52 = sphi 0, %s49
    %s53 = sphi 0, %s52
    %s69 = sphi 0, %s53
    %s73 = sphi 0, %s73
    %s75 = sphi 0, %s73
    %s76 = sphi 0, %s75
    %s90 = sphi 0, %s76
    %s94 = sphi 0, %s94
    %s96 = sphi 0, %s94
    %s97 = sphi 0, %s96
    %s111 = sphi 0, %s97
    %s117 = sphi 0, %s119
    %s120 = sphi 0, %s117
    %s121 = sphi 0, %s120
    %s137 = sphi 0, %s121
    %s141 = sphi 0, %s141
    %s143 = sphi 0, %s141
    %s144 = sphi 0, %s143
    %s158 = sphi 0, %s144
    %s162 = sphi 0, %s162
    %s164 = sphi 0, %s162
    %s165 = sphi 0, %s164
    %s179 = sphi 0, %s165
    %s185 = sphi 0, %s187
    %s188 = sphi 0, %s185
    %s189 = sphi 0, %s188
    %s205 = sphi 0, %s189
  $region4: #{ff_rgb_forward.13} parent=0 // loop_header_branch
    %16 = sbr.rel (%p14) target = $region8
  $region5: #{ff_rgb_forward.13} parent=0 // loop_body
    %s18 = ssub.s32 %s13, 1
    %s19 = ssub.s32 %s13, 2
    %s20 = sadd.s32 %s13, 1
    %s21 = ssub.s32 %s13, %s20
    %p22 = scmp.eq.s32.totalorder %s21, 0
    %s24 = sadd.s32 %s23, 1
    %s25 = scalar_select %p22, %s23, %s24
    %p28 = pneg %p22
    %p29 = scmp.eq.s32.totalorder %s13, 1
    %p30 = por %p28, %p29
    %p31 = scmp.ne.s32.totalorder %s23, %s26
    %p32 = scmp.eq.s32.totalorder %s13, 0
    %p33 = por %p31, %p32
    %p34 = scmp.ne.s32.totalorder %s23, %s26
    %p35 = scmp.eq.s32.totalorder %s18, 1
    %p36 = por %p34, %p35
    %p37 = scmp.ne.s32.totalorder %s26, %s27
    %p38 = scmp.eq.s32.totalorder %s18, 0
    %p39 = por %p37, %p38
    %p40 = scmp.ne.s32.totalorder %s26, %s27
    %p41 = scmp.eq.s32.totalorder %s19, 1
    %p42 = por %p40, %p41
    %p44 = scmp.ne.s32.totalorder %s27, %s43
    %p45 = scmp.eq.s32.totalorder %s19, 0
    %p46 = por %p44, %p45
    %s47 = ssub.s32 %s13, %s20
    %p48 = scmp.eq.s32.totalorder %s47, 0
    %s50 = sadd.s32 %s49, 1
    %s51 = scalar_select %p48, %s49, %s50
    %p54 = pneg %p48
    %p55 = scmp.eq.s32.totalorder %s13, 1
    %p56 = por %p54, %p55
    %p57 = scmp.ne.s32.totalorder %s49, %s52
    %p58 = scmp.eq.s32.totalorder %s13, 0
    %p59 = por %p57, %p58
    %p60 = scmp.ne.s32.totalorder %s49, %s52
    %p61 = scmp.eq.s32.totalorder %s18, 1
    %p62 = por %p60, %p61
    %p63 = scmp.ne.s32.totalorder %s52, %s53
    %p64 = scmp.eq.s32.totalorder %s18, 0
    %p65 = por %p63, %p64
    %p66 = scmp.ne.s32.totalorder %s52, %s53
    %p67 = scmp.eq.s32.totalorder %s19, 1
    %p68 = por %p66, %p67
    %p70 = scmp.ne.s32.totalorder %s53, %s69
    %p71 = scmp.eq.s32.totalorder %s19, 0
    %p72 = por %p70, %p71
    %s74 = sadd.s32 %s73, 1
    %p77 = scmp.eq.s32.totalorder %s13, 1
    %p78 = scmp.ne.s32.totalorder %s73, %s75
    %p79 = scmp.eq.s32.totalorder %s13, 0
    %p80 = por %p78, %p79
    %p81 = scmp.ne.s32.totalorder %s73, %s75
    %p82 = scmp.eq.s32.totalorder %s18, 1
    %p83 = por %p81, %p82
    %p84 = scmp.ne.s32.totalorder %s75, %s76
    %p85 = scmp.eq.s32.totalorder %s18, 0
    %p86 = por %p84, %p85
    %p87 = scmp.ne.s32.totalorder %s75, %s76
    %p88 = scmp.eq.s32.totalorder %s19, 1
    %p89 = por %p87, %p88
    %p91 = scmp.ne.s32.totalorder %s76, %s90
    %p92 = scmp.eq.s32.totalorder %s19, 0
    %p93 = por %p91, %p92
    %s95 = sadd.s32 %s94, 1
    %p98 = scmp.eq.s32.totalorder %s13, 1
    %p99 = scmp.ne.s32.totalorder %s94, %s96
    %p100 = scmp.eq.s32.totalorder %s13, 0
    %p101 = por %p99, %p100
    %p102 = scmp.ne.s32.totalorder %s94, %s96
    %p103 = scmp.eq.s32.totalorder %s18, 1
    %p104 = por %p102, %p103
    %p105 = scmp.ne.s32.totalorder %s96, %s97
    %p106 = scmp.eq.s32.totalorder %s18, 0
    %p107 = por %p105, %p106
    %p108 = scmp.ne.s32.totalorder %s96, %s97
    %p109 = scmp.eq.s32.totalorder %s19, 1
    %p110 = por %p108, %p109
    %p112 = scmp.ne.s32.totalorder %s97, %s111
    %p113 = scmp.eq.s32.totalorder %s19, 0
    %p114 = por %p112, %p113
    %s115 = ssub.s32 %s13, %s20
    %p116 = scmp.eq.s32.totalorder %s115, 0
    %s118 = sadd.s32 %s117, 1
    %s119 = scalar_select %p116, %s117, %s118
    %p122 = pneg %p116
    %p123 = scmp.eq.s32.totalorder %s13, 1
    %p124 = por %p122, %p123
    %p125 = scmp.ne.s32.totalorder %s117, %s120
    %p126 = scmp.eq.s32.totalorder %s13, 0
    %p127 = por %p125, %p126
    %p128 = scmp.ne.s32.totalorder %s117, %s120
    %p129 = scmp.eq.s32.totalorder %s18, 1
    %p130 = por %p128, %p129
    %p131 = scmp.ne.s32.totalorder %s120, %s121
    %p132 = scmp.eq.s32.totalorder %s18, 0
    %p133 = por %p131, %p132
    %p134 = scmp.ne.s32.totalorder %s120, %s121
    %p135 = scmp.eq.s32.totalorder %s19, 1
    %p136 = por %p134, %p135
    %p138 = scmp.ne.s32.totalorder %s121, %s137
    %p139 = scmp.eq.s32.totalorder %s19, 0
    %p140 = por %p138, %p139
    %s142 = sadd.s32 %s141, 1
    %p145 = scmp.eq.s32.totalorder %s13, 1
    %p146 = scmp.ne.s32.totalorder %s141, %s143
    %p147 = scmp.eq.s32.totalorder %s13, 0
    %p148 = por %p146, %p147
    %p149 = scmp.ne.s32.totalorder %s141, %s143
    %p150 = scmp.eq.s32.totalorder %s18, 1
    %p151 = por %p149, %p150
    %p152 = scmp.ne.s32.totalorder %s143, %s144
    %p153 = scmp.eq.s32.totalorder %s18, 0
    %p154 = por %p152, %p153
    %p155 = scmp.ne.s32.totalorder %s143, %s144
    %p156 = scmp.eq.s32.totalorder %s19, 1
    %p157 = por %p155, %p156
    %p159 = scmp.ne.s32.totalorder %s144, %s158
    %p160 = scmp.eq.s32.totalorder %s19, 0
    %p161 = por %p159, %p160
    %s163 = sadd.s32 %s162, 1
    %p166 = scmp.eq.s32.totalorder %s13, 1
    %p167 = scmp.ne.s32.totalorder %s162, %s164
    %p168 = scmp.eq.s32.totalorder %s13, 0
    %p169 = por %p167, %p168
    %p170 = scmp.ne.s32.totalorder %s162, %s164
    %p171 = scmp.eq.s32.totalorder %s18, 1
    %p172 = por %p170, %p171
    %p173 = scmp.ne.s32.totalorder %s164, %s165
    %p174 = scmp.eq.s32.totalorder %s18, 0
    %p175 = por %p173, %p174
    %p176 = scmp.ne.s32.totalorder %s164, %s165
    %p177 = scmp.eq.s32.totalorder %s19, 1
    %p178 = por %p176, %p177
    %p180 = scmp.ne.s32.totalorder %s165, %s179
    %p181 = scmp.eq.s32.totalorder %s19, 0
    %p182 = por %p180, %p181
    %s183 = ssub.s32 %s13, %s20
    %p184 = scmp.eq.s32.totalorder %s183, 0
    %s186 = sadd.s32 %s185, 1
    %s187 = scalar_select %p184, %s185, %s186
    %p190 = pneg %p184
    %p191 = scmp.eq.s32.totalorder %s13, 1
    %p192 = por %p190, %p191
    %p193 = scmp.ne.s32.totalorder %s185, %s188
    %p194 = scmp.eq.s32.totalorder %s13, 0
    %p195 = por %p193, %p194
    %p196 = scmp.ne.s32.totalorder %s185, %s188
    %p197 = scmp.eq.s32.totalorder %s18, 1
    %p198 = por %p196, %p197
    %p199 = scmp.ne.s32.totalorder %s188, %s189
    %p200 = scmp.eq.s32.totalorder %s18, 0
    %p201 = por %p199, %p200
    %p202 = scmp.ne.s32.totalorder %s188, %s189
    %p203 = scmp.eq.s32.totalorder %s19, 1
    %p204 = por %p202, %p203
    %p206 = scmp.ne.s32.totalorder %s189, %s205
    %p207 = scmp.eq.s32.totalorder %s19, 0
    %p208 = por %p206, %p207
    %p209 = scmp.le.s32.totalorder 1, %s13
    %p210 = scmp.lt.s32.totalorder %s13, 3
    %p211 = pnand %p209, %p210
    %p212 = pneg %p211
    // Predicated region
    $region9: #{ff_rgb_forward.13} parent=5 // pred_check
      _
    $region10: #{ff_rgb_forward.13} parent=5 // pred_check_branch
      %214 = sbr.rel (%p211) target = $region12
    $region11: #{ff_rgb_forward.13} parent=5 // pred_region
      %s215 = ssub.s32 %s13, 1
      // Predicated region
      $region13: #{ff_rgb_forward.13} parent=11 // pred_check
        %p216 = pneg %p86
      $region14: #{ff_rgb_forward.13} parent=11 // pred_check_branch
        %218 = sbr.rel (%p216) target = $region16
      $region15: #{ff_rgb_forward.13} parent=11 // pred_region
        _
      $region16: #{ff_rgb_forward.13} parent=11 // pred_fallthru
        _
      // Predicated region
      $region17: #{ff_rgb_forward.13} parent=11 // pred_check
        %p219 = pneg %p107
      $region18: #{ff_rgb_forward.13} parent=11 // pred_check_branch
        %221 = sbr.rel (%p219) target = $region20
      $region19: #{ff_rgb_forward.13} parent=11 // pred_region
        _
      $region20: #{ff_rgb_forward.13} parent=11 // pred_fallthru
        _
      // Predicated region
      $region21: #{ff_rgb_forward.13} parent=11 // pred_check
        %p222 = pneg %p154
      $region22: #{ff_rgb_forward.13} parent=11 // pred_check_branch
        %224 = sbr.rel (%p222) target = $region24
      $region23: #{ff_rgb_forward.13} parent=11 // pred_region
        _
      $region24: #{ff_rgb_forward.13} parent=11 // pred_fallthru
        _
      // Predicated region
      $region25: #{ff_rgb_forward.13} parent=11 // pred_check
        %p225 = pneg %p175
      $region26: #{ff_rgb_forward.13} parent=11 // pred_check_branch
        %227 = sbr.rel (%p225) target = $region28
      $region27: #{ff_rgb_forward.13} parent=11 // pred_region
        _
      $region28: #{ff_rgb_forward.13} parent=11 // pred_fallthru
        _
    $region12: #{ff_rgb_forward.13} parent=5 // pred_fallthru
      _
    %p228 = scmp.lt.s32.totalorder %s13, 2
    // Predicated region
    $region29: #{ff_rgb_forward.13} parent=5 // pred_check
      %p229 = pneg %p228
    $region30: #{ff_rgb_forward.13} parent=5 // pred_check_branch
      %231 = sbr.rel (%p229) target = $region32
    $region31: #{ff_rgb_forward.13} parent=5 // pred_region
      // Predicated region
      $region33: #{ff_rgb_forward.13} parent=31 // pred_check
        %p232 = pneg %p33
      $region34: #{ff_rgb_forward.13} parent=31 // pred_check_branch
        %234 = sbr.rel (%p232) target = $region36
      $region35: #{ff_rgb_forward.13} parent=31 // pred_region
        %p235 = scmp.lt.s32.totalorder %s13, 1
        %s236 = scalar_select %p235, %s13, 1
        %s237 = smul.addr %s236, 8
        %s238 = smul.addr %s237, 4
        %s239 = scalar_lea.vmem %s0, %s238
      $region36: #{ff_rgb_forward.13} parent=31 // pred_fallthru
        _
      // Predicated region
      $region37: #{ff_rgb_forward.13} parent=31 // pred_check
        %p240 = pneg %p59
      $region38: #{ff_rgb_forward.13} parent=31 // pred_check_branch
        %242 = sbr.rel (%p240) target = $region40
      $region39: #{ff_rgb_forward.13} parent=31 // pred_region
        %p243 = scmp.lt.s32.totalorder %s13, 1
        %s244 = scalar_select %p243, %s13, 1
        %s245 = smul.addr %s244, 8
        %s246 = smul.addr %s245, 4
        %s247 = scalar_lea.vmem %s1, %s246
      $region40: #{ff_rgb_forward.13} parent=31 // pred_fallthru
        _
      // Predicated region
      $region41: #{ff_rgb_forward.13} parent=31 // pred_check
        %p248 = pneg %p127
      $region42: #{ff_rgb_forward.13} parent=31 // pred_check_branch
        %250 = sbr.rel (%p248) target = $region44
      $region43: #{ff_rgb_forward.13} parent=31 // pred_region
        %p251 = scmp.lt.s32.totalorder %s13, 1
        %s252 = scalar_select %p251, %s13, 1
        %s253 = smul.addr %s252, 8
        %s254 = smul.addr %s253, 4
        %s255 = scalar_lea.vmem %s4, %s254
      $region44: #{ff_rgb_forward.13} parent=31 // pred_fallthru
        _
    $region32: #{ff_rgb_forward.13} parent=5 // pred_fallthru
      _
    %p256 = scmp.le.s32.totalorder 1, %s13
    %p257 = scmp.lt.s32.totalorder %s13, 3
    %p258 = pnand %p256, %p257
    %p259 = pneg %p258
    // Predicated region
    $region45: #{ff_rgb_forward.13} parent=5 // pred_check
      _
    $region46: #{ff_rgb_forward.13} parent=5 // pred_check_branch
      %261 = sbr.rel (%p258) target = $region48
    $region47: #{ff_rgb_forward.13} parent=5 // pred_region
      %s262 = ssub.s32 %s13, 1
      %p263 = scmp.lt.s32.totalorder %s18, 1
      %s264 = scalar_select %p263, %s18, 1
      %s265 = smul.addr %s264, 8
      %s266 = smul.addr %s265, 4
      %s267 = scalar_lea.vmem %s0, %s266
      %p268 = pneg %p39
      %p269 = pneg %p36
      %p270 = scmp.lt.s32.totalorder %s18, 1
      %s271 = scalar_select %p270, %s18, 1
      %s272 = smul.addr %s271, 8
      %s273 = smul.addr %s272, 4
      %s274 = scalar_lea.vmem %s1, %s273
      %p275 = pneg %p65
      %p276 = pneg %p62
      %p277 = pneg %p86
      %p278 = pneg %p83
      %p279 = pneg %p107
      %p280 = pneg %p104
      %p281 = scmp.lt.s32.totalorder %s18, 1
      %s282 = scalar_select %p281, %s18, 1
      %s283 = smul.addr %s282, 8
      %s284 = smul.addr %s283, 4
      %s285 = scalar_lea.vmem %s4, %s284
      %p286 = pneg %p133
      %p287 = pneg %p130
      %p288 = pneg %p154
      %p289 = pneg %p151
      %p290 = pneg %p175
      %p291 = pneg %p172
      %p292 = pneg %p201
      %p293 = pneg %p198
      %p294 = scmp.lt.s32.totalorder %s18, 1
      %s295 = scalar_select %p294, %s18, 1
      %s296 = smul.addr %s295, 8
      %s297 = smul.addr %s296, 4
      %s298 = scalar_lea.vmem %s7, %s297
      %p299 = scmp.lt.s32.totalorder %s18, 1
      %s300 = scalar_select %p299, %s18, 1
      %s301 = smul.addr %s300, 8
      %s302 = smul.addr %s301, 4
      %s303 = scalar_lea.vmem %s0, %s302
      %p304 = scmp.lt.s32.totalorder %s18, 1
      %s305 = scalar_select %p304, %s18, 1
      %s306 = smul.addr %s305, 8
      %s307 = smul.addr %s306, 4
      %s308 = scalar_lea.vmem %s1, %s307
      %p309 = scmp.lt.s32.totalorder %s18, 1
      %s310 = scalar_select %p309, %s18, 1
      %s311 = smul.addr %s310, 8
      %s312 = smul.addr %s311, 4
      %s313 = scalar_lea.vmem %s4, %s312
      %p314 = scmp.lt.s32.totalorder %s18, 1
      %s315 = scalar_select %p314, %s18, 1
      %s316 = smul.addr %s315, 8
      %s317 = smul.addr %s316, 4
      %s318 = scalar_lea.vmem %s7, %s317
      %v320 = vld [vmem:[%s303] sm:$0xf]
      %v321 = vld [vmem:[%s303 + $0x4] sm:$0xf]
      %v322 = vld [vmem:[%s303 + $0x8] sm:$0xf]
      %v323 = vld [vmem:[%s303 + $0xc] sm:$0xf]
      %v324 = vld [vmem:[%s303 + $0x10] sm:$0xf]
      %v325 = vld [vmem:[%s303 + $0x14] sm:$0xf]
      %v326 = vld [vmem:[%s303 + $0x18] sm:$0xf]
      %v327 = vld [vmem:[%s303 + $0x1c] sm:$0xf]
      %v328 = vld [vmem:[%s308] sm:$0xf]
      %v329 = vld [vmem:[%s308 + $0x4] sm:$0xf]
      %v330 = vld [vmem:[%s308 + $0x8] sm:$0xf]
      %v331 = vld [vmem:[%s308 + $0xc] sm:$0xf]
      %v332 = vld [vmem:[%s308 + $0x10] sm:$0xf]
      %v333 = vld [vmem:[%s308 + $0x14] sm:$0xf]
      %v334 = vld [vmem:[%s308 + $0x18] sm:$0xf]
      %v335 = vld [vmem:[%s308 + $0x1c] sm:$0xf]
      %v344 = vunpack.c.l.b16 %v320
      %v345 = vunpack.c.l.b16 %v321
      %v346 = vunpack.c.l.b16 %v322
      %v347 = vunpack.c.l.b16 %v323
      %v348 = vunpack.c.l.b16 %v324
      %v349 = vunpack.c.l.b16 %v325
      %v350 = vunpack.c.l.b16 %v326
      %v351 = vunpack.c.l.b16 %v327
      %v352 = vpack.c.b16 %v345, %v344
      %v353 = vpack.c.b16 %v347, %v346
      %v354 = vpack.c.b16 %v349, %v348
      %v355 = vpack.c.b16 %v351, %v350
      %356 = vrot.lane.b32.xlu0 %v352, 96
      %v357 = vpop.permute.xlu0 %356
      %358 = vrot.lane.b32.xlu0 %v353, 96
      %v359 = vpop.permute.xlu0 %358
      %360 = vrot.lane.b32.xlu0 %v354, 96
      %v361 = vpop.permute.xlu0 %360
      %362 = vrot.lane.b32.xlu0 %v355, 96
      %v363 = vpop.permute.xlu0 %362
      %vm364 = vcmask 130048
      %v366 = vsel %vm364, %v352, 0
      %v369 = vsel %vm364, %v353, 0
      %v372 = vsel %vm364, %v354, 0
      %v375 = vsel %vm364, %v355, 0
      %v378 = vsel %vm364, %v357, 0
      %v381 = vsel %vm364, %v359, 0
      %v384 = vsel %vm364, %v361, 0
      %v387 = vsel %vm364, %v363, 0
      %389 = vmatprep.subr.bf16.mxu0 0
      %390 = vmatpush1.bf16.xpose.msra.mxu0 %v378
      %391 = vmatprep.subr.bf16.mxu0 0
      %392 = vmatpush1.bf16.xpose.msra.mxu0 %v381
      %393 = vmatprep.subr.bf16.mxu0 0
      %394 = vmatpush1.bf16.xpose.msra.mxu0 %v384
      %395 = vmatprep.subr.bf16.mxu0 0
      %396 = vmatpush1.bf16.xpose.msra.mxu0 %v387
      %397 = vmatprep.subr.bf16.mxu0 0
      %398 = vmatpush1.bf16.xpose.msra.mxu0 0
      %399 = vmatprep.subr.bf16.mxu0 0
      %400 = vmatpush1.bf16.xpose.msra.mxu0 0
      %401 = vmatprep.subr.bf16.mxu0 0
      %402 = vmatpush1.bf16.xpose.msra.mxu0 0
      %403 = vmatprep.subr.bf16.mxu0 0
      %404 = vmatpush1.bf16.xpose.msra.mxu0 0
      %405 = vmatprep.subr.bf16.mxu0 0
      %406 = vmatpush1.bf16.xpose.msra.mxu0 0
      %407 = vmatprep.subr.bf16.mxu0 0
      %408 = vmatpush1.bf16.xpose.msra.mxu0 0
      %409 = vmatprep.subr.bf16.mxu0 0
      %410 = vmatpush1.bf16.xpose.msra.mxu0 0
      %411 = vmatprep.subr.bf16.mxu0 0
      %412 = vmatpush1.bf16.xpose.msra.mxu0 0
      %413 = vmatprep.subr.bf16.mxu0 0
      %414 = vmatpush1.bf16.xpose.msra.mxu0 0
      %415 = vmatprep.subr.bf16.mxu0 0
      %416 = vmatpush1.bf16.xpose.msra.mxu0 0
      %417 = vmatprep.subr.bf16.mxu0 0
      %418 = vmatpush1.bf16.xpose.msra.mxu0 0
      %419 = vmatprep.subr.bf16.mxu0 0
      %420 = vmatpush1.bf16.xpose.msra.mxu0 0
      %421 = vmatprep.mubr.bf16.mxu0 0
      %422 = vmatmul.mubr.bf16.gmra.mrb[0].mxu0 %v366
      %v423 = vpop.f32.mrb[0].mxu0
      %v424 = vadd.f32 0.0, %v423
      %v425 = vpop.f32.mrb[0].mxu0
      %v426 = vpop.f32.mrb[0].mxu0
      %v427 = vadd.f32 0.0, %v426
      %v428 = vpop.f32.mrb[0].mxu0
      %429 = vmatprep.mubr.bf16.mxu0 0
      %430 = vmatmul.mubr.bf16.gmra.mrb[0].mxu0 %v369
      %v431 = vpop.f32.mrb[0].mxu0
      %v432 = vadd.f32 0.0, %v431
      %v433 = vpop.f32.mrb[0].mxu0
      %v434 = vpop.f32.mrb[0].mxu0
      %v435 = vadd.f32 0.0, %v434
      %v436 = vpop.f32.mrb[0].mxu0
      %437 = vmatprep.mubr.bf16.mxu0 0
      %438 = vmatmul.mubr.bf16.gmra.mrb[0].mxu0 %v372
      %v439 = vpop.f32.mrb[0].mxu0
      %v440 = vadd.f32 0.0, %v439
      %v441 = vpop.f32.mrb[0].mxu0
      %v442 = vpop.f32.mrb[0].mxu0
      %v443 = vadd.f32 0.0, %v442
      %v444 = vpop.f32.mrb[0].mxu0
      %445 = vmatprep.mubr.bf16.mxu0 0
      %446 = vmatmul.mubr.bf16.gmra.mrb[0].mxu0 %v375
      %v447 = vpop.f32.mrb[0].mxu0
      %v448 = vadd.f32 0.0, %v447
      %v449 = vpop.f32.mrb[0].mxu0
      %v450 = vpop.f32.mrb[0].mxu0
      %v451 = vadd.f32 0.0, %v450
      %v452 = vpop.f32.mrb[0].mxu0
      %453 = vdwg.mxu0
      %v462 = vunpack.c.l.b16 %v328
      %v463 = vunpack.c.l.b16 %v329
      %v464 = vunpack.c.l.b16 %v330
      %v465 = vunpack.c.l.b16 %v331
      %v466 = vunpack.c.l.b16 %v332
      %v467 = vunpack.c.l.b16 %v333
      %v468 = vunpack.c.l.b16 %v334
      %v469 = vunpack.c.l.b16 %v335
      %v470 = vpack.c.b16 %v463, %v462
      %v471 = vpack.c.b16 %v465, %v464
      %v472 = vpack.c.b16 %v467, %v466
      %v473 = vpack.c.b16 %v469, %v468
      %v475 = vsel %vm364, %v470, 0
      %v478 = vsel %vm364, %v471, 0
      %v481 = vsel %vm364, %v472, 0
      %v484 = vsel %vm364, %v473, 0
      %486 = vmatprep.subr.bf16.mxu0 0
      %487 = vmatpush1.bf16.xpose.msra.mxu0 %v475
      %488 = vmatprep.subr.bf16.mxu0 0
      %489 = vmatpush1.bf16.xpose.msra.mxu0 %v478
      %490 = vmatprep.subr.bf16.mxu0 0
      %491 = vmatpush1.bf16.xpose.msra.mxu0 %v481
      %492 = vmatprep.subr.bf16.mxu0 0
      %493 = vmatpush1.bf16.xpose.msra.mxu0 %v484
      %494 = vmatprep.subr.bf16.mxu0 0
      %495 = vmatpush1.bf16.xpose.msra.mxu0 0
      %496 = vmatprep.subr.bf16.mxu0 0
      %497 = vmatpush1.bf16.xpose.msra.mxu0 0
      %498 = vmatprep.subr.bf16.mxu0 0
      %499 = vmatpush1.bf16.xpose.msra.mxu0 0
      %500 = vmatprep.subr.bf16.mxu0 0
      %501 = vmatpush1.bf16.xpose.msra.mxu0 0
      %502 = vmatprep.subr.bf16.mxu0 0
      %503 = vmatpush1.bf16.xpose.msra.mxu0 0
      %504 = vmatprep.subr.bf16.mxu0 0
      %505 = vmatpush1.bf16.xpose.msra.mxu0 0
      %506 = vmatprep.subr.bf16.mxu0 0
      %507 = vmatpush1.bf16.xpose.msra.mxu0 0
      %508 = vmatprep.subr.bf16.mxu0 0
      %509 = vmatpush1.bf16.xpose.msra.mxu0 0
      %510 = vmatprep.subr.bf16.mxu0 0
      %511 = vmatpush1.bf16.xpose.msra.mxu0 0
      %512 = vmatprep.subr.bf16.mxu0 0
      %513 = vmatpush1.bf16.xpose.msra.mxu0 0
      %514 = vmatprep.subr.bf16.mxu0 0
      %515 = vmatpush1.bf16.xpose.msra.mxu0 0
      %516 = vmatprep.subr.bf16.mxu0 0
      %517 = vmatpush1.bf16.xpose.msra.mxu0 0
      %518 = vmatprep.mubr.bf16.mxu0 0
      %519 = vmatmul.mubr.bf16.gmra.mrb[0].mxu0 %v366
      %v520 = vpop.f32.mrb[0].mxu0
      %v521 = vadd.f32 0.0, %v520
      %v522 = vpop.f32.mrb[0].mxu0
      %v523 = vpop.f32.mrb[0].mxu0
      %v524 = vadd.f32 0.0, %v523
      %v525 = vpop.f32.mrb[0].mxu0
      %526 = vmatprep.mubr.bf16.mxu0 0
      %527 = vmatmul.mubr.bf16.gmra.mrb[0].mxu0 %v369
      %v528 = vpop.f32.mrb[0].mxu0
      %v529 = vadd.f32 0.0, %v528
      %v530 = vpop.f32.mrb[0].mxu0
      %v531 = vpop.f32.mrb[0].mxu0
      %v532 = vadd.f32 0.0, %v531
      %v533 = vpop.f32.mrb[0].mxu0
      %534 = vmatprep.mubr.bf16.mxu0 0
      %535 = vmatmul.mubr.bf16.gmra.mrb[0].mxu0 %v372
      %v536 = vpop.f32.mrb[0].mxu0
      %v537 = vadd.f32 0.0, %v536
      %v538 = vpop.f32.mrb[0].mxu0
      %v539 = vpop.f32.mrb[0].mxu0
      %v540 = vadd.f32 0.0, %v539
      %v541 = vpop.f32.mrb[0].mxu0
      %542 = vmatprep.mubr.bf16.mxu0 0
      %543 = vmatmul.mubr.bf16.gmra.mrb[0].mxu0 %v375
      %v544 = vpop.f32.mrb[0].mxu0
      %v545 = vadd.f32 0.0, %v544
      %v546 = vpop.f32.mrb[0].mxu0
      %v547 = vpop.f32.mrb[0].mxu0
      %v548 = vadd.f32 0.0, %v547
      %v549 = vpop.f32.mrb[0].mxu0
      %550 = vdwg.mxu0
      %559 = vrot.lane.b32.xlu0 %v521, 64
      %v560 = vpop.permute.xlu0 %559
      %561 = vrot.lane.b32.xlu0 %v524, 64
      %v562 = vpop.permute.xlu0 %561
      %563 = vrot.lane.b32.xlu0 %v529, 64
      %v564 = vpop.permute.xlu0 %563
      %565 = vrot.lane.b32.xlu0 %v532, 64
      %v566 = vpop.permute.xlu0 %565
      %567 = vrot.lane.b32.xlu0 %v537, 64
      %v568 = vpop.permute.xlu0 %567
      %569 = vrot.lane.b32.xlu0 %v540, 64
      %v570 = vpop.permute.xlu0 %569
      %571 = vrot.lane.b32.xlu0 %v545, 64
      %v572 = vpop.permute.xlu0 %571
      %573 = vrot.lane.b32.xlu0 %v548, 64
      %v574 = vpop.permute.xlu0 %573
      %vm583 = vcmask 523264
      %v584 = vsel %vm583, %v424, %v560
      %v585 = vsel %vm583, %v427, %v562
      %v586 = vsel %vm583, %v432, %v564
      %v587 = vsel %vm583, %v435, %v566
      %v588 = vsel %vm583, %v440, %v568
      %v589 = vsel %vm583, %v443, %v570
      %v590 = vsel %vm583, %v448, %v572
      %v591 = vsel %vm583, %v451, %v574
      %v592 = vmul.f32 %v584, 0.25
      %v593 = vmul.f32 %v585, 0.25
      %v594 = vmul.f32 %v586, 0.25
      %v595 = vmul.f32 %v587, 0.25
      %v596 = vmul.f32 %v588, 0.25
      %v597 = vmul.f32 %v589, 0.25
      %v598 = vmul.f32 %v590, 0.25
      %v599 = vmul.f32 %v591, 0.25
      %600 = vmax.xlane.f32.xlu0 %v592
      %v601 = vpop.xlane.xlu0 %600
      %602 = vmax.xlane.f32.xlu0 %v593
      %v603 = vpop.xlane.xlu0 %602
      %604 = vmax.xlane.f32.xlu0 %v594
      %v605 = vpop.xlane.xlu0 %604
      %606 = vmax.xlane.f32.xlu0 %v595
      %v607 = vpop.xlane.xlu0 %606
      %608 = vmax.xlane.f32.xlu0 %v596
      %v609 = vpop.xlane.xlu0 %608
      %610 = vmax.xlane.f32.xlu0 %v597
      %v611 = vpop.xlane.xlu0 %610
      %612 = vmax.xlane.f32.xlu0 %v598
      %v613 = vpop.xlane.xlu0 %612
      %614 = vmax.xlane.f32.xlu0 %v599
      %v615 = vpop.xlane.xlu0 %614
      %v616 = vsub.f32 %v592, %v601
      %v617 = vsub.f32 %v593, %v603
      %v618 = vsub.f32 %v594, %v605
      %v619 = vsub.f32 %v595, %v607
      %v620 = vsub.f32 %v596, %v609
      %v621 = vsub.f32 %v597, %v611
      %v622 = vsub.f32 %v598, %v613
      %v623 = vsub.f32 %v599, %v615
      %v624 = vmul.f32 %v616, 1.442695
      %v625 = vpow.pop %v624
      %v626 = vmul.f32 %v617, 1.442695
      %v627 = vpow.pop %v626
      %v628 = vmul.f32 %v618, 1.442695
      %v629 = vpow.pop %v628
      %v630 = vmul.f32 %v619, 1.442695
      %v631 = vpow.pop %v630
      %v632 = vmul.f32 %v620, 1.442695
      %v633 = vpow.pop %v632
      %v634 = vmul.f32 %v621, 1.442695
      %v635 = vpow.pop %v634
      %v636 = vmul.f32 %v622, 1.442695
      %v637 = vpow.pop %v636
      %v638 = vmul.f32 %v623, 1.442695
      %v639 = vpow.pop %v638
      %640 = vadd.xlane.f32.xlu0 %v625
      %v641 = vpop.xlane.xlu0 %640
      %642 = vadd.xlane.f32.xlu0 %v627
      %v643 = vpop.xlane.xlu0 %642
      %644 = vadd.xlane.f32.xlu0 %v629
      %v645 = vpop.xlane.xlu0 %644
      %646 = vadd.xlane.f32.xlu0 %v631
      %v647 = vpop.xlane.xlu0 %646
      %648 = vadd.xlane.f32.xlu0 %v633
      %v649 = vpop.xlane.xlu0 %648
      %650 = vadd.xlane.f32.xlu0 %v635
      %v651 = vpop.xlane.xlu0 %650
      %652 = vadd.xlane.f32.xlu0 %v637
      %v653 = vpop.xlane.xlu0 %652
      %654 = vadd.xlane.f32.xlu0 %v639
      %v655 = vpop.xlane.xlu0 %654
      %v656 = vrcp.pop %v641
      %v657 = vrcp.pop %v643
      %v658 = vrcp.pop %v645
      %v659 = vrcp.pop %v647
      %v660 = vrcp.pop %v649
      %v661 = vrcp.pop %v651
      %v662 = vrcp.pop %v653
      %v663 = vrcp.pop %v655
      %v664 = vmul.f32 %v625, %v656
      %v665 = vmul.f32 %v627, %v657
      %v666 = vmul.f32 %v629, %v658
      %v667 = vmul.f32 %v631, %v659
      %v668 = vmul.f32 %v633, %v660
      %v669 = vmul.f32 %v635, %v661
      %v670 = vmul.f32 %v637, %v662
      %v671 = vmul.f32 %v639, %v663
      %v672 = vpack.c.bf16 %v665, %v664
      %v673 = vpack.c.bf16 %v667, %v666
      %v674 = vpack.c.bf16 %v669, %v668
      %v675 = vpack.c.bf16 %v671, %v670
      %680 = vrot.lane.b32.xlu0 %v672, 64
      %v681 = vpop.permute.xlu0 %680
      %682 = vrot.lane.b32.xlu0 %v673, 64
      %v683 = vpop.permute.xlu0 %682
      %684 = vrot.lane.b32.xlu0 %v674, 64
      %v685 = vpop.permute.xlu0 %684
      %686 = vrot.lane.b32.xlu0 %v675, 64
      %v687 = vpop.permute.xlu0 %686
      %688 = vrot.lane.b32.xlu0 %v470, 96
      %v689 = vpop.permute.xlu0 %688
      %690 = vrot.lane.b32.xlu0 %v471, 96
      %v691 = vpop.permute.xlu0 %690
      %692 = vrot.lane.b32.xlu0 %v472, 96
      %v693 = vpop.permute.xlu0 %692
      %694 = vrot.lane.b32.xlu0 %v473, 96
      %v695 = vpop.permute.xlu0 %694
      %v701 = vsel %vm583, %v681, 0
      %v704 = vsel %vm583, %v683, 0
      %v707 = vsel %vm583, %v685, 0
      %v710 = vsel %vm583, %v687, 0
      %712 = vmatprep.subr.bf16.mxu0 0
      %713 = vmatpush1.bf16.msra.mxu0 %v689
      %714 = vmatprep.subr.bf16.mxu0 0
      %715 = vmatpush1.bf16.msra.mxu0 %v691
      %716 = vmatprep.subr.bf16.mxu0 0
      %717 = vmatpush1.bf16.msra.mxu0 %v693
      %718 = vmatprep.subr.bf16.mxu0 0
      %719 = vmatpush1.bf16.msra.mxu0 %v695
      %720 = vmatprep.subr.bf16.mxu0 0
      %721 = vmatpush1.bf16.msra.mxu0 0
      %722 = vmatprep.subr.bf16.mxu0 0
      %723 = vmatpush1.bf16.msra.mxu0 0
      %724 = vmatprep.subr.bf16.mxu0 0
      %725 = vmatpush1.bf16.msra.mxu0 0
      %726 = vmatprep.subr.bf16.mxu0 0
      %727 = vmatpush1.bf16.msra.mxu0 0
      %728 = vmatprep.subr.bf16.mxu0 0
      %729 = vmatpush1.bf16.msra.mxu0 0
      %730 = vmatprep.subr.bf16.mxu0 0
      %731 = vmatpush1.bf16.msra.mxu0 0
      %732 = vmatprep.subr.bf16.mxu0 0
      %733 = vmatpush1.bf16.msra.mxu0 0
      %734 = vmatprep.subr.bf16.mxu0 0
      %735 = vmatpush1.bf16.msra.mxu0 0
      %736 = vmatprep.subr.bf16.mxu0 0
      %737 = vmatpush1.bf16.msra.mxu0 0
      %738 = vmatprep.subr.bf16.mxu0 0
      %739 = vmatpush1.bf16.msra.mxu0 0
      %740 = vmatprep.subr.bf16.mxu0 0
      %741 = vmatpush1.bf16.msra.mxu0 0
      %742 = vmatprep.subr.bf16.mxu0 0
      %743 = vmatpush1.bf16.msra.mxu0 0
      %744 = vmatprep.mubr.bf16.mxu0 0
      %745 = vmatmul.mubr.bf16.gmra.mrb[0].mxu0 %v701
      %v746 = vpop.f32.mrb[0].mxu0
      %v747 = vadd.f32 0.0, %v746
      %v748 = vpop.f32.mrb[0].mxu0
      %v749 = vpop.f32.mrb[0].mxu0
      %v750 = vadd.f32 0.0, %v749
      %v751 = vpop.f32.mrb[0].mxu0
      %752 = vmatprep.mubr.bf16.mxu0 0
      %753 = vmatmul.mubr.bf16.gmra.mrb[0].mxu0 %v704
      %v754 = vpop.f32.mrb[0].mxu0
      %v755 = vadd.f32 0.0, %v754
      %v756 = vpop.f32.mrb[0].mxu0
      %v757 = vpop.f32.mrb[0].mxu0
      %v758 = vadd.f32 0.0, %v757
      %v759 = vpop.f32.mrb[0].mxu0
      %760 = vmatprep.mubr.bf16.mxu0 0
      %761 = vmatmul.mubr.bf16.gmra.mrb[0].mxu0 %v707
      %v762 = vpop.f32.mrb[0].mxu0
      %v763 = vadd.f32 0.0, %v762
      %v764 = vpop.f32.mrb[0].mxu0
      %v765 = vpop.f32.mrb[0].mxu0
      %v766 = vadd.f32 0.0, %v765
      %v767 = vpop.f32.mrb[0].mxu0
      %768 = vmatprep.mubr.bf16.mxu0 0
      %769 = vmatmul.mubr.bf16.gmra.mrb[0].mxu0 %v710
      %v770 = vpop.f32.mrb[0].mxu0
      %v771 = vadd.f32 0.0, %v770
      %v772 = vpop.f32.mrb[0].mxu0
      %v773 = vpop.f32.mrb[0].mxu0
      %v774 = vadd.f32 0.0, %v773
      %v775 = vpop.f32.mrb[0].mxu0
      %776 = vdwg.mxu0
      %777 = vrot.lane.b32.xlu0 %v352, 64
      %v778 = vpop.permute.xlu0 %777
      %779 = vrot.lane.b32.xlu0 %v353, 64
      %v780 = vpop.permute.xlu0 %779
      %781 = vrot.lane.b32.xlu0 %v354, 64
      %v782 = vpop.permute.xlu0 %781
      %783 = vrot.lane.b32.xlu0 %v355, 64
      %v784 = vpop.permute.xlu0 %783
      %v790 = vsel %vm583, %v672, 0
      %v793 = vsel %vm583, %v673, 0
      %v796 = vsel %vm583, %v674, 0
      %v799 = vsel %vm583, %v675, 0
      %801 = vmatprep.subr.bf16.mxu0 0
      %802 = vmatpush1.bf16.msra.mxu0 %v778
      %803 = vmatprep.subr.bf16.mxu0 0
      %804 = vmatpush1.bf16.msra.mxu0 %v780
      %805 = vmatprep.subr.bf16.mxu0 0
      %806 = vmatpush1.bf16.msra.mxu0 %v782
      %807 = vmatprep.subr.bf16.mxu0 0
      %808 = vmatpush1.bf16.msra.mxu0 %v784
      %809 = vmatprep.subr.bf16.mxu0 0
      %810 = vmatpush1.bf16.msra.mxu0 0
      %811 = vmatprep.subr.bf16.mxu0 0
      %812 = vmatpush1.bf16.msra.mxu0 0
      %813 = vmatprep.subr.bf16.mxu0 0
      %814 = vmatpush1.bf16.msra.mxu0 0
      %815 = vmatprep.subr.bf16.mxu0 0
      %816 = vmatpush1.bf16.msra.mxu0 0
      %817 = vmatprep.subr.bf16.mxu0 0
      %818 = vmatpush1.bf16.msra.mxu0 0
      %819 = vmatprep.subr.bf16.mxu0 0
      %820 = vmatpush1.bf16.msra.mxu0 0
      %821 = vmatprep.subr.bf16.mxu0 0
      %822 = vmatpush1.bf16.msra.mxu0 0
      %823 = vmatprep.subr.bf16.mxu0 0
      %824 = vmatpush1.bf16.msra.mxu0 0
      %825 = vmatprep.subr.bf16.mxu0 0
      %826 = vmatpush1.bf16.msra.mxu0 0
      %827 = vmatprep.subr.bf16.mxu0 0
      %828 = vmatpush1.bf16.msra.mxu0 0
      %829 = vmatprep.subr.bf16.mxu0 0
      %830 = vmatpush1.bf16.msra.mxu0 0
      %831 = vmatprep.subr.bf16.mxu0 0
      %832 = vmatpush1.bf16.msra.mxu0 0
      %833 = vmatprep.mubr.bf16.mxu0 0
      %834 = vmatmul.mubr.bf16.gmra.mrb[0].mxu0 %v790
      %v835 = vpop.f32.mrb[0].mxu0
      %v836 = vadd.f32 %v747, %v835
      %v837 = vpop.f32.mrb[0].mxu0
      %v838 = vpop.f32.mrb[0].mxu0
      %v839 = vadd.f32 %v750, %v838
      %v840 = vpop.f32.mrb[0].mxu0
      %841 = vmatprep.mubr.bf16.mxu0 0
      %842 = vmatmul.mubr.bf16.gmra.mrb[0].mxu0 %v793
      %v843 = vpop.f32.mrb[0].mxu0
      %v844 = vadd.f32 %v755, %v843
      %v845 = vpop.f32.mrb[0].mxu0
      %v846 = vpop.f32.mrb[0].mxu0
      %v847 = vadd.f32 %v758, %v846
      %v848 = vpop.f32.mrb[0].mxu0
      %849 = vmatprep.mubr.bf16.mxu0 0
      %850 = vmatmul.mubr.bf16.gmra.mrb[0].mxu0 %v796
      %v851 = vpop.f32.mrb[0].mxu0
      %v852 = vadd.f32 %v763, %v851
      %v853 = vpop.f32.mrb[0].mxu0
      %v854 = vpop.f32.mrb[0].mxu0
      %v855 = vadd.f32 %v766, %v854
      %v856 = vpop.f32.mrb[0].mxu0
      %857 = vmatprep.mubr.bf16.mxu0 0
      %858 = vmatmul.mubr.bf16.gmra.mrb[0].mxu0 %v799
      %v859 = vpop.f32.mrb[0].mxu0
      %v860 = vadd.f32 %v771, %v859
      %v861 = vpop.f32.mrb[0].mxu0
      %v862 = vpop.f32.mrb[0].mxu0
      %v863 = vadd.f32 %v774, %v862
      %v864 = vpop.f32.mrb[0].mxu0
      %865 = vdwg.mxu0
      %866 = vrot.lane.b32.xlu0 %v352, 112
      %v867 = vpop.permute.xlu0 %866
      %868 = vrot.lane.b32.xlu0 %v353, 112
      %v869 = vpop.permute.xlu0 %868
      %870 = vrot.lane.b32.xlu0 %v354, 112
      %v871 = vpop.permute.xlu0 %870
      %872 = vrot.lane.b32.xlu0 %v355, 112
      %v873 = vpop.permute.xlu0 %872
      %874 = vrot.lane.b32.xlu0 %v352, 80
      %v875 = vpop.permute.xlu0 %874
      %876 = vrot.lane.b32.xlu0 %v353, 80
      %v877 = vpop.permute.xlu0 %876
      %878 = vrot.lane.b32.xlu0 %v354, 80
      %v879 = vpop.permute.xlu0 %878
      %880 = vrot.lane.b32.xlu0 %v355, 80
      %v881 = vpop.permute.xlu0 %880
      %v883 = vsel %vm364, %v867, 0
      %v886 = vsel %vm364, %v869, 0
      %v889 = vsel %vm364, %v871, 0
      %v892 = vsel %vm364, %v873, 0
      %v895 = vsel %vm364, %v875, 0
      %v898 = vsel %vm364, %v877, 0
      %v901 = vsel %vm364, %v879, 0
      %v904 = vsel %vm364, %v881, 0
      %906 = vmatprep.subr.bf16.mxu0 0
      %907 = vmatpush1.bf16.xpose.msra.mxu0 %v895
      %908 = vmatprep.subr.bf16.mxu0 0
      %909 = vmatpush1.bf16.xpose.msra.mxu0 %v898
      %910 = vmatprep.subr.bf16.mxu0 0
      %911 = vmatpush1.bf16.xpose.msra.mxu0 %v901
      %912 = vmatprep.subr.bf16.mxu0 0
      %913 = vmatpush1.bf16.xpose.msra.mxu0 %v904
      %914 = vmatprep.subr.bf16.mxu0 0
      %915 = vmatpush1.bf16.xpose.msra.mxu0 0
      %916 = vmatprep.subr.bf16.mxu0 0
      %917 = vmatpush1.bf16.xpose.msra.mxu0 0
      %918 = vmatprep.subr.bf16.mxu0 0
      %919 = vmatpush1.bf16.xpose.msra.mxu0 0
      %920 = vmatprep.subr.bf16.mxu0 0
      %921 = vmatpush1.bf16.xpose.msra.mxu0 0
      %922 = vmatprep.subr.bf16.mxu0 0
      %923 = vmatpush1.bf16.xpose.msra.mxu0 0
      %924 = vmatprep.subr.bf16.mxu0 0
      %925 = vmatpush1.bf16.xpose.msra.mxu0 0
      %926 = vmatprep.subr.bf16.mxu0 0
      %927 = vmatpush1.bf16.xpose.msra.mxu0 0
      %928 = vmatprep.subr.bf16.mxu0 0
      %929 = vmatpush1.bf16.xpose.msra.mxu0 0
      %930 = vmatprep.subr.bf16.mxu0 0
      %931 = vmatpush1.bf16.xpose.msra.mxu0 0
      %932 = vmatprep.subr.bf16.mxu0 0
      %933 = vmatpush1.bf16.xpose.msra.mxu0 0
      %934 = vmatprep.subr.bf16.mxu0 0
      %935 = vmatpush1.bf16.xpose.msra.mxu0 0
      %936 = vmatprep.subr.bf16.mxu0 0
      %937 = vmatpush1.bf16.xpose.msra.mxu0 0
      %938 = vmatprep.mubr.bf16.mxu0 0
      %939 = vmatmul.mubr.bf16.gmra.mrb[0].mxu0 %v883
      %v940 = vpop.f32.mrb[0].mxu0
      %v941 = vadd.f32 0.0, %v940
      %v942 = vpop.f32.mrb[0].mxu0
      %v943 = vpop.f32.mrb[0].mxu0
      %v944 = vadd.f32 0.0, %v943
      %v945 = vpop.f32.mrb[0].mxu0
      %946 = vmatprep.mubr.bf16.mxu0 0
      %947 = vmatmul.mubr.bf16.gmra.mrb[0].mxu0 %v886
      %v948 = vpop.f32.mrb[0].mxu0
      %v949 = vadd.f32 0.0, %v948
      %v950 = vpop.f32.mrb[0].mxu0
      %v951 = vpop.f32.mrb[0].mxu0
      %v952 = vadd.f32 0.0, %v951
      %v953 = vpop.f32.mrb[0].mxu0
      %954 = vmatprep.mubr.bf16.mxu0 0
      %955 = vmatmul.mubr.bf16.gmra.mrb[0].mxu0 %v889
      %v956 = vpop.f32.mrb[0].mxu0
      %v957 = vadd.f32 0.0, %v956
      %v958 = vpop.f32.mrb[0].mxu0
      %v959 = vpop.f32.mrb[0].mxu0
      %v960 = vadd.f32 0.0, %v959
      %v961 = vpop.f32.mrb[0].mxu0
      %962 = vmatprep.mubr.bf16.mxu0 0
      %963 = vmatmul.mubr.bf16.gmra.mrb[0].mxu0 %v892
      %v964 = vpop.f32.mrb[0].mxu0
      %v965 = vadd.f32 0.0, %v964
      %v966 = vpop.f32.mrb[0].mxu0
      %v967 = vpop.f32.mrb[0].mxu0
      %v968 = vadd.f32 0.0, %v967
      %v969 = vpop.f32.mrb[0].mxu0
      %970 = vdwg.mxu0
      %971 = vrot.lane.b32.xlu0 %v470, 112
      %v972 = vpop.permute.xlu0 %971
      %973 = vrot.lane.b32.xlu0 %v471, 112
      %v974 = vpop.permute.xlu0 %973
      %975 = vrot.lane.b32.xlu0 %v472, 112
      %v976 = vpop.permute.xlu0 %975
      %977 = vrot.lane.b32.xlu0 %v473, 112
      %v978 = vpop.permute.xlu0 %977
      %v980 = vsel %vm364, %v972, 0
      %v983 = vsel %vm364, %v974, 0
      %v986 = vsel %vm364, %v976, 0
      %v989 = vsel %vm364, %v978, 0
      %991 = vmatprep.subr.bf16.mxu0 0
      %992 = vmatpush1.bf16.xpose.msra.mxu0 %v980
      %993 = vmatprep.subr.bf16.mxu0 0
      %994 = vmatpush1.bf16.xpose.msra.mxu0 %v983
      %995 = vmatprep.subr.bf16.mxu0 0
      %996 = vmatpush1.bf16.xpose.msra.mxu0 %v986
      %997 = vmatprep.subr.bf16.mxu0 0
      %998 = vmatpush1.bf16.xpose.msra.mxu0 %v989
      %999 = vmatprep.subr.bf16.mxu0 0
      %1000 = vmatpush1.bf16.xpose.msra.mxu0 0
      %1001 = vmatprep.subr.bf16.mxu0 0
      %1002 = vmatpush1.bf16.xpose.msra.mxu0 0
      %1003 = vmatprep.subr.bf16.mxu0 0
      %1004 = vmatpush1.bf16.xpose.msra.mxu0 0
      %1005 = vmatprep.subr.bf16.mxu0 0
      %1006 = vmatpush1.bf16.xpose.msra.mxu0 0
      %1007 = vmatprep.subr.bf16.mxu0 0
      %1008 = vmatpush1.bf16.xpose.msra.mxu0 0
      %1009 = vmatprep.subr.bf16.mxu0 0
      %1010 = vmatpush1.bf16.xpose.msra.mxu0 0
      %1011 = vmatprep.subr.bf16.mxu0 0
      %1012 = vmatpush1.bf16.xpose.msra.mxu0 0
      %1013 = vmatprep.subr.bf16.mxu0 0
      %1014 = vmatpush1.bf16.xpose.msra.mxu0 0
      %1015 = vmatprep.subr.bf16.mxu0 0
      %1016 = vmatpush1.bf16.xpose.msra.mxu0 0
      %1017 = vmatprep.subr.bf16.mxu0 0
      %1018 = vmatpush1.bf16.xpose.msra.mxu0 0
      %1019 = vmatprep.subr.bf16.mxu0 0
      %1020 = vmatpush1.bf16.xpose.msra.mxu0 0
      %1021 = vmatprep.subr.bf16.mxu0 0
      %1022 = vmatpush1.bf16.xpose.msra.mxu0 0
      %1023 = vmatprep.mubr.bf16.mxu0 0
      %1024 = vmatmul.mubr.bf16.gmra.mrb[0].mxu0 %v883
      %v1025 = vpop.f32.mrb[0].mxu0
      %v1026 = vadd.f32 0.0, %v1025
      %v1027 = vpop.f32.mrb[0].mxu0
      %v1028 = vpop.f32.mrb[0].mxu0
      %v1029 = vadd.f32 0.0, %v1028
      %v1030 = vpop.f32.mrb[0].mxu0
      %1031 = vmatprep.mubr.bf16.mxu0 0
      %1032 = vmatmul.mubr.bf16.gmra.mrb[0].mxu0 %v886
      %v1033 = vpop.f32.mrb[0].mxu0
      %v1034 = vadd.f32 0.0, %v1033
      %v1035 = vpop.f32.mrb[0].mxu0
      %v1036 = vpop.f32.mrb[0].mxu0
      %v1037 = vadd.f32 0.0, %v1036
      %v1038 = vpop.f32.mrb[0].mxu0
      %1039 = vmatprep.mubr.bf16.mxu0 0
      %1040 = vmatmul.mubr.bf16.gmra.mrb[0].mxu0 %v889
      %v1041 = vpop.f32.mrb[0].mxu0
      %v1042 = vadd.f32 0.0, %v1041
      %v1043 = vpop.f32.mrb[0].mxu0
      %v1044 = vpop.f32.mrb[0].mxu0
      %v1045 = vadd.f32 0.0, %v1044
      %v1046 = vpop.f32.mrb[0].mxu0
      %1047 = vmatprep.mubr.bf16.mxu0 0
      %1048 = vmatmul.mubr.bf16.gmra.mrb[0].mxu0 %v892
      %v1049 = vpop.f32.mrb[0].mxu0
      %v1050 = vadd.f32 0.0, %v1049
      %v1051 = vpop.f32.mrb[0].mxu0
      %v1052 = vpop.f32.mrb[0].mxu0
      %v1053 = vadd.f32 0.0, %v1052
      %v1054 = vpop.f32.mrb[0].mxu0
      %1055 = vdwg.mxu0
      %1064 = vrot.lane.b32.xlu0 %v1026, 64
      %v1065 = vpop.permute.xlu0 %1064
      %1066 = vrot.lane.b32.xlu0 %v1029, 64
      %v1067 = vpop.permute.xlu0 %1066
      %1068 = vrot.lane.b32.xlu0 %v1034, 64
      %v1069 = vpop.permute.xlu0 %1068
      %1070 = vrot.lane.b32.xlu0 %v1037, 64
      %v1071 = vpop.permute.xlu0 %1070
      %1072 = vrot.lane.b32.xlu0 %v1042, 64
      %v1073 = vpop.permute.xlu0 %1072
      %1074 = vrot.lane.b32.xlu0 %v1045, 64
      %v1075 = vpop.permute.xlu0 %1074
      %1076 = vrot.lane.b32.xlu0 %v1050, 64
      %v1077 = vpop.permute.xlu0 %1076
      %1078 = vrot.lane.b32.xlu0 %v1053, 64
      %v1079 = vpop.permute.xlu0 %1078
      %v1088 = vsel %vm583, %v941, %v1065
      %v1089 = vsel %vm583, %v944, %v1067
      %v1090 = vsel %vm583, %v949, %v1069
      %v1091 = vsel %vm583, %v952, %v1071
      %v1092 = vsel %vm583, %v957, %v1073
      %v1093 = vsel %vm583, %v960, %v1075
      %v1094 = vsel %vm583, %v965, %v1077
      %v1095 = vsel %vm583, %v968, %v1079
      %v1096 = vmul.f32 %v1088, 0.25
      %v1097 = vmul.f32 %v1089, 0.25
      %v1098 = vmul.f32 %v1090, 0.25
      %v1099 = vmul.f32 %v1091, 0.25
      %v1100 = vmul.f32 %v1092, 0.25
      %v1101 = vmul.f32 %v1093, 0.25
      %v1102 = vmul.f32 %v1094, 0.25
      %v1103 = vmul.f32 %v1095, 0.25
      %1104 = vmax.xlane.f32.xlu0 %v1096
      %v1105 = vpop.xlane.xlu0 %1104
      %1106 = vmax.xlane.f32.xlu0 %v1097
      %v1107 = vpop.xlane.xlu0 %1106
      %1108 = vmax.xlane.f32.xlu0 %v1098
      %v1109 = vpop.xlane.xlu0 %1108
      %1110 = vmax.xlane.f32.xlu0 %v1099
      %v1111 = vpop.xlane.xlu0 %1110
      %1112 = vmax.xlane.f32.xlu0 %v1100
      %v1113 = vpop.xlane.xlu0 %1112
      %1114 = vmax.xlane.f32.xlu0 %v1101
      %v1115 = vpop.xlane.xlu0 %1114
      %1116 = vmax.xlane.f32.xlu0 %v1102
      %v1117 = vpop.xlane.xlu0 %1116
      %1118 = vmax.xlane.f32.xlu0 %v1103
      %v1119 = vpop.xlane.xlu0 %1118
      %v1120 = vsub.f32 %v1096, %v1105
      %v1121 = vsub.f32 %v1097, %v1107
      %v1122 = vsub.f32 %v1098, %v1109
      %v1123 = vsub.f32 %v1099, %v1111
      %v1124 = vsub.f32 %v1100, %v1113
      %v1125 = vsub.f32 %v1101, %v1115
      %v1126 = vsub.f32 %v1102, %v1117
      %v1127 = vsub.f32 %v1103, %v1119
      %v1128 = vmul.f32 %v1120, 1.442695
      %v1129 = vpow.pop %v1128
      %v1130 = vmul.f32 %v1121, 1.442695
      %v1131 = vpow.pop %v1130
      %v1132 = vmul.f32 %v1122, 1.442695
      %v1133 = vpow.pop %v1132
      %v1134 = vmul.f32 %v1123, 1.442695
      %v1135 = vpow.pop %v1134
      %v1136 = vmul.f32 %v1124, 1.442695
      %v1137 = vpow.pop %v1136
      %v1138 = vmul.f32 %v1125, 1.442695
      %v1139 = vpow.pop %v1138
      %v1140 = vmul.f32 %v1126, 1.442695
      %v1141 = vpow.pop %v1140
      %v1142 = vmul.f32 %v1127, 1.442695
      %v1143 = vpow.pop %v1142
      %1144 = vadd.xlane.f32.xlu0 %v1129
      %v1145 = vpop.xlane.xlu0 %1144
      %1146 = vadd.xlane.f32.xlu0 %v1131
      %v1147 = vpop.xlane.xlu0 %1146
      %1148 = vadd.xlane.f32.xlu0 %v1133
      %v1149 = vpop.xlane.xlu0 %1148
      %1150 = vadd.xlane.f32.xlu0 %v1135
      %v1151 = vpop.xlane.xlu0 %1150
      %1152 = vadd.xlane.f32.xlu0 %v1137
      %v1153 = vpop.xlane.xlu0 %1152
      %1154 = vadd.xlane.f32.xlu0 %v1139
      %v1155 = vpop.xlane.xlu0 %1154
      %1156 = vadd.xlane.f32.xlu0 %v1141
      %v1157 = vpop.xlane.xlu0 %1156
      %1158 = vadd.xlane.f32.xlu0 %v1143
      %v1159 = vpop.xlane.xlu0 %1158
      %v1160 = vrcp.pop %v1145
      %v1161 = vrcp.pop %v1147
      %v1162 = vrcp.pop %v1149
      %v1163 = vrcp.pop %v1151
      %v1164 = vrcp.pop %v1153
      %v1165 = vrcp.pop %v1155
      %v1166 = vrcp.pop %v1157
      %v1167 = vrcp.pop %v1159
      %v1168 = vmul.f32 %v1129, %v1160
      %v1169 = vmul.f32 %v1131, %v1161
      %v1170 = vmul.f32 %v1133, %v1162
      %v1171 = vmul.f32 %v1135, %v1163
      %v1172 = vmul.f32 %v1137, %v1164
      %v1173 = vmul.f32 %v1139, %v1165
      %v1174 = vmul.f32 %v1141, %v1166
      %v1175 = vmul.f32 %v1143, %v1167
      %v1176 = vpack.c.bf16 %v1169, %v1168
      %v1177 = vpack.c.bf16 %v1171, %v1170
      %v1178 = vpack.c.bf16 %v1173, %v1172
      %v1179 = vpack.c.bf16 %v1175, %v1174
      %1184 = vrot.lane.b32.xlu0 %v1176, 64
      %v1185 = vpop.permute.xlu0 %1184
      %1186 = vrot.lane.b32.xlu0 %v1177, 64
      %v1187 = vpop.permute.xlu0 %1186
      %1188 = vrot.lane.b32.xlu0 %v1178, 64
      %v1189 = vpop.permute.xlu0 %1188
      %1190 = vrot.lane.b32.xlu0 %v1179, 64
      %v1191 = vpop.permute.xlu0 %1190
      %1192 = vrot.lane.b32.xlu0 %v470, 80
      %v1193 = vpop.permute.xlu0 %1192
      %1194 = vrot.lane.b32.xlu0 %v471, 80
      %v1195 = vpop.permute.xlu0 %1194
      %1196 = vrot.lane.b32.xlu0 %v472, 80
      %v1197 = vpop.permute.xlu0 %1196
      %1198 = vrot.lane.b32.xlu0 %v473, 80
      %v1199 = vpop.permute.xlu0 %1198
      %v1205 = vsel %vm583, %v1185, 0
      %v1208 = vsel %vm583, %v1187, 0
      %v1211 = vsel %vm583, %v1189, 0
      %v1214 = vsel %vm583, %v1191, 0
      %1216 = vmatprep.subr.bf16.mxu0 0
      %1217 = vmatpush1.bf16.msra.mxu0 %v1193
      %1218 = vmatprep.subr.bf16.mxu0 0
      %1219 = vmatpush1.bf16.msra.mxu0 %v1195
      %1220 = vmatprep.subr.bf16.mxu0 0
      %1221 = vmatpush1.bf16.msra.mxu0 %v1197
      %1222 = vmatprep.subr.bf16.mxu0 0
      %1223 = vmatpush1.bf16.msra.mxu0 %v1199
      %1224 = vmatprep.subr.bf16.mxu0 0
      %1225 = vmatpush1.bf16.msra.mxu0 0
      %1226 = vmatprep.subr.bf16.mxu0 0
      %1227 = vmatpush1.bf16.msra.mxu0 0
      %1228 = vmatprep.subr.bf16.mxu0 0
      %1229 = vmatpush1.bf16.msra.mxu0 0
      %1230 = vmatprep.subr.bf16.mxu0 0
      %1231 = vmatpush1.bf16.msra.mxu0 0
      %1232 = vmatprep.subr.bf16.mxu0 0
      %1233 = vmatpush1.bf16.msra.mxu0 0
      %1234 = vmatprep.subr.bf16.mxu0 0
      %1235 = vmatpush1.bf16.msra.mxu0 0
      %1236 = vmatprep.subr.bf16.mxu0 0
      %1237 = vmatpush1.bf16.msra.mxu0 0
      %1238 = vmatprep.subr.bf16.mxu0 0
      %1239 = vmatpush1.bf16.msra.mxu0 0
      %1240 = vmatprep.subr.bf16.mxu0 0
      %1241 = vmatpush1.bf16.msra.mxu0 0
      %1242 = vmatprep.subr.bf16.mxu0 0
      %1243 = vmatpush1.bf16.msra.mxu0 0
      %1244 = vmatprep.subr.bf16.mxu0 0
      %1245 = vmatpush1.bf16.msra.mxu0 0
      %1246 = vmatprep.subr.bf16.mxu0 0
      %1247 = vmatpush1.bf16.msra.mxu0 0
      %1248 = vmatprep.mubr.bf16.mxu0 0
      %1249 = vmatmul.mubr.bf16.gmra.mrb[0].mxu0 %v1205
      %v1250 = vpop.f32.mrb[0].mxu0
      %v1251 = vadd.f32 0.0, %v1250
      %v1252 = vpop.f32.mrb[0].mxu0
      %v1253 = vpop.f32.mrb[0].mxu0
      %v1254 = vadd.f32 0.0, %v1253
      %v1255 = vpop.f32.mrb[0].mxu0
      %1256 = vmatprep.mubr.bf16.mxu0 0
      %1257 = vmatmul.mubr.bf16.gmra.mrb[0].mxu0 %v1208
      %v1258 = vpop.f32.mrb[0].mxu0
      %v1259 = vadd.f32 0.0, %v1258
      %v1260 = vpop.f32.mrb[0].mxu0
      %v1261 = vpop.f32.mrb[0].mxu0
      %v1262 = vadd.f32 0.0, %v1261
      %v1263 = vpop.f32.mrb[0].mxu0
      %1264 = vmatprep.mubr.bf16.mxu0 0
      %1265 = vmatmul.mubr.bf16.gmra.mrb[0].mxu0 %v1211
      %v1266 = vpop.f32.mrb[0].mxu0
      %v1267 = vadd.f32 0.0, %v1266
      %v1268 = vpop.f32.mrb[0].mxu0
      %v1269 = vpop.f32.mrb[0].mxu0
      %v1270 = vadd.f32 0.0, %v1269
      %v1271 = vpop.f32.mrb[0].mxu0
      %1272 = vmatprep.mubr.bf16.mxu0 0
      %1273 = vmatmul.mubr.bf16.gmra.mrb[0].mxu0 %v1214
      %v1274 = vpop.f32.mrb[0].mxu0
      %v1275 = vadd.f32 0.0, %v1274
      %v1276 = vpop.f32.mrb[0].mxu0
      %v1277 = vpop.f32.mrb[0].mxu0
      %v1278 = vadd.f32 0.0, %v1277
      %v1279 = vpop.f32.mrb[0].mxu0
      %1280 = vdwg.mxu0
      %1281 = vrot.lane.b32.xlu0 %v352, 48
      %v1282 = vpop.permute.xlu0 %1281
      %1283 = vrot.lane.b32.xlu0 %v353, 48
      %v1284 = vpop.permute.xlu0 %1283
      %1285 = vrot.lane.b32.xlu0 %v354, 48
      %v1286 = vpop.permute.xlu0 %1285
      %1287 = vrot.lane.b32.xlu0 %v355, 48
      %v1288 = vpop.permute.xlu0 %1287
      %v1294 = vsel %vm583, %v1176, 0
      %v1297 = vsel %vm583, %v1177, 0
      %v1300 = vsel %vm583, %v1178, 0
      %v1303 = vsel %vm583, %v1179, 0
      %1305 = vmatprep.subr.bf16.mxu0 0
      %1306 = vmatpush1.bf16.msra.mxu0 %v1282
      %1307 = vmatprep.subr.bf16.mxu0 0
      %1308 = vmatpush1.bf16.msra.mxu0 %v1284
      %1309 = vmatprep.subr.bf16.mxu0 0
      %1310 = vmatpush1.bf16.msra.mxu0 %v1286
      %1311 = vmatprep.subr.bf16.mxu0 0
      %1312 = vmatpush1.bf16.msra.mxu0 %v1288
      %1313 = vmatprep.subr.bf16.mxu0 0
      %1314 = vmatpush1.bf16.msra.mxu0 0
      %1315 = vmatprep.subr.bf16.mxu0 0
      %1316 = vmatpush1.bf16.msra.mxu0 0
      %1317 = vmatprep.subr.bf16.mxu0 0
      %1318 = vmatpush1.bf16.msra.mxu0 0
      %1319 = vmatprep.subr.bf16.mxu0 0
      %1320 = vmatpush1.bf16.msra.mxu0 0
      %1321 = vmatprep.subr.bf16.mxu0 0
      %1322 = vmatpush1.bf16.msra.mxu0 0
      %1323 = vmatprep.subr.bf16.mxu0 0
      %1324 = vmatpush1.bf16.msra.mxu0 0
      %1325 = vmatprep.subr.bf16.mxu0 0
      %1326 = vmatpush1.bf16.msra.mxu0 0
      %1327 = vmatprep.subr.bf16.mxu0 0
      %1328 = vmatpush1.bf16.msra.mxu0 0
      %1329 = vmatprep.subr.bf16.mxu0 0
      %1330 = vmatpush1.bf16.msra.mxu0 0
      %1331 = vmatprep.subr.bf16.mxu0 0
      %1332 = vmatpush1.bf16.msra.mxu0 0
      %1333 = vmatprep.subr.bf16.mxu0 0
      %1334 = vmatpush1.bf16.msra.mxu0 0
      %1335 = vmatprep.subr.bf16.mxu0 0
      %1336 = vmatpush1.bf16.msra.mxu0 0
      %1337 = vmatprep.mubr.bf16.mxu0 0
      %1338 = vmatmul.mubr.bf16.gmra.mrb[0].mxu0 %v1294
      %v1339 = vpop.f32.mrb[0].mxu0
      %v1340 = vadd.f32 %v1251, %v1339
      %v1341 = vpop.f32.mrb[0].mxu0
      %v1342 = vpop.f32.mrb[0].mxu0
      %v1343 = vadd.f32 %v1254, %v1342
      %v1344 = vpop.f32.mrb[0].mxu0
      %1345 = vmatprep.mubr.bf16.mxu0 0
      %1346 = vmatmul.mubr.bf16.gmra.mrb[0].mxu0 %v1297
      %v1347 = vpop.f32.mrb[0].mxu0
      %v1348 = vadd.f32 %v1259, %v1347
      %v1349 = vpop.f32.mrb[0].mxu0
      %v1350 = vpop.f32.mrb[0].mxu0
      %v1351 = vadd.f32 %v1262, %v1350
      %v1352 = vpop.f32.mrb[0].mxu0
      %1353 = vmatprep.mubr.bf16.mxu0 0
      %1354 = vmatmul.mubr.bf16.gmra.mrb[0].mxu0 %v1300
      %v1355 = vpop.f32.mrb[0].mxu0
      %v1356 = vadd.f32 %v1267, %v1355
      %v1357 = vpop.f32.mrb[0].mxu0
      %v1358 = vpop.f32.mrb[0].mxu0
      %v1359 = vadd.f32 %v1270, %v1358
      %v1360 = vpop.f32.mrb[0].mxu0
      %1361 = vmatprep.mubr.bf16.mxu0 0
      %1362 = vmatmul.mubr.bf16.gmra.mrb[0].mxu0 %v1303
      %v1363 = vpop.f32.mrb[0].mxu0
      %v1364 = vadd.f32 %v1275, %v1363
      %v1365 = vpop.f32.mrb[0].mxu0
      %v1366 = vpop.f32.mrb[0].mxu0
      %v1367 = vadd.f32 %v1278, %v1366
      %v1368 = vpop.f32.mrb[0].mxu0
      %1369 = vdwg.mxu0
      %1378 = vrot.lane.b32.xlu0 %v1340, 16
      %v1379 = vpop.permute.xlu0 %1378
      %1380 = vrot.lane.b32.xlu0 %v1343, 16
      %v1381 = vpop.permute.xlu0 %1380
      %1382 = vrot.lane.b32.xlu0 %v1348, 16
      %v1383 = vpop.permute.xlu0 %1382
      %1384 = vrot.lane.b32.xlu0 %v1351, 16
      %v1385 = vpop.permute.xlu0 %1384
      %1386 = vrot.lane.b32.xlu0 %v1356, 16
      %v1387 = vpop.permute.xlu0 %1386
      %1388 = vrot.lane.b32.xlu0 %v1359, 16
      %v1389 = vpop.permute.xlu0 %1388
      %1390 = vrot.lane.b32.xlu0 %v1364, 16
      %v1391 = vpop.permute.xlu0 %1390
      %1392 = vrot.lane.b32.xlu0 %v1367, 16
      %v1393 = vpop.permute.xlu0 %1392
      %v1402 = vsel %vm364, %v836, %v1379
      %v1403 = vsel %vm364, %v839, %v1381
      %v1404 = vsel %vm364, %v844, %v1383
      %v1405 = vsel %vm364, %v847, %v1385
      %v1406 = vsel %vm364, %v852, %v1387
      %v1407 = vsel %vm364, %v855, %v1389
      %v1408 = vsel %vm364, %v860, %v1391
      %v1409 = vsel %vm364, %v863, %v1393
      %v1410 = vpack.c.bf16 %v1403, %v1402
      %v1411 = vpack.c.bf16 %v1405, %v1404
      %v1412 = vpack.c.bf16 %v1407, %v1406
      %v1413 = vpack.c.bf16 %v1409, %v1408
      %v1414 = vld [vmem:[%s2] sm:$0xf]
      %v1415 = vld [vmem:[%s2 + $0x4] sm:$0xf]
      %v1416 = vld [vmem:[%s2 + $0x8] sm:$0xf]
      %v1417 = vld [vmem:[%s2 + $0xc] sm:$0xf]
      %v1418 = vld [vmem:[%s3] sm:$0x1]
      %v1420 = vlaneseq
      %v1421 = vshrl.u32 %v1420, 7
      %v1422 = vsub.s32 0, %v1421
      %v1423 = vrot.slane %v1418, %v1422
      %v1429 = vunpack.c.l.b16 %v1414
      %v1430 = vunpack.c.l.b16 %v1415
      %v1431 = vunpack.c.l.b16 %v1416
      %v1432 = vunpack.c.l.b16 %v1417
      %v1433 = vpack.c.b16 %v1430, %v1429
      %v1434 = vpack.c.b16 %v1432, %v1431
      %vm1437 = vcmask 261120
      %v1439 = vsel %vm1437, %v1410, 0
      %v1442 = vsel %vm1437, %v1411, 0
      %v1445 = vsel %vm1437, %v1412, 0
      %v1448 = vsel %vm1437, %v1413, 0
      %1450 = vmatprep.subr.bf16.mxu0 0
      %1451 = vmatpush1.bf16.msra.mxu0 %v1433
      %1452 = vmatprep.subr.bf16.mxu0 0
      %1453 = vmatpush1.bf16.msra.mxu0 %v1434
      %1454 = vmatprep.subr.bf16.mxu0 0
      %1455 = vmatpush1.bf16.msra.mxu0 0
      %1456 = vmatprep.subr.bf16.mxu0 0
      %1457 = vmatpush1.bf16.msra.mxu0 0
      %1458 = vmatprep.subr.bf16.mxu0 0
      %1459 = vmatpush1.bf16.msra.mxu0 0
      %1460 = vmatprep.subr.bf16.mxu0 0
      %1461 = vmatpush1.bf16.msra.mxu0 0
      %1462 = vmatprep.subr.bf16.mxu0 0
      %1463 = vmatpush1.bf16.msra.mxu0 0
      %1464 = vmatprep.subr.bf16.mxu0 0
      %1465 = vmatpush1.bf16.msra.mxu0 0
      %1466 = vmatprep.subr.bf16.mxu0 0
      %1467 = vmatpush1.bf16.msra.mxu0 0
      %1468 = vmatprep.subr.bf16.mxu0 0
      %1469 = vmatpush1.bf16.msra.mxu0 0
      %1470 = vmatprep.subr.bf16.mxu0 0
      %1471 = vmatpush1.bf16.msra.mxu0 0
      %1472 = vmatprep.subr.bf16.mxu0 0
      %1473 = vmatpush1.bf16.msra.mxu0 0
      %1474 = vmatprep.subr.bf16.mxu0 0
      %1475 = vmatpush1.bf16.msra.mxu0 0
      %1476 = vmatprep.subr.bf16.mxu0 0
      %1477 = vmatpush1.bf16.msra.mxu0 0
      %1478 = vmatprep.subr.bf16.mxu0 0
      %1479 = vmatpush1.bf16.msra.mxu0 0
      %1480 = vmatprep.subr.bf16.mxu0 0
      %1481 = vmatpush1.bf16.msra.mxu0 0
      %1482 = vmatprep.mubr.bf16.mxu0 0
      %1483 = vmatmul.mubr.bf16.gmra.mrb[0].mxu0 %v1439
      %v1484 = vpop.f32.mrb[0].mxu0
      %v1485 = vadd.f32 %v1423, %v1484
      %v1486 = vpop.f32.mrb[0].mxu0
      %v1487 = vpop.f32.mrb[0].mxu0
      %v1488 = vadd.f32 %v1423, %v1487
      %v1489 = vpop.f32.mrb[0].mxu0
      %1490 = vmatprep.mubr.bf16.mxu0 0
      %1491 = vmatmul.mubr.bf16.gmra.mrb[0].mxu0 %v1442
      %v1492 = vpop.f32.mrb[0].mxu0
      %v1493 = vadd.f32 %v1423, %v1492
      %v1494 = vpop.f32.mrb[0].mxu0
      %v1495 = vpop.f32.mrb[0].mxu0
      %v1496 = vadd.f32 %v1423, %v1495
      %v1497 = vpop.f32.mrb[0].mxu0
      %1498 = vmatprep.mubr.bf16.mxu0 0
      %1499 = vmatmul.mubr.bf16.gmra.mrb[0].mxu0 %v1445
      %v1500 = vpop.f32.mrb[0].mxu0
      %v1501 = vadd.f32 %v1423, %v1500
      %v1502 = vpop.f32.mrb[0].mxu0
      %v1503 = vpop.f32.mrb[0].mxu0
      %v1504 = vadd.f32 %v1423, %v1503
      %v1505 = vpop.f32.mrb[0].mxu0
      %1506 = vmatprep.mubr.bf16.mxu0 0
      %1507 = vmatmul.mubr.bf16.gmra.mrb[0].mxu0 %v1448
      %v1508 = vpop.f32.mrb[0].mxu0
      %v1509 = vadd.f32 %v1423, %v1508
      %v1510 = vpop.f32.mrb[0].mxu0
      %v1511 = vpop.f32.mrb[0].mxu0
      %v1512 = vadd.f32 %v1423, %v1511
      %v1513 = vpop.f32.mrb[0].mxu0
      %1514 = vdwg.mxu0
      %v1515 = vld [vmem:[%s313] sm:$0xf]
      %v1516 = vld [vmem:[%s313 + $0x4] sm:$0xf]
      %v1517 = vld [vmem:[%s313 + $0x8] sm:$0xf]
      %v1518 = vld [vmem:[%s313 + $0xc] sm:$0xf]
      %v1519 = vld [vmem:[%s313 + $0x10] sm:$0xf]
      %v1520 = vld [vmem:[%s313 + $0x14] sm:$0xf]
      %v1521 = vld [vmem:[%s313 + $0x18] sm:$0xf]
      %v1522 = vld [vmem:[%s313 + $0x1c] sm:$0xf]
      %v1523 = vunpack.c.l.bf16 %v1515
      %v1524 = vunpack.c.l.bf16 %v1516
      %v1525 = vunpack.c.l.bf16 %v1517
      %v1526 = vunpack.c.l.bf16 %v1518
      %v1527 = vunpack.c.l.bf16 %v1519
      %v1528 = vunpack.c.l.bf16 %v1520
      %v1529 = vunpack.c.l.bf16 %v1521
      %v1530 = vunpack.c.l.bf16 %v1522
      %v1531 = vadd.f32 %v1485, %v1523
      %v1532 = vadd.f32 %v1488, %v1524
      %v1533 = vadd.f32 %v1493, %v1525
      %v1534 = vadd.f32 %v1496, %v1526
      %v1535 = vadd.f32 %v1501, %v1527
      %v1536 = vadd.f32 %v1504, %v1528
      %v1537 = vadd.f32 %v1509, %v1529
      %v1538 = vadd.f32 %v1512, %v1530
      %v1539 = vsel %vm1437, %v1531, 0.0
      %1540 = vadd.xlane.f32.xlu0 %v1539
      %v1541 = vpop.xlane.xlu0 %1540
      %v1542 = vsel %vm1437, %v1532, 0.0
      %1543 = vadd.xlane.f32.xlu0 %v1542
      %v1544 = vpop.xlane.xlu0 %1543
      %v1545 = vsel %vm1437, %v1533, 0.0
      %1546 = vadd.xlane.f32.xlu0 %v1545
      %v1547 = vpop.xlane.xlu0 %1546
      %v1548 = vsel %vm1437, %v1534, 0.0
      %1549 = vadd.xlane.f32.xlu0 %v1548
      %v1550 = vpop.xlane.xlu0 %1549
      %v1551 = vsel %vm1437, %v1535, 0.0
      %1552 = vadd.xlane.f32.xlu0 %v1551
      %v1553 = vpop.xlane.xlu0 %1552
      %v1554 = vsel %vm1437, %v1536, 0.0
      %1555 = vadd.xlane.f32.xlu0 %v1554
      %v1556 = vpop.xlane.xlu0 %1555
      %v1557 = vsel %vm1437, %v1537, 0.0
      %1558 = vadd.xlane.f32.xlu0 %v1557
      %v1559 = vpop.xlane.xlu0 %1558
      %v1560 = vsel %vm1437, %v1538, 0.0
      %1561 = vadd.xlane.f32.xlu0 %v1560
      %v1562 = vpop.xlane.xlu0 %1561
      %v1563 = vrcp.pop 32.0
      %v1564 = vmul.f32 %v1541, %v1563
      %v1565 = vmul.f32 %v1544, %v1563
      %v1566 = vmul.f32 %v1547, %v1563
      %v1567 = vmul.f32 %v1550, %v1563
      %v1568 = vmul.f32 %v1553, %v1563
      %v1569 = vmul.f32 %v1556, %v1563
      %v1570 = vmul.f32 %v1559, %v1563
      %v1571 = vmul.f32 %v1562, %v1563
      %v1572 = vsub.f32 %v1531, %v1564
      %v1573 = vsub.f32 %v1532, %v1565
      %v1574 = vsub.f32 %v1533, %v1566
      %v1575 = vsub.f32 %v1534, %v1567
      %v1576 = vsub.f32 %v1535, %v1568
      %v1577 = vsub.f32 %v1536, %v1569
      %v1578 = vsub.f32 %v1537, %v1570
      %v1579 = vsub.f32 %v1538, %v1571
      %v1580 = vmul.f32 %v1572, %v1572
      %v1581 = vmul.f32 %v1573, %v1573
      %v1582 = vmul.f32 %v1574, %v1574
      %v1583 = vmul.f32 %v1575, %v1575
      %v1584 = vmul.f32 %v1576, %v1576
      %v1585 = vmul.f32 %v1577, %v1577
      %v1586 = vmul.f32 %v1578, %v1578
      %v1587 = vmul.f32 %v1579, %v1579
      %v1588 = vsel %vm1437, %v1580, 0.0
      %1589 = vadd.xlane.f32.xlu0 %v1588
      %v1590 = vpop.xlane.xlu0 %1589
      %v1591 = vsel %vm1437, %v1581, 0.0
      %1592 = vadd.xlane.f32.xlu0 %v1591
      %v1593 = vpop.xlane.xlu0 %1592
      %v1594 = vsel %vm1437, %v1582, 0.0
      %1595 = vadd.xlane.f32.xlu0 %v1594
      %v1596 = vpop.xlane.xlu0 %1595
      %v1597 = vsel %vm1437, %v1583, 0.0
      %1598 = vadd.xlane.f32.xlu0 %v1597
      %v1599 = vpop.xlane.xlu0 %1598
      %v1600 = vsel %vm1437, %v1584, 0.0
      %1601 = vadd.xlane.f32.xlu0 %v1600
      %v1602 = vpop.xlane.xlu0 %1601
      %v1603 = vsel %vm1437, %v1585, 0.0
      %1604 = vadd.xlane.f32.xlu0 %v1603
      %v1605 = vpop.xlane.xlu0 %1604
      %v1606 = vsel %vm1437, %v1586, 0.0
      %1607 = vadd.xlane.f32.xlu0 %v1606
      %v1608 = vpop.xlane.xlu0 %1607
      %v1609 = vsel %vm1437, %v1587, 0.0
      %1610 = vadd.xlane.f32.xlu0 %v1609
      %v1611 = vpop.xlane.xlu0 %1610
      %v1612 = vmul.f32 %v1590, %v1563
      %v1613 = vmul.f32 %v1593, %v1563
      %v1614 = vmul.f32 %v1596, %v1563
      %v1615 = vmul.f32 %v1599, %v1563
      %v1616 = vmul.f32 %v1602, %v1563
      %v1617 = vmul.f32 %v1605, %v1563
      %v1618 = vmul.f32 %v1608, %v1563
      %v1619 = vmul.f32 %v1611, %v1563
      %v1620 = vadd.f32 %v1612, 1e-06
      %v1621 = vadd.f32 %v1613, 1e-06
      %v1622 = vadd.f32 %v1614, 1e-06
      %v1623 = vadd.f32 %v1615, 1e-06
      %v1624 = vadd.f32 %v1616, 1e-06
      %v1625 = vadd.f32 %v1617, 1e-06
      %v1626 = vadd.f32 %v1618, 1e-06
      %v1627 = vadd.f32 %v1619, 1e-06
      %v1628 = vrsqrt.pop %v1620
      %v1629 = vrsqrt.pop %v1621
      %v1630 = vrsqrt.pop %v1622
      %v1631 = vrsqrt.pop %v1623
      %v1632 = vrsqrt.pop %v1624
      %v1633 = vrsqrt.pop %v1625
      %v1634 = vrsqrt.pop %v1626
      %v1635 = vrsqrt.pop %v1627
      %v1636 = vmul.f32 %v1572, %v1628
      %v1637 = vmul.f32 %v1573, %v1629
      %v1638 = vmul.f32 %v1574, %v1630
      %v1639 = vmul.f32 %v1575, %v1631
      %v1640 = vmul.f32 %v1576, %v1632
      %v1641 = vmul.f32 %v1577, %v1633
      %v1642 = vmul.f32 %v1578, %v1634
      %v1643 = vmul.f32 %v1579, %v1635
      %v1644 = vld [vmem:[%s5] sm:$0x1]
      %v1646 = vlaneseq
      %v1647 = vshrl.u32 %v1646, 7
      %v1648 = vsub.s32 0, %v1647
      %v1649 = vrot.slane %v1644, %v1648
      %v1651 = vmul.f32 %v1636, %v1649
      %v1652 = vmul.f32 %v1637, %v1649
      %v1653 = vmul.f32 %v1638, %v1649
      %v1654 = vmul.f32 %v1639, %v1649
      %v1655 = vmul.f32 %v1640, %v1649
      %v1656 = vmul.f32 %v1641, %v1649
      %v1657 = vmul.f32 %v1642, %v1649
      %v1658 = vmul.f32 %v1643, %v1649
      %v1659 = vld [vmem:[%s6] sm:$0x1]
      %v1661 = vlaneseq
      %v1662 = vshrl.u32 %v1661, 7
      %v1663 = vsub.s32 0, %v1662
      %v1664 = vrot.slane %v1659, %v1663
      %v1666 = vadd.f32 %v1651, %v1664
      %v1667 = vadd.f32 %v1652, %v1664
      %v1668 = vadd.f32 %v1653, %v1664
      %v1669 = vadd.f32 %v1654, %v1664
      %v1670 = vadd.f32 %v1655, %v1664
      %v1671 = vadd.f32 %v1656, %v1664
      %v1672 = vadd.f32 %v1657, %v1664
      %v1673 = vadd.f32 %v1658, %v1664
      %v1674 = vpack.c.bf16 %v1667, %v1666
      %v1675 = vpack.c.bf16 %v1669, %v1668
      %v1676 = vpack.c.bf16 %v1671, %v1670
      %v1677 = vpack.c.bf16 %v1673, %v1672
      %v1682 = vunpack.c.l.b16 %v1674
      %v1683 = vunpack.c.h.b16 %v1674
      %v1684 = vunpack.c.l.b16 %v1675
      %v1685 = vunpack.c.h.b16 %v1675
      %v1686 = vunpack.c.l.b16 %v1676
      %v1687 = vunpack.c.h.b16 %v1676
      %v1688 = vunpack.c.l.b16 %v1677
      %v1689 = vunpack.c.h.b16 %v1677
      %v1690 = vpack.c.b16 %v1682, %v1682
      %v1691 = vpack.c.b16 %v1683, %v1683
      %v1692 = vpack.c.b16 %v1684, %v1684
      %v1693 = vpack.c.b16 %v1685, %v1685
      %v1694 = vpack.c.b16 %v1686, %v1686
      %v1695 = vpack.c.b16 %v1687, %v1687
      %v1696 = vpack.c.b16 %v1688, %v1688
      %v1697 = vpack.c.b16 %v1689, %v1689
      %vm1706 = vcmask 257024
      %1707 = vst.msk [vmem:[%s318] sm:$0xf] %vm1706, %v1690
      %1708 = vst.msk [vmem:[%s318 + $0x4] sm:$0xf] %vm1706, %v1691
      %1709 = vst.msk [vmem:[%s318 + $0x8] sm:$0xf] %vm1706, %v1692
      %1710 = vst.msk [vmem:[%s318 + $0xc] sm:$0xf] %vm1706, %v1693
      %1711 = vst.msk [vmem:[%s318 + $0x10] sm:$0xf] %vm1706, %v1694
      %1712 = vst.msk [vmem:[%s318 + $0x14] sm:$0xf] %vm1706, %v1695
      %1713 = vst.msk [vmem:[%s318 + $0x18] sm:$0xf] %vm1706, %v1696
      %1714 = vst.msk [vmem:[%s318 + $0x1c] sm:$0xf] %vm1706, %v1697
      %p1715 = scmp.lt.s32.totalorder %s18, 1
      %s1716 = scalar_select %p1715, %s18, 1
      %s1717 = smul.addr %s1716, 8
      %s1718 = smul.addr %s1717, 4
      %s1719 = scalar_lea.vmem %s7, %s1718
      // Predicated region
      $region49: #{ff_rgb_forward.13} parent=47 // pred_check
        %p1720 = pneg %p198
      $region50: #{ff_rgb_forward.13} parent=47 // pred_check_branch
        %1722 = sbr.rel (%p1720) target = $region52
      $region51: #{ff_rgb_forward.13} parent=47 // pred_region
        _
      $region52: #{ff_rgb_forward.13} parent=47 // pred_fallthru
        _
    $region48: #{ff_rgb_forward.13} parent=5 // pred_fallthru
      _
    %p1723 = scmp.le.s32.totalorder 2, %s13
    // Predicated region
    $region53: #{ff_rgb_forward.13} parent=5 // pred_check
      %p1724 = pneg %p1723
    $region54: #{ff_rgb_forward.13} parent=5 // pred_check_branch
      %1726 = sbr.rel (%p1724) target = $region56
    $region55: #{ff_rgb_forward.13} parent=5 // pred_region
      %s1727 = ssub.s32 %s13, 2
      // Predicated region
      $region57: #{ff_rgb_forward.13} parent=55 // pred_check
        %p1728 = pneg %p204
      $region58: #{ff_rgb_forward.13} parent=55 // pred_check_branch
        %1730 = sbr.rel (%p1728) target = $region60
      $region59: #{ff_rgb_forward.13} parent=55 // pred_region
        %p1731 = scmp.lt.s32.totalorder %s19, 1
        %s1732 = scalar_select %p1731, %s19, 1
        %s1733 = smul.addr %s1732, 8
        %s1734 = smul.addr %s1733, 4
        %s1735 = scalar_lea.vmem %s7, %s1734
      $region60: #{ff_rgb_forward.13} parent=55 // pred_fallthru
        _
    $region56: #{ff_rgb_forward.13} parent=5 // pred_fallthru
      _
  $region6: #{ff_rgb_forward.13} parent=0 // loop_footer
    %s17 = sadd.s32 1, %s13
  $region7: #{ff_rgb_forward.13} parent=0 // loop_footer_branch
    %12 = sbr.rel target = $region3
  $region8: #{ff_rgb_forward.13} parent=0 // loop_exit
    _

// kernel: ff_rgb_forward.17
$region0: #{ff_rgb_forward.17}
  #allocation0 [shape = 'u32[]', space=smem, size = 0x4, offset = 0x4, fixed_abs, tag = 'smem constant byte address 0x4 - core index']
  #allocation1 [shape = 'u32[144,128]{1,0:T(1,128)}', space=vmem, size = 0x12000, scoped, tag = 'internal scratch']
  %s0 = inlined_call_operand.vmem [shape: bf16[128,32], index: 0, kind: input, shape index: {}]
  %s1 = inlined_call_operand.vmem [shape: bf16[32,32], index: 1, kind: input, shape index: {}]
  %s2 = inlined_call_operand.vmem [shape: f32[128,32], index: 2, kind: input, shape index: {}]
  %s3 = inlined_call_operand.vmem [shape: f32[1,32], index: 3, kind: input, shape index: {}]
  %s4 = inlined_call_operand.vmem [shape: f32[1,32], index: 4, kind: input, shape index: {}]
  %s5 = inlined_call_operand.vmem [shape: f32[1,32], index: 5, kind: input, shape index: {}]
  %s6 = inlined_call_operand.vmem [shape: f32[1,32], index: 6, kind: input, shape index: {}]
  %s7 = inlined_call_operand.hbm [shape: f32[128,32], index: 7, kind: output, shape index: {}]
  %s8 = sld [smem:[#allocation0]]
  $region38: #{ff_rgb_forward.17} parent=0
    _
  %s10 = ssub.s32 1, %s8
  %s11 = scalar_select 0, %s10, %s8
  $region1: #{ff_rgb_forward.17} parent=0
    #allocation2 [shape = 'u8[65536]{0}', space=vmem, size = 0x10000, scoped, tag = 'output window, operand 0, single buffered']
    #allocation3 [shape = 's32[1]{0}', space=sflag, size = 0x4, scoped, tag = 'scoped memory for ff_rgb_forward.17']
    %12 = vsyncpa [#allocation3], 0
    // Predicated region
    $region2: #{ff_rgb_forward.17} parent=1 // pred_check
      _
    $region3: #{ff_rgb_forward.17} parent=1 // pred_check_branch
      %14 = sbr.rel (0) target = $region5
    $region4: #{ff_rgb_forward.17} parent=1 // pred_region
      _
    $region5: #{ff_rgb_forward.17} parent=1 // pred_fallthru
      _
    // Predicated region
    $region6: #{ff_rgb_forward.17} parent=1 // pred_check
      _
    $region7: #{ff_rgb_forward.17} parent=1 // pred_check_branch
      %16 = sbr.rel (0) target = $region9
    $region8: #{ff_rgb_forward.17} parent=1 // pred_region
      _
    $region9: #{ff_rgb_forward.17} parent=1 // pred_fallthru
      _
    // Predicated region
    $region10: #{ff_rgb_forward.17} parent=1 // pred_check
      _
    $region11: #{ff_rgb_forward.17} parent=1 // pred_check_branch
      %18 = sbr.rel (0) target = $region13
    $region12: #{ff_rgb_forward.17} parent=1 // pred_region
      _
    $region13: #{ff_rgb_forward.17} parent=1 // pred_fallthru
      _
    // Predicated region
    $region14: #{ff_rgb_forward.17} parent=1 // pred_check
      _
    $region15: #{ff_rgb_forward.17} parent=1 // pred_check_branch
      %20 = sbr.rel (0) target = $region17
    $region16: #{ff_rgb_forward.17} parent=1 // pred_region
      _
    $region17: #{ff_rgb_forward.17} parent=1 // pred_fallthru
      _
    // Predicated region
    $region18: #{ff_rgb_forward.17} parent=1 // pred_check
      _
    $region19: #{ff_rgb_forward.17} parent=1 // pred_check_branch
      %22 = sbr.rel (0) target = $region21
    $region20: #{ff_rgb_forward.17} parent=1 // pred_region
      _
    $region21: #{ff_rgb_forward.17} parent=1 // pred_fallthru
      _
    // Predicated region
    $region22: #{ff_rgb_forward.17} parent=1 // pred_check
      _
    $region23: #{ff_rgb_forward.17} parent=1 // pred_check_branch
      %24 = sbr.rel (0) target = $region25
    $region24: #{ff_rgb_forward.17} parent=1 // pred_region
      _
    $region25: #{ff_rgb_forward.17} parent=1 // pred_fallthru
      _
    // Predicated region
    $region26: #{ff_rgb_forward.17} parent=1 // pred_check
      _
    $region27: #{ff_rgb_forward.17} parent=1 // pred_check_branch
      %26 = sbr.rel (0) target = $region29
    $region28: #{ff_rgb_forward.17} parent=1 // pred_region
      _
    $region29: #{ff_rgb_forward.17} parent=1 // pred_fallthru
      _
    %v28 = vld [vmem:[%s0] sm:$0xf]
    %v29 = vld [vmem:[%s0 + $0x4] sm:$0xf]
    %v30 = vld [vmem:[%s0 + $0x8] sm:$0xf]
    %v31 = vld [vmem:[%s0 + $0xc] sm:$0xf]
    %v32 = vld [vmem:[%s0 + $0x10] sm:$0xf]
    %v33 = vld [vmem:[%s0 + $0x14] sm:$0xf]
    %v34 = vld [vmem:[%s0 + $0x18] sm:$0xf]
    %v35 = vld [vmem:[%s0 + $0x1c] sm:$0xf]
    %v36 = vld [vmem:[%s0 + $0x20] sm:$0xf]
    %v37 = vld [vmem:[%s0 + $0x24] sm:$0xf]
    %v38 = vld [vmem:[%s0 + $0x28] sm:$0xf]
    %v39 = vld [vmem:[%s0 + $0x2c] sm:$0xf]
    %v40 = vld [vmem:[%s0 + $0x30] sm:$0xf]
    %v41 = vld [vmem:[%s0 + $0x34] sm:$0xf]
    %v42 = vld [vmem:[%s0 + $0x38] sm:$0xf]
    %v43 = vld [vmem:[%s0 + $0x3c] sm:$0xf]
    %v44 = vld [vmem:[%s1] sm:$0xf]
    %v45 = vld [vmem:[%s1 + $0x4] sm:$0xf]
    %v46 = vld [vmem:[%s1 + $0x8] sm:$0xf]
    %v47 = vld [vmem:[%s1 + $0xc] sm:$0xf]
    %v64 = vunpack.c.l.b16 %v28
    %v65 = vunpack.c.l.b16 %v29
    %v66 = vunpack.c.l.b16 %v30
    %v67 = vunpack.c.l.b16 %v31
    %v68 = vunpack.c.l.b16 %v32
    %v69 = vunpack.c.l.b16 %v33
    %v70 = vunpack.c.l.b16 %v34
    %v71 = vunpack.c.l.b16 %v35
    %v72 = vunpack.c.l.b16 %v36
    %v73 = vunpack.c.l.b16 %v37
    %v74 = vunpack.c.l.b16 %v38
    %v75 = vunpack.c.l.b16 %v39
    %v76 = vunpack.c.l.b16 %v40
    %v77 = vunpack.c.l.b16 %v41
    %v78 = vunpack.c.l.b16 %v42
    %v79 = vunpack.c.l.b16 %v43
    %v80 = vpack.c.b16 %v65, %v64
    %v81 = vpack.c.b16 %v67, %v66
    %v82 = vpack.c.b16 %v69, %v68
    %v83 = vpack.c.b16 %v71, %v70
    %v84 = vpack.c.b16 %v73, %v72
    %v85 = vpack.c.b16 %v75, %v74
    %v86 = vpack.c.b16 %v77, %v76
    %v87 = vpack.c.b16 %v79, %v78
    %v92 = vunpack.c.l.b16 %v44
    %v93 = vunpack.c.l.b16 %v45
    %v94 = vunpack.c.l.b16 %v46
    %v95 = vunpack.c.l.b16 %v47
    %v96 = vpack.c.b16 %v93, %v92
    %v97 = vpack.c.b16 %v95, %v94
    %vm100 = vcmask 261120
    %v102 = vsel %vm100, %v80, 0
    %v105 = vsel %vm100, %v81, 0
    %v108 = vsel %vm100, %v82, 0
    %v111 = vsel %vm100, %v83, 0
    %v114 = vsel %vm100, %v84, 0
    %v117 = vsel %vm100, %v85, 0
    %v120 = vsel %vm100, %v86, 0
    %v123 = vsel %vm100, %v87, 0
    %125 = vmatprep.subr.bf16.mxu0 0
    %126 = vmatpush1.bf16.msra.mxu0 %v96
    %127 = vmatprep.subr.bf16.mxu0 0
    %128 = vmatpush1.bf16.msra.mxu0 %v97
    %129 = vmatprep.subr.bf16.mxu0 0
    %130 = vmatpush1.bf16.msra.mxu0 0
    %131 = vmatprep.subr.bf16.mxu0 0
    %132 = vmatpush1.bf16.msra.mxu0 0
    %133 = vmatprep.subr.bf16.mxu0 0
    %134 = vmatpush1.bf16.msra.mxu0 0
    %135 = vmatprep.subr.bf16.mxu0 0
    %136 = vmatpush1.bf16.msra.mxu0 0
    %137 = vmatprep.subr.bf16.mxu0 0
    %138 = vmatpush1.bf16.msra.mxu0 0
    %139 = vmatprep.subr.bf16.mxu0 0
    %140 = vmatpush1.bf16.msra.mxu0 0
    %141 = vmatprep.subr.bf16.mxu0 0
    %142 = vmatpush1.bf16.msra.mxu0 0
    %143 = vmatprep.subr.bf16.mxu0 0
    %144 = vmatpush1.bf16.msra.mxu0 0
    %145 = vmatprep.subr.bf16.mxu0 0
    %146 = vmatpush1.bf16.msra.mxu0 0
    %147 = vmatprep.subr.bf16.mxu0 0
    %148 = vmatpush1.bf16.msra.mxu0 0
    %149 = vmatprep.subr.bf16.mxu0 0
    %150 = vmatpush1.bf16.msra.mxu0 0
    %151 = vmatprep.subr.bf16.mxu0 0
    %152 = vmatpush1.bf16.msra.mxu0 0
    %153 = vmatprep.subr.bf16.mxu0 0
    %154 = vmatpush1.bf16.msra.mxu0 0
    %155 = vmatprep.subr.bf16.mxu0 0
    %156 = vmatpush1.bf16.msra.mxu0 0
    %157 = vmatprep.mubr.bf16.mxu0 0
    %158 = vmatmul.mubr.bf16.gmra.mrb[0].mxu0 %v102
    %v159 = vpop.f32.mrb[0].mxu0
    %v160 = vadd.f32 0.0, %v159
    %v161 = vpop.f32.mrb[0].mxu0
    %v162 = vpop.f32.mrb[0].mxu0
    %v163 = vadd.f32 0.0, %v162
    %v164 = vpop.f32.mrb[0].mxu0
    %165 = vmatprep.mubr.bf16.mxu0 0
    %166 = vmatmul.mubr.bf16.gmra.mrb[0].mxu0 %v105
    %v167 = vpop.f32.mrb[0].mxu0
    %v168 = vadd.f32 0.0, %v167
    %v169 = vpop.f32.mrb[0].mxu0
    %v170 = vpop.f32.mrb[0].mxu0
    %v171 = vadd.f32 0.0, %v170
    %v172 = vpop.f32.mrb[0].mxu0
    %173 = vmatprep.mubr.bf16.mxu0 0
    %174 = vmatmul.mubr.bf16.gmra.mrb[0].mxu0 %v108
    %v175 = vpop.f32.mrb[0].mxu0
    %v176 = vadd.f32 0.0, %v175
    %v177 = vpop.f32.mrb[0].mxu0
    %v178 = vpop.f32.mrb[0].mxu0
    %v179 = vadd.f32 0.0, %v178
    %v180 = vpop.f32.mrb[0].mxu0
    %181 = vmatprep.mubr.bf16.mxu0 0
    %182 = vmatmul.mubr.bf16.gmra.mrb[0].mxu0 %v111
    %v183 = vpop.f32.mrb[0].mxu0
    %v184 = vadd.f32 0.0, %v183
    %v185 = vpop.f32.mrb[0].mxu0
    %v186 = vpop.f32.mrb[0].mxu0
    %v187 = vadd.f32 0.0, %v186
    %v188 = vpop.f32.mrb[0].mxu0
    %189 = vmatprep.mubr.bf16.mxu0 0
    %190 = vmatmul.mubr.bf16.gmra.mrb[0].mxu0 %v114
    %v191 = vpop.f32.mrb[0].mxu0
    %v192 = vadd.f32 0.0, %v191
    %v193 = vpop.f32.mrb[0].mxu0
    %v194 = vpop.f32.mrb[0].mxu0
    %v195 = vadd.f32 0.0, %v194
    %v196 = vpop.f32.mrb[0].mxu0
    %197 = vmatprep.mubr.bf16.mxu0 0
    %198 = vmatmul.mubr.bf16.gmra.mrb[0].mxu0 %v117
    %v199 = vpop.f32.mrb[0].mxu0
    %v200 = vadd.f32 0.0, %v199
    %v201 = vpop.f32.mrb[0].mxu0
    %v202 = vpop.f32.mrb[0].mxu0
    %v203 = vadd.f32 0.0, %v202
    %v204 = vpop.f32.mrb[0].mxu0
    %205 = vmatprep.mubr.bf16.mxu0 0
    %206 = vmatmul.mubr.bf16.gmra.mrb[0].mxu0 %v120
    %v207 = vpop.f32.mrb[0].mxu0
    %v208 = vadd.f32 0.0, %v207
    %v209 = vpop.f32.mrb[0].mxu0
    %v210 = vpop.f32.mrb[0].mxu0
    %v211 = vadd.f32 0.0, %v210
    %v212 = vpop.f32.mrb[0].mxu0
    %213 = vmatprep.mubr.bf16.mxu0 0
    %214 = vmatmul.mubr.bf16.gmra.mrb[0].mxu0 %v123
    %v215 = vpop.f32.mrb[0].mxu0
    %v216 = vadd.f32 0.0, %v215
    %v217 = vpop.f32.mrb[0].mxu0
    %v218 = vpop.f32.mrb[0].mxu0
    %v219 = vadd.f32 0.0, %v218
    %v220 = vpop.f32.mrb[0].mxu0
    %221 = vdwg.mxu0
    %v222 = vld [vmem:[%s2] sm:$0xff]
    %v223 = vld [vmem:[%s2 + $0x8] sm:$0xff]
    %v224 = vld [vmem:[%s2 + $0x10] sm:$0xff]
    %v225 = vld [vmem:[%s2 + $0x18] sm:$0xff]
    %v226 = vld [vmem:[%s2 + $0x20] sm:$0xff]
    %v227 = vld [vmem:[%s2 + $0x28] sm:$0xff]
    %v228 = vld [vmem:[%s2 + $0x30] sm:$0xff]
    %v229 = vld [vmem:[%s2 + $0x38] sm:$0xff]
    %v230 = vld [vmem:[%s2 + $0x40] sm:$0xff]
    %v231 = vld [vmem:[%s2 + $0x48] sm:$0xff]
    %v232 = vld [vmem:[%s2 + $0x50] sm:$0xff]
    %v233 = vld [vmem:[%s2 + $0x58] sm:$0xff]
    %v234 = vld [vmem:[%s2 + $0x60] sm:$0xff]
    %v235 = vld [vmem:[%s2 + $0x68] sm:$0xff]
    %v236 = vld [vmem:[%s2 + $0x70] sm:$0xff]
    %v237 = vld [vmem:[%s2 + $0x78] sm:$0xff]
    %v238 = vld [vmem:[%s3] sm:$0x1]
    %v240 = vlaneseq
    %v241 = vshrl.u32 %v240, 7
    %v242 = vsub.s32 0, %v241
    %v243 = vrot.slane %v238, %v242
    %v245 = vmul.f32 %v160, %v243
    %v246 = vmul.f32 %v163, %v243
    %v247 = vmul.f32 %v168, %v243
    %v248 = vmul.f32 %v171, %v243
    %v249 = vmul.f32 %v176, %v243
    %v250 = vmul.f32 %v179, %v243
    %v251 = vmul.f32 %v184, %v243
    %v252 = vmul.f32 %v187, %v243
    %v253 = vmul.f32 %v192, %v243
    %v254 = vmul.f32 %v195, %v243
    %v255 = vmul.f32 %v200, %v243
    %v256 = vmul.f32 %v203, %v243
    %v257 = vmul.f32 %v208, %v243
    %v258 = vmul.f32 %v211, %v243
    %v259 = vmul.f32 %v216, %v243
    %v260 = vmul.f32 %v219, %v243
    %v261 = vadd.f32 %v222, %v245
    %v262 = vadd.f32 %v223, %v246
    %v263 = vadd.f32 %v224, %v247
    %v264 = vadd.f32 %v225, %v248
    %v265 = vadd.f32 %v226, %v249
    %v266 = vadd.f32 %v227, %v250
    %v267 = vadd.f32 %v228, %v251
    %v268 = vadd.f32 %v229, %v252
    %v269 = vadd.f32 %v230, %v253
    %v270 = vadd.f32 %v231, %v254
    %v271 = vadd.f32 %v232, %v255
    %v272 = vadd.f32 %v233, %v256
    %v273 = vadd.f32 %v234, %v257
    %v274 = vadd.f32 %v235, %v258
    %v275 = vadd.f32 %v236, %v259
    %v276 = vadd.f32 %v237, %v260
    %v277 = vld [vmem:[%s4] sm:$0x1]
    %v279 = vlaneseq
    %v280 = vshrl.u32 %v279, 7
    %v281 = vsub.s32 0, %v280
    %v282 = vrot.slane %v277, %v281
    %v284 = vadd.f32 %v261, %v282
    %v285 = vadd.f32 %v262, %v282
    %v286 = vadd.f32 %v263, %v282
    %v287 = vadd.f32 %v264, %v282
    %v288 = vadd.f32 %v265, %v282
    %v289 = vadd.f32 %v266, %v282
    %v290 = vadd.f32 %v267, %v282
    %v291 = vadd.f32 %v268, %v282
    %v292 = vadd.f32 %v269, %v282
    %v293 = vadd.f32 %v270, %v282
    %v294 = vadd.f32 %v271, %v282
    %v295 = vadd.f32 %v272, %v282
    %v296 = vadd.f32 %v273, %v282
    %v297 = vadd.f32 %v274, %v282
    %v298 = vadd.f32 %v275, %v282
    %v299 = vadd.f32 %v276, %v282
    %v300 = vld [vmem:[%s5] sm:$0x1]
    %v302 = vlaneseq
    %v303 = vshrl.u32 %v302, 7
    %v304 = vsub.s32 0, %v303
    %v305 = vrot.slane %v300, %v304
    %v307 = vmul.f32 %v284, %v305
    %v308 = vmul.f32 %v285, %v305
    %v309 = vmul.f32 %v286, %v305
    %v310 = vmul.f32 %v287, %v305
    %v311 = vmul.f32 %v288, %v305
    %v312 = vmul.f32 %v289, %v305
    %v313 = vmul.f32 %v290, %v305
    %v314 = vmul.f32 %v291, %v305
    %v315 = vmul.f32 %v292, %v305
    %v316 = vmul.f32 %v293, %v305
    %v317 = vmul.f32 %v294, %v305
    %v318 = vmul.f32 %v295, %v305
    %v319 = vmul.f32 %v296, %v305
    %v320 = vmul.f32 %v297, %v305
    %v321 = vmul.f32 %v298, %v305
    %v322 = vmul.f32 %v299, %v305
    %v323 = vld [vmem:[%s6] sm:$0x1]
    %v325 = vlaneseq
    %v326 = vshrl.u32 %v325, 7
    %v327 = vsub.s32 0, %v326
    %v328 = vrot.slane %v323, %v327
    %v330 = vadd.f32 %v307, %v328
    %v331 = vadd.f32 %v308, %v328
    %v332 = vadd.f32 %v309, %v328
    %v333 = vadd.f32 %v310, %v328
    %v334 = vadd.f32 %v311, %v328
    %v335 = vadd.f32 %v312, %v328
    %v336 = vadd.f32 %v313, %v328
    %v337 = vadd.f32 %v314, %v328
    %v338 = vadd.f32 %v315, %v328
    %v339 = vadd.f32 %v316, %v328
    %v340 = vadd.f32 %v317, %v328
    %v341 = vadd.f32 %v318, %v328
    %v342 = vadd.f32 %v319, %v328
    %v343 = vadd.f32 %v320, %v328
    %v344 = vadd.f32 %v321, %v328
    %v345 = vadd.f32 %v322, %v328
    %346 = vst.msk [vmem:[#allocation2] sm:$0xff] %vm100, %v330
    %347 = vst.msk [vmem:[#allocation2 + $0x8] sm:$0xff] %vm100, %v331
    %348 = vst.msk [vmem:[#allocation2 + $0x10] sm:$0xff] %vm100, %v332
    %349 = vst.msk [vmem:[#allocation2 + $0x18] sm:$0xff] %vm100, %v333
    %350 = vst.msk [vmem:[#allocation2 + $0x20] sm:$0xff] %vm100, %v334
    %351 = vst.msk [vmem:[#allocation2 + $0x28] sm:$0xff] %vm100, %v335
    %352 = vst.msk [vmem:[#allocation2 + $0x30] sm:$0xff] %vm100, %v336
    %353 = vst.msk [vmem:[#allocation2 + $0x38] sm:$0xff] %vm100, %v337
    %354 = vst.msk [vmem:[#allocation2 + $0x40] sm:$0xff] %vm100, %v338
    %355 = vst.msk [vmem:[#allocation2 + $0x48] sm:$0xff] %vm100, %v339
    %356 = vst.msk [vmem:[#allocation2 + $0x50] sm:$0xff] %vm100, %v340
    %357 = vst.msk [vmem:[#allocation2 + $0x58] sm:$0xff] %vm100, %v341
    %358 = vst.msk [vmem:[#allocation2 + $0x60] sm:$0xff] %vm100, %v342
    %359 = vst.msk [vmem:[#allocation2 + $0x68] sm:$0xff] %vm100, %v343
    %360 = vst.msk [vmem:[#allocation2 + $0x70] sm:$0xff] %vm100, %v344
    %361 = vst.msk [vmem:[#allocation2 + $0x78] sm:$0xff] %vm100, %v345
    // Predicated region
    $region30: #{ff_rgb_forward.17} parent=1 // pred_check
      _
    $region31: #{ff_rgb_forward.17} parent=1 // pred_check_branch
      %363 = sbr.rel (0) target = $region33
    $region32: #{ff_rgb_forward.17} parent=1 // pred_region
      %s365 = ssub.s32 2048, 2048
      %366 = vsyncadd [#allocation3], %s365
      %s367 = sshll.u32 [#allocation2], 4
      %s368 = int_to_ptr.vmem [resolvable:$true] %s367
      %373 = dma.vmem_to_hbm [thread:$0]  %s368, 2048, %s7, [#allocation3], 128, 128, 8
    $region33: #{ff_rgb_forward.17} parent=1 // pred_fallthru
      _
    // Predicated region
    $region34: #{ff_rgb_forward.17} parent=1 // pred_check
      _
    $region35: #{ff_rgb_forward.17} parent=1 // pred_check_branch
      %375 = sbr.rel (0) target = $region37
    $region36: #{ff_rgb_forward.17} parent=1 // pred_region
      %376 = dma.done [#allocation3], 2048
    $region37: #{ff_rgb_forward.17} parent=1 // pred_fallthru
      _
    %377 = vsyncpa [#allocation3], 1

</llo_original>
